<compile_context>
chip_gen: v5e
topology: v5e:2x2
jax: 0.10.0
libtpu: 0.0.40
codegen_flags: <defaults>
</compile_context>

<pallas_src>
import functools
import math

import jax
import jax.numpy as jnp
from jax import lax
from jax.experimental import pallas as pl
from jax.experimental.pallas import tpu as pltpu


# ---------------------------------------------------------------------------
# In-kernel math helpers (only mul/add/div/sqrt/select/reduce -> safe lowering)
# ---------------------------------------------------------------------------

_PIO2_HI = 1.5707962513e+00
_PIO2_LO = 7.5497894159e-08
_PS0 = 1.6666586697e-01
_PS1 = -4.2743422091e-02
_PS2 = -8.6563630030e-03
_QS1 = -7.0662963390e-01


def _acos_f32(x):
    """float32 arccos via fdlibm-style rational approximation (~1-2 ulp)."""
    x = jnp.clip(x, -1.0, 1.0)          # guard tiny fp overshoot of |q.k| <= 1
    ax = jnp.abs(x)

    def _r(z):
        p = z * (_PS0 + z * (_PS1 + z * _PS2))
        q = 1.0 + z * _QS1
        return p / q

    # |x| < 0.5
    z_s = x * x
    acos_small = _PIO2_HI - (x - (_PIO2_LO - x * _r(z_s)))

    # |x| >= 0.5
    z_b = (1.0 - ax) * 0.5
    s = jnp.sqrt(z_b)
    r_b = _r(z_b)
    acos_pos = 2.0 * (s + r_b * s)                                   # x >= 0.5
    acos_neg = jnp.float32(math.pi) - 2.0 * (s + (r_b * s - _PIO2_LO))  # x <= -0.5

    acos_big = jnp.where(x < 0.0, acos_neg, acos_pos)
    return jnp.where(ax < 0.5, acos_small, acos_big)


def _int_pow(x, n: int):
    """x ** n for a static positive int n via squaring."""
    assert n >= 1
    result = None
    base = x
    while n:
        if n & 1:
            result = base if result is None else result * base
        n >>= 1
        if n:
            base = base * base
    return result


def _l2_normalize(x, eps=1e-12):
    """torch.nn.functional.normalize(p=2, dim=-1) semantics."""
    norm = jnp.sqrt(jnp.sum(x * x, axis=-1, keepdims=True))
    return x / jnp.maximum(norm, eps)


# ---------------------------------------------------------------------------
# Fused YosoAttention kernel
# ---------------------------------------------------------------------------

def _yoso_attention_kernel(
    x_ref, mrow_ref, mcol_ref,
    wq_ref, bq_ref, wk_ref, bk_ref, wv_ref, bv_ref,
    wo_ref, bo_ref, gamma_ref, beta_ref,
    o_ref,
    *, num_heads: int, hash_code_len: int, layer_norm_eps: float):
    f32 = jnp.float32
    hp = lax.Precision.HIGHEST
    dn_nt = (((1,), (1,)), ((), ()))     # x[., k] @ W[n, k]^T  (torch Linear layout)

    x = x_ref[0].astype(f32)             # [S, H]  (also the residual input)
    m_row = mrow_ref[0].astype(f32)      # [1, S]  key-token mask (0/1)
    m_col = mcol_ref[0].astype(f32)      # [S, 1]  query-token mask (0/1)

    S, H = x.shape
    hd = H // num_heads

    q = lax.dot_general(x, wq_ref[...], dn_nt, precision=hp,
                        preferred_element_type=f32) + bq_ref[...]
    k = lax.dot_general(x, wk_ref[...], dn_nt, precision=hp,
                        preferred_element_type=f32) + bk_ref[...]
    v = lax.dot_general(x, wv_ref[...], dn_nt, precision=hp,
                        preferred_element_type=f32) + bv_ref[...]

    wo = wo_ref[...]
    out = jnp.zeros((S, H), f32)
    # TODO(synk): at real (seq, hidden) sizes move the head loop onto a grid axis.
    for h in range(num_heads):
        sl = slice(h * hd, (h + 1) * hd)
        qh = _l2_normalize(q[:, sl])
        kh = _l2_normalize(k[:, sl])
        vh = v[:, sl]
        scores = lax.dot_general(qh, kh, dn_nt, precision=hp,
                                 preferred_element_type=f32)          # [S, S]
        expectation = _int_pow(
            1.0 - _acos_f32(scores) * (1.0 / math.pi), hash_code_len)
        expectation = expectation * m_row                             # key mask
        ctx = jnp.dot(expectation, vh, precision=hp,
                      preferred_element_type=f32)                     # [S, hd]
        ctx = _l2_normalize(ctx * m_col)                              # query mask
        # Fold this head's context straight into the output projection.
        out = out + lax.dot_general(ctx, wo[:, sl], dn_nt, precision=hp,
                                    preferred_element_type=f32)
    out = out + bo_ref[...]

    # YosoSelfOutput: dense -> dropout (eval identity) -> LayerNorm(out + input)
    # TODO(synk): training-mode hidden_dropout_prob dropout not implemented.
    y = out + x
    mean = jnp.mean(y, axis=-1, keepdims=True)
    var = jnp.mean((y - mean) * (y - mean), axis=-1, keepdims=True)
    y = (y - mean) / jnp.sqrt(var + layer_norm_eps)
    y = y * gamma_ref[...] + beta_ref[...]
    o_ref[0] = y.astype(o_ref.dtype)


def yoso_attention(hidden_states, attention_mask, params, *,
                   num_heads: int, hash_code_len: int,
                   layer_norm_eps: float = 1e-12):
    """JAX wrapper.

    hidden_states:  [B, S, H]
    attention_mask: [B, S] transformers "extended" additive mask (0 keep / -10000 drop)
    params: (wq, bq, wk, bk, wv, bv, wo, bo, ln_gamma, ln_beta) with nn.Linear
            weights in PyTorch [out_features, in_features] layout.
    returns: [B, S, H]
    """
    wq, bq, wk, bk, wv, bv, wo, bo, gamma, beta = params
    B, S, H = hidden_states.shape
    assert H % num_heads == 0

    # 1.0 + mask/10000 -> {1, 0}, then the .int() cast from the torch module.
    mask = 1.0 + attention_mask.astype(jnp.float32) / 10000.0
    mask = mask.astype(jnp.int32).astype(jnp.float32)
    mask_row = mask.reshape(B, 1, S)      # key mask, lane-oriented
    mask_col = mask.reshape(B, S, 1)      # query mask, sublane-oriented

    row2 = lambda a: a.reshape(1, -1)

    def const(shape):
        return pl.BlockSpec(shape, lambda b: (0,) * len(shape))

    def per_b(shape):
        return pl.BlockSpec(shape, lambda b: (b,) + (0,) * (len(shape) - 1))

    flops = B * (8 * S * H * H + 4 * S * S * H)
    bytes_accessed = 4 * (2 * B * S * H + 2 * B * S + 4 * H * H + 6 * H)
    cost = pl.CostEstimate(flops=flops,
                           transcendentals=B * num_heads * S * S,
                           bytes_accessed=bytes_accessed)

    kernel = functools.partial(
        _yoso_attention_kernel,
        num_heads=num_heads,
        hash_code_len=hash_code_len,
        layer_norm_eps=layer_norm_eps)

    return pl.pallas_call(
        kernel,
        out_shape=jax.ShapeDtypeStruct((B, S, H), hidden_states.dtype),
        grid=(B,),
        in_specs=[
            per_b((1, S, H)),                 # hidden_states
            per_b((1, 1, S)),                 # key-token mask
            per_b((1, S, 1)),                 # query-token mask
            const((H, H)), const((1, H)),     # Wq, bq
            const((H, H)), const((1, H)),     # Wk, bk
            const((H, H)), const((1, H)),     # Wv, bv
            const((H, H)), const((1, H)),     # Wo, bo   (output dense)
            const((1, H)), const((1, H)),     # LayerNorm gamma, beta
        ],
        out_specs=per_b((1, S, H)),
        compiler_params=pltpu.CompilerParams(
            dimension_semantics=("parallel",)),
        cost_estimate=cost,
    )(hidden_states, mask_row, mask_col,
      wq, row2(bq), wk, row2(bk), wv, row2(bv), wo, row2(bo),
      row2(gamma), row2(beta))


# ---------------------------------------------------------------------------
# Pure-JAX reference (mirrors the PyTorch forward, eval mode)
# ---------------------------------------------------------------------------

def _yoso_attention_reference(hidden_states, attention_mask, params, *,
                              num_heads, hash_code_len, layer_norm_eps):
    wq, bq, wk, bk, wv, bv, wo, bo, gamma, beta = params
    B, S, H = hidden_states.shape
    hd = H // num_heads
    hp = lax.Precision.HIGHEST

    mask = 1.0 + attention_mask.astype(jnp.float32) / 10000.0
    mask = mask.astype(jnp.int32).astype(jnp.float32)

    def linear(x, w, b):
        return jnp.einsum("bsh,oh->bso", x, w, precision=hp) + b

    def heads(t):
        return t.reshape(B, S, num_heads, hd).transpose(0, 2, 1, 3)

    def l2n(t):
        n = jnp.sqrt(jnp.sum(t * t, axis=-1, keepdims=True))
        return t / jnp.maximum(n, 1e-12)

    q = l2n(heads(linear(hidden_states, wq, bq)))
    k = l2n(heads(linear(hidden_states, wk, bk)))
    v = heads(linear(hidden_states, wv, bv))

    scores = jnp.einsum("bnqd,bnkd->bnqk", q, k, precision=hp)
    scores = jnp.clip(scores, -1.0, 1.0)   # same domain guard as the kernel
    expectation = (1.0 - jnp.arccos(scores) / jnp.pi) ** hash_code_len
    expectation = expectation * mask[:, None, :, None] * mask[:, None, None, :]
    ctx = jnp.einsum("bnqk,bnkd->bnqd", expectation, v, precision=hp)
    ctx = l2n(ctx).transpose(0, 2, 1, 3).reshape(B, S, H)

    out = linear(ctx, wo, bo) + hidden_states
    mean = jnp.mean(out, axis=-1, keepdims=True)
    var = jnp.mean((out - mean) ** 2, axis=-1, keepdims=True)
    return (out - mean) / jnp.sqrt(var + layer_norm_eps) * gamma + beta


if __name__ == "__main__":
    B, S, H, NUM_HEADS = 2, 8, 32, 2
    HASH_CODE_LEN = 9           # YosoConfig default
    LN_EPS = 1e-12              # YosoConfig default layer_norm_eps

    key = jax.random.PRNGKey(0)
    ks = jax.random.split(key, 11)
    hidden = jax.random.normal(ks[0], (B, S, H), jnp.float32)

    bound = 1.0 / math.sqrt(H)

    def linear_params(kw, kb):
        w = jax.random.uniform(kw, (H, H), jnp.float32, -bound, bound)
        b = jax.random.uniform(kb, (H,), jnp.float32, -bound, bound)
        return w, b

    wq, bq = linear_params(ks[1], ks[2])
    wk, bk = linear_params(ks[3], ks[4])
    wv, bv = linear_params(ks[5], ks[6])
    wo, bo = linear_params(ks[7], ks[8])
    gamma = 1.0 + 0.1 * jax.random.normal(ks[9], (H,), jnp.float32)
    beta = 0.1 * jax.random.normal(ks[10], (H,), jnp.float32)
    params = (wq, bq, wk, bk, wv, bv, wo, bo, gamma, beta)

    # transformers extended mask: 0 = attend, -10000 = masked (mask 2 tokens).
    attn_mask = jnp.zeros((B, S), jnp.float32).at[1, S - 2:].set(-10000.0)

    out = yoso_attention(hidden, attn_mask, params,
                         num_heads=NUM_HEADS, hash_code_len=HASH_CODE_LEN,
                         layer_norm_eps=LN_EPS)
    out = jax.block_until_ready(out)

    ref = _yoso_attention_reference(hidden, attn_mask, params,
                                    num_heads=NUM_HEADS,
                                    hash_code_len=HASH_CODE_LEN,
                                    layer_norm_eps=LN_EPS)
    assert out.shape == (B, S, H)
    max_err = float(jnp.max(jnp.abs(out - ref)))
    assert jnp.allclose(out, ref, atol=1e-3, rtol=1e-3), f"max abs err {max_err}"
    print("KERNEL_OK")
</pallas_src>

<mosaic_0001>
module attributes {stable_mosaic.version = 11 : i64} {
  func.func @_yoso_attention_kernel(%arg0: i32, %arg1: memref<1x8x32xf32, #tpu.memory_space<vmem>>, %arg2: memref<1x1x8xf32, #tpu.memory_space<vmem>>, %arg3: memref<1x8x1xf32, #tpu.memory_space<vmem>>, %arg4: memref<32x32xf32, #tpu.memory_space<vmem>>, %arg5: memref<1x32xf32, #tpu.memory_space<vmem>>, %arg6: memref<32x32xf32, #tpu.memory_space<vmem>>, %arg7: memref<1x32xf32, #tpu.memory_space<vmem>>, %arg8: memref<32x32xf32, #tpu.memory_space<vmem>>, %arg9: memref<1x32xf32, #tpu.memory_space<vmem>>, %arg10: memref<32x32xf32, #tpu.memory_space<vmem>>, %arg11: memref<1x32xf32, #tpu.memory_space<vmem>>, %arg12: memref<1x32xf32, #tpu.memory_space<vmem>>, %arg13: memref<1x32xf32, #tpu.memory_space<vmem>>, %arg14: memref<1x8x32xf32, #tpu.memory_space<vmem>>) attributes {dimension_semantics = [#tpu.dimension_semantics<parallel>], iteration_bounds = array<i64: 2>, scalar_prefetch = 0 : i64, scratch_operands = 0 : i64, tpu.core_type = #tpu.core_type<tc>, window_params = [{transform_indices = @transform_0, window_bounds = array<i64: 1, 8, 32>}, {transform_indices = @transform_1, window_bounds = array<i64: 1, 1, 8>}, {transform_indices = @transform_2, window_bounds = array<i64: 1, 8, 1>}, {pipeline_mode = #tpu.pipeline_mode<synchronous>, transform_indices = @transform_3, window_bounds = array<i64: 32, 32>}, {pipeline_mode = #tpu.pipeline_mode<synchronous>, transform_indices = @transform_4, window_bounds = array<i64: 1, 32>}, {pipeline_mode = #tpu.pipeline_mode<synchronous>, transform_indices = @transform_5, window_bounds = array<i64: 32, 32>}, {pipeline_mode = #tpu.pipeline_mode<synchronous>, transform_indices = @transform_6, window_bounds = array<i64: 1, 32>}, {pipeline_mode = #tpu.pipeline_mode<synchronous>, transform_indices = @transform_7, window_bounds = array<i64: 32, 32>}, {pipeline_mode = #tpu.pipeline_mode<synchronous>, transform_indices = @transform_8, window_bounds = array<i64: 1, 32>}, {pipeline_mode = #tpu.pipeline_mode<synchronous>, transform_indices = @transform_9, window_bounds = array<i64: 32, 32>}, {pipeline_mode = #tpu.pipeline_mode<synchronous>, transform_indices = @transform_10, window_bounds = array<i64: 1, 32>}, {pipeline_mode = #tpu.pipeline_mode<synchronous>, transform_indices = @transform_11, window_bounds = array<i64: 1, 32>}, {pipeline_mode = #tpu.pipeline_mode<synchronous>, transform_indices = @transform_12, window_bounds = array<i64: 1, 32>}, {transform_indices = @transform_13, window_bounds = array<i64: 1, 8, 32>}]} {
    %c0 = arith.constant 0 : index
    %c0_0 = arith.constant 0 : index
    %c0_1 = arith.constant 0 : index
    %0 = vector.load %arg1[%c0, %c0_0, %c0_1] : memref<1x8x32xf32, #tpu.memory_space<vmem>>, vector<1x8x32xf32>
    %1 = vector.shape_cast %0 : vector<1x8x32xf32> to vector<8x32xf32>
    %c0_2 = arith.constant 0 : index
    %c0_3 = arith.constant 0 : index
    %c0_4 = arith.constant 0 : index
    %2 = vector.load %arg2[%c0_2, %c0_3, %c0_4] : memref<1x1x8xf32, #tpu.memory_space<vmem>>, vector<1x1x8xf32>
    %3 = vector.shape_cast %2 : vector<1x1x8xf32> to vector<1x8xf32>
    %c0_5 = arith.constant 0 : index
    %c0_6 = arith.constant 0 : index
    %c0_7 = arith.constant 0 : index
    %4 = vector.load %arg3[%c0_5, %c0_6, %c0_7] : memref<1x8x1xf32, #tpu.memory_space<vmem>>, vector<1x8x1xf32>
    %5 = vector.shape_cast %4 : vector<1x8x1xf32> to vector<8x1xf32>
    %c0_8 = arith.constant 0 : index
    %c0_9 = arith.constant 0 : index
    %6 = vector.load %arg4[%c0_8, %c0_9] : memref<32x32xf32, #tpu.memory_space<vmem>>, vector<32x32xf32>
    %cst = arith.constant dense<0.000000e+00> : vector<8x32xf32>
    %7 = tpu.matmul %1, %6, %cst {dimension_numbers = #tpu.dot_dimension_numbers<[1], [1], [0], [0], [0, 0, 1, 0], [], []>, precision = #tpu.contract_precision<fp32>} : vector<8x32xf32>, vector<32x32xf32>, vector<8x32xf32> -> vector<8x32xf32>
    %c0_10 = arith.constant 0 : index
    %c0_11 = arith.constant 0 : index
    %8 = vector.load %arg5[%c0_10, %c0_11] : memref<1x32xf32, #tpu.memory_space<vmem>>, vector<1x32xf32>
    %9 = vector.broadcast %8 : vector<1x32xf32> to vector<8x32xf32>
    %10 = arith.addf %7, %9 : vector<8x32xf32>
    %c0_12 = arith.constant 0 : index
    %c0_13 = arith.constant 0 : index
    %11 = vector.load %arg6[%c0_12, %c0_13] : memref<32x32xf32, #tpu.memory_space<vmem>>, vector<32x32xf32>
    %cst_14 = arith.constant dense<0.000000e+00> : vector<8x32xf32>
    %12 = tpu.matmul %1, %11, %cst_14 {dimension_numbers = #tpu.dot_dimension_numbers<[1], [1], [0], [0], [0, 0, 1, 0], [], []>, precision = #tpu.contract_precision<fp32>} : vector<8x32xf32>, vector<32x32xf32>, vector<8x32xf32> -> vector<8x32xf32>
    %c0_15 = arith.constant 0 : index
    %c0_16 = arith.constant 0 : index
    %13 = vector.load %arg7[%c0_15, %c0_16] : memref<1x32xf32, #tpu.memory_space<vmem>>, vector<1x32xf32>
    %14 = vector.broadcast %13 : vector<1x32xf32> to vector<8x32xf32>
    %15 = arith.addf %12, %14 : vector<8x32xf32>
    %c0_17 = arith.constant 0 : index
    %c0_18 = arith.constant 0 : index
    %16 = vector.load %arg8[%c0_17, %c0_18] : memref<32x32xf32, #tpu.memory_space<vmem>>, vector<32x32xf32>
    %cst_19 = arith.constant dense<0.000000e+00> : vector<8x32xf32>
    %17 = tpu.matmul %1, %16, %cst_19 {dimension_numbers = #tpu.dot_dimension_numbers<[1], [1], [0], [0], [0, 0, 1, 0], [], []>, precision = #tpu.contract_precision<fp32>} : vector<8x32xf32>, vector<32x32xf32>, vector<8x32xf32> -> vector<8x32xf32>
    %c0_20 = arith.constant 0 : index
    %c0_21 = arith.constant 0 : index
    %18 = vector.load %arg9[%c0_20, %c0_21] : memref<1x32xf32, #tpu.memory_space<vmem>>, vector<1x32xf32>
    %19 = vector.broadcast %18 : vector<1x32xf32> to vector<8x32xf32>
    %20 = arith.addf %17, %19 : vector<8x32xf32>
    %c0_22 = arith.constant 0 : index
    %c0_23 = arith.constant 0 : index
    %21 = vector.load %arg10[%c0_22, %c0_23] : memref<32x32xf32, #tpu.memory_space<vmem>>, vector<32x32xf32>
    %cst_24 = arith.constant 0.000000e+00 : f32
    %22 = vector.broadcast %cst_24 : f32 to vector<8x32xf32>
    %23 = vector.extract_strided_slice %10 {offsets = [0, 0], sizes = [8, 16], strides = [1, 1]} : vector<8x32xf32> to vector<8x16xf32>
    %24 = arith.mulf %23, %23 : vector<8x16xf32>
    %cst_25 = arith.constant dense<0.000000e+00> : vector<8xf32>
    %25 = vector.multi_reduction <add>, %24, %cst_25 [1] : vector<8x16xf32> to vector<8xf32>
    %26 = vector.shape_cast %25 : vector<8xf32> to vector<8x1xf32>
    %27 = math.sqrt %26 : vector<8x1xf32>
    %cst_26 = arith.constant 9.99999996E-13 : f32
    %28 = vector.broadcast %cst_26 : f32 to vector<8x1xf32>
    %29 = arith.maximumf %27, %28 : vector<8x1xf32>
    %30 = vector.broadcast %29 : vector<8x1xf32> to vector<8x16xf32>
    %31 = arith.divf %23, %30 : vector<8x16xf32>
    %32 = vector.extract_strided_slice %15 {offsets = [0, 0], sizes = [8, 16], strides = [1, 1]} : vector<8x32xf32> to vector<8x16xf32>
    %33 = arith.mulf %32, %32 : vector<8x16xf32>
    %cst_27 = arith.constant dense<0.000000e+00> : vector<8xf32>
    %34 = vector.multi_reduction <add>, %33, %cst_27 [1] : vector<8x16xf32> to vector<8xf32>
    %35 = vector.shape_cast %34 : vector<8xf32> to vector<8x1xf32>
    %36 = math.sqrt %35 : vector<8x1xf32>
    %cst_28 = arith.constant 9.99999996E-13 : f32
    %37 = vector.broadcast %cst_28 : f32 to vector<8x1xf32>
    %38 = arith.maximumf %36, %37 : vector<8x1xf32>
    %39 = vector.broadcast %38 : vector<8x1xf32> to vector<8x16xf32>
    %40 = arith.divf %32, %39 : vector<8x16xf32>
    %41 = vector.extract_strided_slice %20 {offsets = [0, 0], sizes = [8, 16], strides = [1, 1]} : vector<8x32xf32> to vector<8x16xf32>
    %cst_29 = arith.constant dense<0.000000e+00> : vector<8x8xf32>
    %42 = tpu.matmul %31, %40, %cst_29 {dimension_numbers = #tpu.dot_dimension_numbers<[1], [1], [0], [0], [0, 0, 1, 0], [], []>, precision = #tpu.contract_precision<fp32>} : vector<8x16xf32>, vector<8x16xf32>, vector<8x8xf32> -> vector<8x8xf32>
    %cst_30 = arith.constant -1.000000e+00 : f32
    %cst_31 = arith.constant 1.000000e+00 : f32
    %43 = vector.broadcast %cst_30 : f32 to vector<8x8xf32>
    %44 = arith.maximumf %43, %42 : vector<8x8xf32>
    %45 = vector.broadcast %cst_31 : f32 to vector<8x8xf32>
    %46 = arith.minimumf %45, %44 : vector<8x8xf32>
    %47 = math.absf %46 : vector<8x8xf32>
    %48 = arith.mulf %46, %46 : vector<8x8xf32>
    %cst_32 = arith.constant -0.008656363 : f32
    %49 = vector.broadcast %cst_32 : f32 to vector<8x8xf32>
    %50 = arith.mulf %48, %49 : vector<8x8xf32>
    %cst_33 = arith.constant -0.0427434221 : f32
    %51 = vector.broadcast %cst_33 : f32 to vector<8x8xf32>
    %52 = arith.addf %51, %50 : vector<8x8xf32>
    %53 = arith.mulf %48, %52 : vector<8x8xf32>
    %cst_34 = arith.constant 0.166665867 : f32
    %54 = vector.broadcast %cst_34 : f32 to vector<8x8xf32>
    %55 = arith.addf %54, %53 : vector<8x8xf32>
    %56 = arith.mulf %48, %55 : vector<8x8xf32>
    %cst_35 = arith.constant -0.706629634 : f32
    %57 = vector.broadcast %cst_35 : f32 to vector<8x8xf32>
    %58 = arith.mulf %48, %57 : vector<8x8xf32>
    %cst_36 = arith.constant 1.000000e+00 : f32
    %59 = vector.broadcast %cst_36 : f32 to vector<8x8xf32>
    %60 = arith.addf %59, %58 : vector<8x8xf32>
    %61 = arith.divf %56, %60 : vector<8x8xf32>
    %62 = arith.mulf %46, %61 : vector<8x8xf32>
    %cst_37 = arith.constant 7.54978942E-8 : f32
    %63 = vector.broadcast %cst_37 : f32 to vector<8x8xf32>
    %64 = arith.subf %63, %62 : vector<8x8xf32>
    %65 = arith.subf %46, %64 : vector<8x8xf32>
    %cst_38 = arith.constant 1.57079625 : f32
    %66 = vector.broadcast %cst_38 : f32 to vector<8x8xf32>
    %67 = arith.subf %66, %65 : vector<8x8xf32>
    %cst_39 = arith.constant 1.000000e+00 : f32
    %68 = vector.broadcast %cst_39 : f32 to vector<8x8xf32>
    %69 = arith.subf %68, %47 : vector<8x8xf32>
    %cst_40 = arith.constant 5.000000e-01 : f32
    %70 = vector.broadcast %cst_40 : f32 to vector<8x8xf32>
    %71 = arith.mulf %69, %70 : vector<8x8xf32>
    %72 = math.sqrt %71 : vector<8x8xf32>
    %cst_41 = arith.constant -0.008656363 : f32
    %73 = vector.broadcast %cst_41 : f32 to vector<8x8xf32>
    %74 = arith.mulf %71, %73 : vector<8x8xf32>
    %cst_42 = arith.constant -0.0427434221 : f32
    %75 = vector.broadcast %cst_42 : f32 to vector<8x8xf32>
    %76 = arith.addf %75, %74 : vector<8x8xf32>
    %77 = arith.mulf %71, %76 : vector<8x8xf32>
    %cst_43 = arith.constant 0.166665867 : f32
    %78 = vector.broadcast %cst_43 : f32 to vector<8x8xf32>
    %79 = arith.addf %78, %77 : vector<8x8xf32>
    %80 = arith.mulf %71, %79 : vector<8x8xf32>
    %cst_44 = arith.constant -0.706629634 : f32
    %81 = vector.broadcast %cst_44 : f32 to vector<8x8xf32>
    %82 = arith.mulf %71, %81 : vector<8x8xf32>
    %cst_45 = arith.constant 1.000000e+00 : f32
    %83 = vector.broadcast %cst_45 : f32 to vector<8x8xf32>
    %84 = arith.addf %83, %82 : vector<8x8xf32>
    %85 = arith.divf %80, %84 : vector<8x8xf32>
    %86 = arith.mulf %85, %72 : vector<8x8xf32>
    %87 = arith.addf %72, %86 : vector<8x8xf32>
    %cst_46 = arith.constant 2.000000e+00 : f32
    %88 = vector.broadcast %cst_46 : f32 to vector<8x8xf32>
    %89 = arith.mulf %88, %87 : vector<8x8xf32>
    %90 = arith.mulf %85, %72 : vector<8x8xf32>
    %cst_47 = arith.constant 7.54978942E-8 : f32
    %91 = vector.broadcast %cst_47 : f32 to vector<8x8xf32>
    %92 = arith.subf %90, %91 : vector<8x8xf32>
    %93 = arith.addf %72, %92 : vector<8x8xf32>
    %cst_48 = arith.constant 2.000000e+00 : f32
    %94 = vector.broadcast %cst_48 : f32 to vector<8x8xf32>
    %95 = arith.mulf %94, %93 : vector<8x8xf32>
    %cst_49 = arith.constant 3.14159274 : f32
    %96 = vector.broadcast %cst_49 : f32 to vector<8x8xf32>
    %97 = arith.subf %96, %95 : vector<8x8xf32>
    %cst_50 = arith.constant 0.000000e+00 : f32
    %98 = vector.broadcast %cst_50 : f32 to vector<8x8xf32>
    %99 = arith.cmpf olt, %46, %98 : vector<8x8xf32>
    %100 = arith.select %99, %97, %89 : vector<8x8xi1>, vector<8x8xf32>
    %cst_51 = arith.constant 5.000000e-01 : f32
    %101 = vector.broadcast %cst_51 : f32 to vector<8x8xf32>
    %102 = arith.cmpf olt, %47, %101 : vector<8x8xf32>
    %103 = arith.select %102, %67, %100 : vector<8x8xi1>, vector<8x8xf32>
    %cst_52 = arith.constant 0.318309873 : f32
    %104 = vector.broadcast %cst_52 : f32 to vector<8x8xf32>
    %105 = arith.mulf %103, %104 : vector<8x8xf32>
    %cst_53 = arith.constant 1.000000e+00 : f32
    %106 = vector.broadcast %cst_53 : f32 to vector<8x8xf32>
    %107 = arith.subf %106, %105 : vector<8x8xf32>
    %108 = arith.mulf %107, %107 : vector<8x8xf32>
    %109 = arith.mulf %108, %108 : vector<8x8xf32>
    %110 = arith.mulf %109, %109 : vector<8x8xf32>
    %111 = arith.mulf %107, %110 : vector<8x8xf32>
    %112 = vector.broadcast %3 : vector<1x8xf32> to vector<8x8xf32>
    %113 = arith.mulf %111, %112 : vector<8x8xf32>
    %cst_54 = arith.constant dense<0.000000e+00> : vector<8x16xf32>
    %114 = tpu.matmul %113, %41, %cst_54 {dimension_numbers = #tpu.dot_dimension_numbers<[1], [0], [0], [1], [0, 0, 1, 1], [], []>, precision = #tpu.contract_precision<fp32>} : vector<8x8xf32>, vector<8x16xf32>, vector<8x16xf32> -> vector<8x16xf32>
    %115 = vector.broadcast %5 : vector<8x1xf32> to vector<8x16xf32>
    %116 = arith.mulf %114, %115 : vector<8x16xf32>
    %117 = arith.mulf %116, %116 : vector<8x16xf32>
    %cst_55 = arith.constant dense<0.000000e+00> : vector<8xf32>
    %118 = vector.multi_reduction <add>, %117, %cst_55 [1] : vector<8x16xf32> to vector<8xf32>
    %119 = vector.shape_cast %118 : vector<8xf32> to vector<8x1xf32>
    %120 = math.sqrt %119 : vector<8x1xf32>
    %cst_56 = arith.constant 9.99999996E-13 : f32
    %121 = vector.broadcast %cst_56 : f32 to vector<8x1xf32>
    %122 = arith.maximumf %120, %121 : vector<8x1xf32>
    %123 = vector.broadcast %122 : vector<8x1xf32> to vector<8x16xf32>
    %124 = arith.divf %116, %123 : vector<8x16xf32>
    %125 = vector.extract_strided_slice %21 {offsets = [0, 0], sizes = [32, 16], strides = [1, 1]} : vector<32x32xf32> to vector<32x16xf32>
    %cst_57 = arith.constant dense<0.000000e+00> : vector<8x32xf32>
    %126 = tpu.matmul %124, %125, %cst_57 {dimension_numbers = #tpu.dot_dimension_numbers<[1], [1], [0], [0], [0, 0, 1, 0], [], []>, precision = #tpu.contract_precision<fp32>} : vector<8x16xf32>, vector<32x16xf32>, vector<8x32xf32> -> vector<8x32xf32>
    %127 = arith.addf %22, %126 : vector<8x32xf32>
    %128 = vector.extract_strided_slice %10 {offsets = [0, 16], sizes = [8, 16], strides = [1, 1]} : vector<8x32xf32> to vector<8x16xf32>
    %129 = arith.mulf %128, %128 : vector<8x16xf32>
    %cst_58 = arith.constant dense<0.000000e+00> : vector<8xf32>
    %130 = vector.multi_reduction <add>, %129, %cst_58 [1] : vector<8x16xf32> to vector<8xf32>
    %131 = vector.shape_cast %130 : vector<8xf32> to vector<8x1xf32>
    %132 = math.sqrt %131 : vector<8x1xf32>
    %cst_59 = arith.constant 9.99999996E-13 : f32
    %133 = vector.broadcast %cst_59 : f32 to vector<8x1xf32>
    %134 = arith.maximumf %132, %133 : vector<8x1xf32>
    %135 = vector.broadcast %134 : vector<8x1xf32> to vector<8x16xf32>
    %136 = arith.divf %128, %135 : vector<8x16xf32>
    %137 = vector.extract_strided_slice %15 {offsets = [0, 16], sizes = [8, 16], strides = [1, 1]} : vector<8x32xf32> to vector<8x16xf32>
    %138 = arith.mulf %137, %137 : vector<8x16xf32>
    %cst_60 = arith.constant dense<0.000000e+00> : vector<8xf32>
    %139 = vector.multi_reduction <add>, %138, %cst_60 [1] : vector<8x16xf32> to vector<8xf32>
    %140 = vector.shape_cast %139 : vector<8xf32> to vector<8x1xf32>
    %141 = math.sqrt %140 : vector<8x1xf32>
    %cst_61 = arith.constant 9.99999996E-13 : f32
    %142 = vector.broadcast %cst_61 : f32 to vector<8x1xf32>
    %143 = arith.maximumf %141, %142 : vector<8x1xf32>
    %144 = vector.broadcast %143 : vector<8x1xf32> to vector<8x16xf32>
    %145 = arith.divf %137, %144 : vector<8x16xf32>
    %146 = vector.extract_strided_slice %20 {offsets = [0, 16], sizes = [8, 16], strides = [1, 1]} : vector<8x32xf32> to vector<8x16xf32>
    %cst_62 = arith.constant dense<0.000000e+00> : vector<8x8xf32>
    %147 = tpu.matmul %136, %145, %cst_62 {dimension_numbers = #tpu.dot_dimension_numbers<[1], [1], [0], [0], [0, 0, 1, 0], [], []>, precision = #tpu.contract_precision<fp32>} : vector<8x16xf32>, vector<8x16xf32>, vector<8x8xf32> -> vector<8x8xf32>
    %cst_63 = arith.constant -1.000000e+00 : f32
    %cst_64 = arith.constant 1.000000e+00 : f32
    %148 = vector.broadcast %cst_63 : f32 to vector<8x8xf32>
    %149 = arith.maximumf %148, %147 : vector<8x8xf32>
    %150 = vector.broadcast %cst_64 : f32 to vector<8x8xf32>
    %151 = arith.minimumf %150, %149 : vector<8x8xf32>
    %152 = math.absf %151 : vector<8x8xf32>
    %153 = arith.mulf %151, %151 : vector<8x8xf32>
    %cst_65 = arith.constant -0.008656363 : f32
    %154 = vector.broadcast %cst_65 : f32 to vector<8x8xf32>
    %155 = arith.mulf %153, %154 : vector<8x8xf32>
    %cst_66 = arith.constant -0.0427434221 : f32
    %156 = vector.broadcast %cst_66 : f32 to vector<8x8xf32>
    %157 = arith.addf %156, %155 : vector<8x8xf32>
    %158 = arith.mulf %153, %157 : vector<8x8xf32>
    %cst_67 = arith.constant 0.166665867 : f32
    %159 = vector.broadcast %cst_67 : f32 to vector<8x8xf32>
    %160 = arith.addf %159, %158 : vector<8x8xf32>
    %161 = arith.mulf %153, %160 : vector<8x8xf32>
    %cst_68 = arith.constant -0.706629634 : f32
    %162 = vector.broadcast %cst_68 : f32 to vector<8x8xf32>
    %163 = arith.mulf %153, %162 : vector<8x8xf32>
    %cst_69 = arith.constant 1.000000e+00 : f32
    %164 = vector.broadcast %cst_69 : f32 to vector<8x8xf32>
    %165 = arith.addf %164, %163 : vector<8x8xf32>
    %166 = arith.divf %161, %165 : vector<8x8xf32>
    %167 = arith.mulf %151, %166 : vector<8x8xf32>
    %cst_70 = arith.constant 7.54978942E-8 : f32
    %168 = vector.broadcast %cst_70 : f32 to vector<8x8xf32>
    %169 = arith.subf %168, %167 : vector<8x8xf32>
    %170 = arith.subf %151, %169 : vector<8x8xf32>
    %cst_71 = arith.constant 1.57079625 : f32
    %171 = vector.broadcast %cst_71 : f32 to vector<8x8xf32>
    %172 = arith.subf %171, %170 : vector<8x8xf32>
    %cst_72 = arith.constant 1.000000e+00 : f32
    %173 = vector.broadcast %cst_72 : f32 to vector<8x8xf32>
    %174 = arith.subf %173, %152 : vector<8x8xf32>
    %cst_73 = arith.constant 5.000000e-01 : f32
    %175 = vector.broadcast %cst_73 : f32 to vector<8x8xf32>
    %176 = arith.mulf %174, %175 : vector<8x8xf32>
    %177 = math.sqrt %176 : vector<8x8xf32>
    %cst_74 = arith.constant -0.008656363 : f32
    %178 = vector.broadcast %cst_74 : f32 to vector<8x8xf32>
    %179 = arith.mulf %176, %178 : vector<8x8xf32>
    %cst_75 = arith.constant -0.0427434221 : f32
    %180 = vector.broadcast %cst_75 : f32 to vector<8x8xf32>
    %181 = arith.addf %180, %179 : vector<8x8xf32>
    %182 = arith.mulf %176, %181 : vector<8x8xf32>
    %cst_76 = arith.constant 0.166665867 : f32
    %183 = vector.broadcast %cst_76 : f32 to vector<8x8xf32>
    %184 = arith.addf %183, %182 : vector<8x8xf32>
    %185 = arith.mulf %176, %184 : vector<8x8xf32>
    %cst_77 = arith.constant -0.706629634 : f32
    %186 = vector.broadcast %cst_77 : f32 to vector<8x8xf32>
    %187 = arith.mulf %176, %186 : vector<8x8xf32>
    %cst_78 = arith.constant 1.000000e+00 : f32
    %188 = vector.broadcast %cst_78 : f32 to vector<8x8xf32>
    %189 = arith.addf %188, %187 : vector<8x8xf32>
    %190 = arith.divf %185, %189 : vector<8x8xf32>
    %191 = arith.mulf %190, %177 : vector<8x8xf32>
    %192 = arith.addf %177, %191 : vector<8x8xf32>
    %cst_79 = arith.constant 2.000000e+00 : f32
    %193 = vector.broadcast %cst_79 : f32 to vector<8x8xf32>
    %194 = arith.mulf %193, %192 : vector<8x8xf32>
    %195 = arith.mulf %190, %177 : vector<8x8xf32>
    %cst_80 = arith.constant 7.54978942E-8 : f32
    %196 = vector.broadcast %cst_80 : f32 to vector<8x8xf32>
    %197 = arith.subf %195, %196 : vector<8x8xf32>
    %198 = arith.addf %177, %197 : vector<8x8xf32>
    %cst_81 = arith.constant 2.000000e+00 : f32
    %199 = vector.broadcast %cst_81 : f32 to vector<8x8xf32>
    %200 = arith.mulf %199, %198 : vector<8x8xf32>
    %cst_82 = arith.constant 3.14159274 : f32
    %201 = vector.broadcast %cst_82 : f32 to vector<8x8xf32>
    %202 = arith.subf %201, %200 : vector<8x8xf32>
    %cst_83 = arith.constant 0.000000e+00 : f32
    %203 = vector.broadcast %cst_83 : f32 to vector<8x8xf32>
    %204 = arith.cmpf olt, %151, %203 : vector<8x8xf32>
    %205 = arith.select %204, %202, %194 : vector<8x8xi1>, vector<8x8xf32>
    %cst_84 = arith.constant 5.000000e-01 : f32
    %206 = vector.broadcast %cst_84 : f32 to vector<8x8xf32>
    %207 = arith.cmpf olt, %152, %206 : vector<8x8xf32>
    %208 = arith.select %207, %172, %205 : vector<8x8xi1>, vector<8x8xf32>
    %cst_85 = arith.constant 0.318309873 : f32
    %209 = vector.broadcast %cst_85 : f32 to vector<8x8xf32>
    %210 = arith.mulf %208, %209 : vector<8x8xf32>
    %cst_86 = arith.constant 1.000000e+00 : f32
    %211 = vector.broadcast %cst_86 : f32 to vector<8x8xf32>
    %212 = arith.subf %211, %210 : vector<8x8xf32>
    %213 = arith.mulf %212, %212 : vector<8x8xf32>
    %214 = arith.mulf %213, %213 : vector<8x8xf32>
    %215 = arith.mulf %214, %214 : vector<8x8xf32>
    %216 = arith.mulf %212, %215 : vector<8x8xf32>
    %217 = vector.broadcast %3 : vector<1x8xf32> to vector<8x8xf32>
    %218 = arith.mulf %216, %217 : vector<8x8xf32>
    %cst_87 = arith.constant dense<0.000000e+00> : vector<8x16xf32>
    %219 = tpu.matmul %218, %146, %cst_87 {dimension_numbers = #tpu.dot_dimension_numbers<[1], [0], [0], [1], [0, 0, 1, 1], [], []>, precision = #tpu.contract_precision<fp32>} : vector<8x8xf32>, vector<8x16xf32>, vector<8x16xf32> -> vector<8x16xf32>
    %220 = vector.broadcast %5 : vector<8x1xf32> to vector<8x16xf32>
    %221 = arith.mulf %219, %220 : vector<8x16xf32>
    %222 = arith.mulf %221, %221 : vector<8x16xf32>
    %cst_88 = arith.constant dense<0.000000e+00> : vector<8xf32>
    %223 = vector.multi_reduction <add>, %222, %cst_88 [1] : vector<8x16xf32> to vector<8xf32>
    %224 = vector.shape_cast %223 : vector<8xf32> to vector<8x1xf32>
    %225 = math.sqrt %224 : vector<8x1xf32>
    %cst_89 = arith.constant 9.99999996E-13 : f32
    %226 = vector.broadcast %cst_89 : f32 to vector<8x1xf32>
    %227 = arith.maximumf %225, %226 : vector<8x1xf32>
    %228 = vector.broadcast %227 : vector<8x1xf32> to vector<8x16xf32>
    %229 = arith.divf %221, %228 : vector<8x16xf32>
    %230 = vector.extract_strided_slice %21 {offsets = [0, 16], sizes = [32, 16], strides = [1, 1]} : vector<32x32xf32> to vector<32x16xf32>
    %cst_90 = arith.constant dense<0.000000e+00> : vector<8x32xf32>
    %231 = tpu.matmul %229, %230, %cst_90 {dimension_numbers = #tpu.dot_dimension_numbers<[1], [1], [0], [0], [0, 0, 1, 0], [], []>, precision = #tpu.contract_precision<fp32>} : vector<8x16xf32>, vector<32x16xf32>, vector<8x32xf32> -> vector<8x32xf32>
    %232 = arith.addf %127, %231 : vector<8x32xf32>
    %c0_91 = arith.constant 0 : index
    %c0_92 = arith.constant 0 : index
    %233 = vector.load %arg11[%c0_91, %c0_92] : memref<1x32xf32, #tpu.memory_space<vmem>>, vector<1x32xf32>
    %234 = vector.broadcast %233 : vector<1x32xf32> to vector<8x32xf32>
    %235 = arith.addf %232, %234 : vector<8x32xf32>
    %236 = arith.addf %235, %1 : vector<8x32xf32>
    %cst_93 = arith.constant dense<0.000000e+00> : vector<8xf32>
    %237 = vector.multi_reduction <add>, %236, %cst_93 [1] : vector<8x32xf32> to vector<8xf32>
    %238 = vector.shape_cast %237 : vector<8xf32> to vector<8x1xf32>
    %cst_94 = arith.constant 3.200000e+01 : f32
    %239 = vector.broadcast %cst_94 : f32 to vector<8x1xf32>
    %240 = arith.divf %238, %239 : vector<8x1xf32>
    %241 = vector.broadcast %240 : vector<8x1xf32> to vector<8x32xf32>
    %242 = arith.subf %236, %241 : vector<8x32xf32>
    %243 = vector.broadcast %240 : vector<8x1xf32> to vector<8x32xf32>
    %244 = arith.subf %236, %243 : vector<8x32xf32>
    %245 = arith.mulf %242, %244 : vector<8x32xf32>
    %cst_95 = arith.constant dense<0.000000e+00> : vector<8xf32>
    %246 = vector.multi_reduction <add>, %245, %cst_95 [1] : vector<8x32xf32> to vector<8xf32>
    %247 = vector.shape_cast %246 : vector<8xf32> to vector<8x1xf32>
    %cst_96 = arith.constant 3.200000e+01 : f32
    %248 = vector.broadcast %cst_96 : f32 to vector<8x1xf32>
    %249 = arith.divf %247, %248 : vector<8x1xf32>
    %250 = vector.broadcast %240 : vector<8x1xf32> to vector<8x32xf32>
    %251 = arith.subf %236, %250 : vector<8x32xf32>
    %cst_97 = arith.constant 9.99999996E-13 : f32
    %252 = vector.broadcast %cst_97 : f32 to vector<8x1xf32>
    %253 = arith.addf %249, %252 : vector<8x1xf32>
    %254 = math.sqrt %253 : vector<8x1xf32>
    %255 = vector.broadcast %254 : vector<8x1xf32> to vector<8x32xf32>
    %256 = arith.divf %251, %255 : vector<8x32xf32>
    %c0_98 = arith.constant 0 : index
    %c0_99 = arith.constant 0 : index
    %257 = vector.load %arg12[%c0_98, %c0_99] : memref<1x32xf32, #tpu.memory_space<vmem>>, vector<1x32xf32>
    %258 = vector.broadcast %257 : vector<1x32xf32> to vector<8x32xf32>
    %259 = arith.mulf %256, %258 : vector<8x32xf32>
    %c0_100 = arith.constant 0 : index
    %c0_101 = arith.constant 0 : index
    %260 = vector.load %arg13[%c0_100, %c0_101] : memref<1x32xf32, #tpu.memory_space<vmem>>, vector<1x32xf32>
    %261 = vector.broadcast %260 : vector<1x32xf32> to vector<8x32xf32>
    %262 = arith.addf %259, %261 : vector<8x32xf32>
    %c0_102 = arith.constant 0 : index
    %c0_103 = arith.constant 0 : index
    %c0_104 = arith.constant 0 : index
    %263 = vector.load %arg14[%c0_102, %c0_103, %c0_104] : memref<1x8x32xf32, #tpu.memory_space<vmem>>, vector<1x8x32xf32>
    %264 = vector.shape_cast %263 : vector<1x8x32xf32> to vector<8x32xf32>
    %265 = vector.shape_cast %262 : vector<8x32xf32> to vector<1x8x32xf32>
    tpu.vector_store %arg14[%c0_102, %c0_103, %c0_104], %265 {strides = array<i32>} : memref<1x8x32xf32, #tpu.memory_space<vmem>>, vector<1x8x32xf32>,
    return
  }
  func.func @transform_0(%arg0: i32) -> (i32, i32, i32) {
    %c0_i32 = arith.constant 0 : i32
    %c0_i32_0 = arith.constant 0 : i32
    %c0_i32_1 = arith.constant 0 : i32
    return %arg0, %c0_i32, %c0_i32_0 : i32, i32, i32
  }
  func.func @transform_1(%arg0: i32) -> (i32, i32, i32) {
    %c0_i32 = arith.constant 0 : i32
    %c0_i32_0 = arith.constant 0 : i32
    %c0_i32_1 = arith.constant 0 : i32
    return %arg0, %c0_i32, %c0_i32_0 : i32, i32, i32
  }
  func.func @transform_2(%arg0: i32) -> (i32, i32, i32) {
    %c0_i32 = arith.constant 0 : i32
    %c0_i32_0 = arith.constant 0 : i32
    %c0_i32_1 = arith.constant 0 : i32
    return %arg0, %c0_i32, %c0_i32_0 : i32, i32, i32
  }
  func.func @transform_3(%arg0: i32) -> (i32, i32) {
    %c0_i32 = arith.constant 0 : i32
    %c0_i32_0 = arith.constant 0 : i32
    %c0_i32_1 = arith.constant 0 : i32
    return %c0_i32, %c0_i32_0 : i32, i32
  }
  func.func @transform_4(%arg0: i32) -> (i32, i32) {
    %c0_i32 = arith.constant 0 : i32
    %c0_i32_0 = arith.constant 0 : i32
    %c0_i32_1 = arith.constant 0 : i32
    return %c0_i32, %c0_i32_0 : i32, i32
  }
  func.func @transform_5(%arg0: i32) -> (i32, i32) {
    %c0_i32 = arith.constant 0 : i32
    %c0_i32_0 = arith.constant 0 : i32
    %c0_i32_1 = arith.constant 0 : i32
    return %c0_i32, %c0_i32_0 : i32, i32
  }
  func.func @transform_6(%arg0: i32) -> (i32, i32) {
    %c0_i32 = arith.constant 0 : i32
    %c0_i32_0 = arith.constant 0 : i32
    %c0_i32_1 = arith.constant 0 : i32
    return %c0_i32, %c0_i32_0 : i32, i32
  }
  func.func @transform_7(%arg0: i32) -> (i32, i32) {
    %c0_i32 = arith.constant 0 : i32
    %c0_i32_0 = arith.constant 0 : i32
    %c0_i32_1 = arith.constant 0 : i32
    return %c0_i32, %c0_i32_0 : i32, i32
  }
  func.func @transform_8(%arg0: i32) -> (i32, i32) {
    %c0_i32 = arith.constant 0 : i32
    %c0_i32_0 = arith.constant 0 : i32
    %c0_i32_1 = arith.constant 0 : i32
    return %c0_i32, %c0_i32_0 : i32, i32
  }
  func.func @transform_9(%arg0: i32) -> (i32, i32) {
    %c0_i32 = arith.constant 0 : i32
    %c0_i32_0 = arith.constant 0 : i32
    %c0_i32_1 = arith.constant 0 : i32
    return %c0_i32, %c0_i32_0 : i32, i32
  }
  func.func @transform_10(%arg0: i32) -> (i32, i32) {
    %c0_i32 = arith.constant 0 : i32
    %c0_i32_0 = arith.constant 0 : i32
    %c0_i32_1 = arith.constant 0 : i32
    return %c0_i32, %c0_i32_0 : i32, i32
  }
  func.func @transform_11(%arg0: i32) -> (i32, i32) {
    %c0_i32 = arith.constant 0 : i32
    %c0_i32_0 = arith.constant 0 : i32
    %c0_i32_1 = arith.constant 0 : i32
    return %c0_i32, %c0_i32_0 : i32, i32
  }
  func.func @transform_12(%arg0: i32) -> (i32, i32) {
    %c0_i32 = arith.constant 0 : i32
    %c0_i32_0 = arith.constant 0 : i32
    %c0_i32_1 = arith.constant 0 : i32
    return %c0_i32, %c0_i32_0 : i32, i32
  }
  func.func @transform_13(%arg0: i32) -> (i32, i32, i32) {
    %c0_i32 = arith.constant 0 : i32
    %c0_i32_0 = arith.constant 0 : i32
    %c0_i32_1 = arith.constant 0 : i32
    return %arg0, %c0_i32, %c0_i32_0 : i32, i32, i32
  }
}

</mosaic_0001>

<llo_original>
// kernel: tpu_custom_call.1
$region0: #{tpu_custom_call.1}
  #allocation0 [shape = 'u32[]', space=smem, size = 0x4, offset = 0x4, fixed_abs, tag = 'smem constant byte address 0x4 - core index']
  #allocation1 [shape = 'u32[72,128]{1,0:T(1,128)}', space=vmem, size = 0x9000, scoped, tag = 'internal scratch']
  %s0 = inlined_call_operand.vmem [shape: f32[2,8,32], index: 0, kind: input, shape index: {}]
  %s1 = inlined_call_operand.vmem [shape: f32[2,1,8], index: 1, kind: input, shape index: {}]
  %s2 = inlined_call_operand.vmem [shape: f32[2,8,1], index: 2, kind: input, shape index: {}]
  %s3 = inlined_call_operand.hbm [shape: f32[32,32], index: 3, kind: input, shape index: {}]
  %s4 = inlined_call_operand.vmem [shape: f32[1,32], index: 4, kind: input, shape index: {}]
  %s5 = inlined_call_operand.hbm [shape: f32[32,32], index: 5, kind: input, shape index: {}]
  %s6 = inlined_call_operand.vmem [shape: f32[1,32], index: 6, kind: input, shape index: {}]
  %s7 = inlined_call_operand.hbm [shape: f32[32,32], index: 7, kind: input, shape index: {}]
  %s8 = inlined_call_operand.vmem [shape: f32[1,32], index: 8, kind: input, shape index: {}]
  %s9 = inlined_call_operand.hbm [shape: f32[32,32], index: 9, kind: input, shape index: {}]
  %s10 = inlined_call_operand.vmem [shape: f32[1,32], index: 10, kind: input, shape index: {}]
  %s11 = inlined_call_operand.vmem [shape: f32[1,32], index: 11, kind: input, shape index: {}]
  %s12 = inlined_call_operand.vmem [shape: f32[1,32], index: 12, kind: input, shape index: {}]
  %s13 = inlined_call_operand.hbm [shape: f32[2,8,32], index: 13, kind: output, shape index: {}]
  %s14 = sld [smem:[#allocation0]]
  $region101: #{tpu_custom_call.1} parent=0
    _
  %s16 = ssub.s32 1, %s14
  %s17 = scalar_select 0, %s16, %s14
  $region1: #{tpu_custom_call.1} parent=0
    #allocation2 [shape = 'u8[16384]{0}', space=vmem, size = 0x4000, scoped, tag = 'input window, operand 3, single buffered']
    #allocation3 [shape = 's32[2]{0}', space=sflag, size = 0x8, scoped, tag = 'scoped memory for tpu_custom_call.1']
    #allocation4 [shape = 's32[2]{0}', space=sflag, size = 0x8, scoped, tag = 'scoped memory for tpu_custom_call.1']
    #allocation5 [shape = 'u8[16384]{0}', space=vmem, size = 0x4000, scoped, tag = 'input window, operand 5, single buffered']
    #allocation6 [shape = 's32[1]{0}', space=sflag, size = 0x4, scoped, tag = 'scoped memory for tpu_custom_call.1']
    #allocation7 [shape = 'u8[16384]{0}', space=vmem, size = 0x4000, scoped, tag = 'input window, operand 7, single buffered']
    #allocation8 [shape = 'u8[16384]{0}', space=vmem, size = 0x4000, scoped, tag = 'input window, operand 9, single buffered']
    #allocation9 [shape = 's32[1]{0}', space=sflag, size = 0x4, scoped, tag = 'scoped memory for tpu_custom_call.1']
    #allocation10 [shape = 'u8[8192]{0}', space=vmem, size = 0x2000, scoped, tag = 'output window, operand 0']
    %18 = vsyncpa [#allocation3], 0
    %19 = vsyncpa [#allocation6], 0
    %20 = vsyncpa [#allocation9], 0
    %21 = vsyncpa [#allocation4], 0
    %s22 = scalar_lea.sflag [#allocation4], 1
    %23 = vsyncpa %s22, 0
    loop: start=0, step=1, limit=4
    $region2: #{tpu_custom_call.1} parent=1 // loop_pre_header
      _
    $region3: #{tpu_custom_call.1} parent=1 // loop_header
      %s25 = sphi 0, %s29
      %p26 = scmp.ge.s32.totalorder %s25, 4
      %s35 = sphi 0, %s37
      %s38 = sphi 0, %s35
      %s39 = sphi 0, %s38
      %s55 = sphi 0, %s39
      %s61 = sphi 0, %s63
      %s64 = sphi 0, %s61
      %s65 = sphi 0, %s64
      %s81 = sphi 0, %s65
      %s87 = sphi 0, %s89
      %s90 = sphi 0, %s87
      %s91 = sphi 0, %s90
      %s107 = sphi 0, %s91
      %s111 = sphi 0, %s111
      %s113 = sphi 0, %s111
      %s114 = sphi 0, %s113
      %s128 = sphi 0, %s114
      %s132 = sphi 0, %s132
      %s134 = sphi 0, %s132
      %s135 = sphi 0, %s134
      %s149 = sphi 0, %s135
      %s153 = sphi 0, %s153
      %s155 = sphi 0, %s153
      %s156 = sphi 0, %s155
      %s170 = sphi 0, %s156
      %s174 = sphi 0, %s174
      %s176 = sphi 0, %s174
      %s177 = sphi 0, %s176
      %s191 = sphi 0, %s177
      %s195 = sphi 0, %s195
      %s197 = sphi 0, %s195
      %s198 = sphi 0, %s197
      %s212 = sphi 0, %s198
      %s216 = sphi 0, %s216
      %s218 = sphi 0, %s216
      %s219 = sphi 0, %s218
      %s233 = sphi 0, %s219
      %s237 = sphi 0, %s237
      %s239 = sphi 0, %s237
      %s240 = sphi 0, %s239
      %s254 = sphi 0, %s240
      %s258 = sphi 0, %s258
      %s260 = sphi 0, %s258
      %s261 = sphi 0, %s260
      %s275 = sphi 0, %s261
      %s279 = sphi 0, %s279
      %s281 = sphi 0, %s279
      %s282 = sphi 0, %s281
      %s296 = sphi 0, %s282
      %s300 = sphi 0, %s300
      %s302 = sphi 0, %s300
      %s303 = sphi 0, %s302
      %s317 = sphi 0, %s303
      %s323 = sphi 0, %s325
      %s326 = sphi 0, %s323
      %s327 = sphi 0, %s326
      %s343 = sphi 0, %s327
    $region4: #{tpu_custom_call.1} parent=1 // loop_header_branch
      %28 = sbr.rel (%p26) target = $region8
    $region5: #{tpu_custom_call.1} parent=1 // loop_body
      %s30 = ssub.s32 %s25, 1
      %s31 = ssub.s32 %s25, 2
      %s32 = sadd.s32 %s25, 1
      %s33 = ssub.s32 %s25, %s32
      %p34 = scmp.eq.s32.totalorder %s33, 0
      %s36 = sadd.s32 %s35, 1
      %s37 = scalar_select %p34, %s35, %s36
      %p40 = pneg %p34
      %p41 = scmp.eq.s32.totalorder %s25, 1
      %p42 = por %p40, %p41
      %p43 = scmp.ne.s32.totalorder %s35, %s38
      %p44 = scmp.eq.s32.totalorder %s25, 0
      %p45 = por %p43, %p44
      %p46 = scmp.ne.s32.totalorder %s35, %s38
      %p47 = scmp.eq.s32.totalorder %s30, 1
      %p48 = por %p46, %p47
      %p49 = scmp.ne.s32.totalorder %s38, %s39
      %p50 = scmp.eq.s32.totalorder %s30, 0
      %p51 = por %p49, %p50
      %p52 = scmp.ne.s32.totalorder %s38, %s39
      %p53 = scmp.eq.s32.totalorder %s31, 1
      %p54 = por %p52, %p53
      %p56 = scmp.ne.s32.totalorder %s39, %s55
      %p57 = scmp.eq.s32.totalorder %s31, 0
      %p58 = por %p56, %p57
      %s59 = ssub.s32 %s25, %s32
      %p60 = scmp.eq.s32.totalorder %s59, 0
      %s62 = sadd.s32 %s61, 1
      %s63 = scalar_select %p60, %s61, %s62
      %p66 = pneg %p60
      %p67 = scmp.eq.s32.totalorder %s25, 1
      %p68 = por %p66, %p67
      %p69 = scmp.ne.s32.totalorder %s61, %s64
      %p70 = scmp.eq.s32.totalorder %s25, 0
      %p71 = por %p69, %p70
      %p72 = scmp.ne.s32.totalorder %s61, %s64
      %p73 = scmp.eq.s32.totalorder %s30, 1
      %p74 = por %p72, %p73
      %p75 = scmp.ne.s32.totalorder %s64, %s65
      %p76 = scmp.eq.s32.totalorder %s30, 0
      %p77 = por %p75, %p76
      %p78 = scmp.ne.s32.totalorder %s64, %s65
      %p79 = scmp.eq.s32.totalorder %s31, 1
      %p80 = por %p78, %p79
      %p82 = scmp.ne.s32.totalorder %s65, %s81
      %p83 = scmp.eq.s32.totalorder %s31, 0
      %p84 = por %p82, %p83
      %s85 = ssub.s32 %s25, %s32
      %p86 = scmp.eq.s32.totalorder %s85, 0
      %s88 = sadd.s32 %s87, 1
      %s89 = scalar_select %p86, %s87, %s88
      %p92 = pneg %p86
      %p93 = scmp.eq.s32.totalorder %s25, 1
      %p94 = por %p92, %p93
      %p95 = scmp.ne.s32.totalorder %s87, %s90
      %p96 = scmp.eq.s32.totalorder %s25, 0
      %p97 = por %p95, %p96
      %p98 = scmp.ne.s32.totalorder %s87, %s90
      %p99 = scmp.eq.s32.totalorder %s30, 1
      %p100 = por %p98, %p99
      %p101 = scmp.ne.s32.totalorder %s90, %s91
      %p102 = scmp.eq.s32.totalorder %s30, 0
      %p103 = por %p101, %p102
      %p104 = scmp.ne.s32.totalorder %s90, %s91
      %p105 = scmp.eq.s32.totalorder %s31, 1
      %p106 = por %p104, %p105
      %p108 = scmp.ne.s32.totalorder %s91, %s107
      %p109 = scmp.eq.s32.totalorder %s31, 0
      %p110 = por %p108, %p109
      %s112 = sadd.s32 %s111, 1
      %p115 = scmp.eq.s32.totalorder %s25, 1
      %p116 = scmp.ne.s32.totalorder %s111, %s113
      %p117 = scmp.eq.s32.totalorder %s25, 0
      %p118 = por %p116, %p117
      %p119 = scmp.ne.s32.totalorder %s111, %s113
      %p120 = scmp.eq.s32.totalorder %s30, 1
      %p121 = por %p119, %p120
      %p122 = scmp.ne.s32.totalorder %s113, %s114
      %p123 = scmp.eq.s32.totalorder %s30, 0
      %p124 = por %p122, %p123
      %p125 = scmp.ne.s32.totalorder %s113, %s114
      %p126 = scmp.eq.s32.totalorder %s31, 1
      %p127 = por %p125, %p126
      %p129 = scmp.ne.s32.totalorder %s114, %s128
      %p130 = scmp.eq.s32.totalorder %s31, 0
      %p131 = por %p129, %p130
      %s133 = sadd.s32 %s132, 1
      %p136 = scmp.eq.s32.totalorder %s25, 1
      %p137 = scmp.ne.s32.totalorder %s132, %s134
      %p138 = scmp.eq.s32.totalorder %s25, 0
      %p139 = por %p137, %p138
      %p140 = scmp.ne.s32.totalorder %s132, %s134
      %p141 = scmp.eq.s32.totalorder %s30, 1
      %p142 = por %p140, %p141
      %p143 = scmp.ne.s32.totalorder %s134, %s135
      %p144 = scmp.eq.s32.totalorder %s30, 0
      %p145 = por %p143, %p144
      %p146 = scmp.ne.s32.totalorder %s134, %s135
      %p147 = scmp.eq.s32.totalorder %s31, 1
      %p148 = por %p146, %p147
      %p150 = scmp.ne.s32.totalorder %s135, %s149
      %p151 = scmp.eq.s32.totalorder %s31, 0
      %p152 = por %p150, %p151
      %s154 = sadd.s32 %s153, 1
      %p157 = scmp.eq.s32.totalorder %s25, 1
      %p158 = scmp.ne.s32.totalorder %s153, %s155
      %p159 = scmp.eq.s32.totalorder %s25, 0
      %p160 = por %p158, %p159
      %p161 = scmp.ne.s32.totalorder %s153, %s155
      %p162 = scmp.eq.s32.totalorder %s30, 1
      %p163 = por %p161, %p162
      %p164 = scmp.ne.s32.totalorder %s155, %s156
      %p165 = scmp.eq.s32.totalorder %s30, 0
      %p166 = por %p164, %p165
      %p167 = scmp.ne.s32.totalorder %s155, %s156
      %p168 = scmp.eq.s32.totalorder %s31, 1
      %p169 = por %p167, %p168
      %p171 = scmp.ne.s32.totalorder %s156, %s170
      %p172 = scmp.eq.s32.totalorder %s31, 0
      %p173 = por %p171, %p172
      %s175 = sadd.s32 %s174, 1
      %p178 = scmp.eq.s32.totalorder %s25, 1
      %p179 = scmp.ne.s32.totalorder %s174, %s176
      %p180 = scmp.eq.s32.totalorder %s25, 0
      %p181 = por %p179, %p180
      %p182 = scmp.ne.s32.totalorder %s174, %s176
      %p183 = scmp.eq.s32.totalorder %s30, 1
      %p184 = por %p182, %p183
      %p185 = scmp.ne.s32.totalorder %s176, %s177
      %p186 = scmp.eq.s32.totalorder %s30, 0
      %p187 = por %p185, %p186
      %p188 = scmp.ne.s32.totalorder %s176, %s177
      %p189 = scmp.eq.s32.totalorder %s31, 1
      %p190 = por %p188, %p189
      %p192 = scmp.ne.s32.totalorder %s177, %s191
      %p193 = scmp.eq.s32.totalorder %s31, 0
      %p194 = por %p192, %p193
      %s196 = sadd.s32 %s195, 1
      %p199 = scmp.eq.s32.totalorder %s25, 1
      %p200 = scmp.ne.s32.totalorder %s195, %s197
      %p201 = scmp.eq.s32.totalorder %s25, 0
      %p202 = por %p200, %p201
      %p203 = scmp.ne.s32.totalorder %s195, %s197
      %p204 = scmp.eq.s32.totalorder %s30, 1
      %p205 = por %p203, %p204
      %p206 = scmp.ne.s32.totalorder %s197, %s198
      %p207 = scmp.eq.s32.totalorder %s30, 0
      %p208 = por %p206, %p207
      %p209 = scmp.ne.s32.totalorder %s197, %s198
      %p210 = scmp.eq.s32.totalorder %s31, 1
      %p211 = por %p209, %p210
      %p213 = scmp.ne.s32.totalorder %s198, %s212
      %p214 = scmp.eq.s32.totalorder %s31, 0
      %p215 = por %p213, %p214
      %s217 = sadd.s32 %s216, 1
      %p220 = scmp.eq.s32.totalorder %s25, 1
      %p221 = scmp.ne.s32.totalorder %s216, %s218
      %p222 = scmp.eq.s32.totalorder %s25, 0
      %p223 = por %p221, %p222
      %p224 = scmp.ne.s32.totalorder %s216, %s218
      %p225 = scmp.eq.s32.totalorder %s30, 1
      %p226 = por %p224, %p225
      %p227 = scmp.ne.s32.totalorder %s218, %s219
      %p228 = scmp.eq.s32.totalorder %s30, 0
      %p229 = por %p227, %p228
      %p230 = scmp.ne.s32.totalorder %s218, %s219
      %p231 = scmp.eq.s32.totalorder %s31, 1
      %p232 = por %p230, %p231
      %p234 = scmp.ne.s32.totalorder %s219, %s233
      %p235 = scmp.eq.s32.totalorder %s31, 0
      %p236 = por %p234, %p235
      %s238 = sadd.s32 %s237, 1
      %p241 = scmp.eq.s32.totalorder %s25, 1
      %p242 = scmp.ne.s32.totalorder %s237, %s239
      %p243 = scmp.eq.s32.totalorder %s25, 0
      %p244 = por %p242, %p243
      %p245 = scmp.ne.s32.totalorder %s237, %s239
      %p246 = scmp.eq.s32.totalorder %s30, 1
      %p247 = por %p245, %p246
      %p248 = scmp.ne.s32.totalorder %s239, %s240
      %p249 = scmp.eq.s32.totalorder %s30, 0
      %p250 = por %p248, %p249
      %p251 = scmp.ne.s32.totalorder %s239, %s240
      %p252 = scmp.eq.s32.totalorder %s31, 1
      %p253 = por %p251, %p252
      %p255 = scmp.ne.s32.totalorder %s240, %s254
      %p256 = scmp.eq.s32.totalorder %s31, 0
      %p257 = por %p255, %p256
      %s259 = sadd.s32 %s258, 1
      %p262 = scmp.eq.s32.totalorder %s25, 1
      %p263 = scmp.ne.s32.totalorder %s258, %s260
      %p264 = scmp.eq.s32.totalorder %s25, 0
      %p265 = por %p263, %p264
      %p266 = scmp.ne.s32.totalorder %s258, %s260
      %p267 = scmp.eq.s32.totalorder %s30, 1
      %p268 = por %p266, %p267
      %p269 = scmp.ne.s32.totalorder %s260, %s261
      %p270 = scmp.eq.s32.totalorder %s30, 0
      %p271 = por %p269, %p270
      %p272 = scmp.ne.s32.totalorder %s260, %s261
      %p273 = scmp.eq.s32.totalorder %s31, 1
      %p274 = por %p272, %p273
      %p276 = scmp.ne.s32.totalorder %s261, %s275
      %p277 = scmp.eq.s32.totalorder %s31, 0
      %p278 = por %p276, %p277
      %s280 = sadd.s32 %s279, 1
      %p283 = scmp.eq.s32.totalorder %s25, 1
      %p284 = scmp.ne.s32.totalorder %s279, %s281
      %p285 = scmp.eq.s32.totalorder %s25, 0
      %p286 = por %p284, %p285
      %p287 = scmp.ne.s32.totalorder %s279, %s281
      %p288 = scmp.eq.s32.totalorder %s30, 1
      %p289 = por %p287, %p288
      %p290 = scmp.ne.s32.totalorder %s281, %s282
      %p291 = scmp.eq.s32.totalorder %s30, 0
      %p292 = por %p290, %p291
      %p293 = scmp.ne.s32.totalorder %s281, %s282
      %p294 = scmp.eq.s32.totalorder %s31, 1
      %p295 = por %p293, %p294
      %p297 = scmp.ne.s32.totalorder %s282, %s296
      %p298 = scmp.eq.s32.totalorder %s31, 0
      %p299 = por %p297, %p298
      %s301 = sadd.s32 %s300, 1
      %p304 = scmp.eq.s32.totalorder %s25, 1
      %p305 = scmp.ne.s32.totalorder %s300, %s302
      %p306 = scmp.eq.s32.totalorder %s25, 0
      %p307 = por %p305, %p306
      %p308 = scmp.ne.s32.totalorder %s300, %s302
      %p309 = scmp.eq.s32.totalorder %s30, 1
      %p310 = por %p308, %p309
      %p311 = scmp.ne.s32.totalorder %s302, %s303
      %p312 = scmp.eq.s32.totalorder %s30, 0
      %p313 = por %p311, %p312
      %p314 = scmp.ne.s32.totalorder %s302, %s303
      %p315 = scmp.eq.s32.totalorder %s31, 1
      %p316 = por %p314, %p315
      %p318 = scmp.ne.s32.totalorder %s303, %s317
      %p319 = scmp.eq.s32.totalorder %s31, 0
      %p320 = por %p318, %p319
      %s321 = ssub.s32 %s25, %s32
      %p322 = scmp.eq.s32.totalorder %s321, 0
      %s324 = sadd.s32 %s323, 1
      %s325 = scalar_select %p322, %s323, %s324
      %p328 = pneg %p322
      %p329 = scmp.eq.s32.totalorder %s25, 1
      %p330 = por %p328, %p329
      %p331 = scmp.ne.s32.totalorder %s323, %s326
      %p332 = scmp.eq.s32.totalorder %s25, 0
      %p333 = por %p331, %p332
      %p334 = scmp.ne.s32.totalorder %s323, %s326
      %p335 = scmp.eq.s32.totalorder %s30, 1
      %p336 = por %p334, %p335
      %p337 = scmp.ne.s32.totalorder %s326, %s327
      %p338 = scmp.eq.s32.totalorder %s30, 0
      %p339 = por %p337, %p338
      %p340 = scmp.ne.s32.totalorder %s326, %s327
      %p341 = scmp.eq.s32.totalorder %s31, 1
      %p342 = por %p340, %p341
      %p344 = scmp.ne.s32.totalorder %s327, %s343
      %p345 = scmp.eq.s32.totalorder %s31, 0
      %p346 = por %p344, %p345
      %p347 = scmp.le.s32.totalorder 1, %s25
      %p348 = scmp.lt.s32.totalorder %s25, 3
      %p349 = pnand %p347, %p348
      %p350 = pneg %p349
      // Predicated region
      $region9: #{tpu_custom_call.1} parent=5 // pred_check
        _
      $region10: #{tpu_custom_call.1} parent=5 // pred_check_branch
        %352 = sbr.rel (%p349) target = $region12
      $region11: #{tpu_custom_call.1} parent=5 // pred_region
        %s353 = ssub.s32 %s25, 1
        // Predicated region
        $region13: #{tpu_custom_call.1} parent=11 // pred_check
          %p354 = pneg %p124
        $region14: #{tpu_custom_call.1} parent=11 // pred_check_branch
          %356 = sbr.rel (%p354) target = $region16
        $region15: #{tpu_custom_call.1} parent=11 // pred_region
          %358 = vsyncadd [#allocation3], 0
          %s359 = sshll.u32 %s3, 4
          %s360 = int_to_ptr.hbm [resolvable:$true] %s359
          %s361 = sshll.u32 [#allocation2], 4
          %s362 = int_to_ptr.vmem [resolvable:$true] %s361
          %367 = dma.hbm_to_vmem [thread:$0]  %s360, 512, %s362, [#allocation3], 128, 128, 8
        $region16: #{tpu_custom_call.1} parent=11 // pred_fallthru
          _
        // Predicated region
        $region17: #{tpu_custom_call.1} parent=11 // pred_check
          %p368 = pneg %p145
        $region18: #{tpu_custom_call.1} parent=11 // pred_check_branch
          %370 = sbr.rel (%p368) target = $region20
        $region19: #{tpu_custom_call.1} parent=11 // pred_region
          _
        $region20: #{tpu_custom_call.1} parent=11 // pred_fallthru
          _
        // Predicated region
        $region21: #{tpu_custom_call.1} parent=11 // pred_check
          %p371 = pneg %p166
        $region22: #{tpu_custom_call.1} parent=11 // pred_check_branch
          %373 = sbr.rel (%p371) target = $region24
        $region23: #{tpu_custom_call.1} parent=11 // pred_region
          %375 = vsyncadd [#allocation6], 0
          %s376 = sshll.u32 %s5, 4
          %s377 = int_to_ptr.hbm [resolvable:$true] %s376
          %s378 = sshll.u32 [#allocation5], 4
          %s379 = int_to_ptr.vmem [resolvable:$true] %s378
          %384 = dma.hbm_to_vmem [thread:$0]  %s377, 512, %s379, [#allocation6], 128, 128, 8
        $region24: #{tpu_custom_call.1} parent=11 // pred_fallthru
          _
        // Predicated region
        $region25: #{tpu_custom_call.1} parent=11 // pred_check
          %p385 = pneg %p187
        $region26: #{tpu_custom_call.1} parent=11 // pred_check_branch
          %387 = sbr.rel (%p385) target = $region28
        $region27: #{tpu_custom_call.1} parent=11 // pred_region
          _
        $region28: #{tpu_custom_call.1} parent=11 // pred_fallthru
          _
        // Predicated region
        $region29: #{tpu_custom_call.1} parent=11 // pred_check
          %p388 = pneg %p208
        $region30: #{tpu_custom_call.1} parent=11 // pred_check_branch
          %390 = sbr.rel (%p388) target = $region32
        $region31: #{tpu_custom_call.1} parent=11 // pred_region
          %392 = vsyncadd [#allocation6], 0
          %s393 = sshll.u32 %s7, 4
          %s394 = int_to_ptr.hbm [resolvable:$true] %s393
          %s395 = sshll.u32 [#allocation7], 4
          %s396 = int_to_ptr.vmem [resolvable:$true] %s395
          %401 = dma.hbm_to_vmem [thread:$0]  %s394, 512, %s396, [#allocation6], 128, 128, 8
        $region32: #{tpu_custom_call.1} parent=11 // pred_fallthru
          _
        // Predicated region
        $region33: #{tpu_custom_call.1} parent=11 // pred_check
          %p402 = pneg %p229
        $region34: #{tpu_custom_call.1} parent=11 // pred_check_branch
          %404 = sbr.rel (%p402) target = $region36
        $region35: #{tpu_custom_call.1} parent=11 // pred_region
          _
        $region36: #{tpu_custom_call.1} parent=11 // pred_fallthru
          _
        // Predicated region
        $region37: #{tpu_custom_call.1} parent=11 // pred_check
          %p405 = pneg %p250
        $region38: #{tpu_custom_call.1} parent=11 // pred_check_branch
          %407 = sbr.rel (%p405) target = $region40
        $region39: #{tpu_custom_call.1} parent=11 // pred_region
          %409 = vsyncadd [#allocation9], 0
          %s410 = sshll.u32 %s9, 4
          %s411 = int_to_ptr.hbm [resolvable:$true] %s410
          %s412 = sshll.u32 [#allocation8], 4
          %s413 = int_to_ptr.vmem [resolvable:$true] %s412
          %418 = dma.hbm_to_vmem [thread:$0]  %s411, 512, %s413, [#allocation9], 128, 128, 8
        $region40: #{tpu_custom_call.1} parent=11 // pred_fallthru
          _
        // Predicated region
        $region41: #{tpu_custom_call.1} parent=11 // pred_check
          %p419 = pneg %p271
        $region42: #{tpu_custom_call.1} parent=11 // pred_check_branch
          %421 = sbr.rel (%p419) target = $region44
        $region43: #{tpu_custom_call.1} parent=11 // pred_region
          _
        $region44: #{tpu_custom_call.1} parent=11 // pred_fallthru
          _
        // Predicated region
        $region45: #{tpu_custom_call.1} parent=11 // pred_check
          %p422 = pneg %p292
        $region46: #{tpu_custom_call.1} parent=11 // pred_check_branch
          %424 = sbr.rel (%p422) target = $region48
        $region47: #{tpu_custom_call.1} parent=11 // pred_region
          _
        $region48: #{tpu_custom_call.1} parent=11 // pred_fallthru
          _
        // Predicated region
        $region49: #{tpu_custom_call.1} parent=11 // pred_check
          %p425 = pneg %p313
        $region50: #{tpu_custom_call.1} parent=11 // pred_check_branch
          %427 = sbr.rel (%p425) target = $region52
        $region51: #{tpu_custom_call.1} parent=11 // pred_region
          _
        $region52: #{tpu_custom_call.1} parent=11 // pred_fallthru
          _
      $region12: #{tpu_custom_call.1} parent=5 // pred_fallthru
        _
      %p428 = scmp.lt.s32.totalorder %s25, 2
      // Predicated region
      $region53: #{tpu_custom_call.1} parent=5 // pred_check
        %p429 = pneg %p428
      $region54: #{tpu_custom_call.1} parent=5 // pred_check_branch
        %431 = sbr.rel (%p429) target = $region56
      $region55: #{tpu_custom_call.1} parent=5 // pred_region
        // Predicated region
        $region57: #{tpu_custom_call.1} parent=55 // pred_check
          %p432 = pneg %p45
        $region58: #{tpu_custom_call.1} parent=55 // pred_check_branch
          %434 = sbr.rel (%p432) target = $region60
        $region59: #{tpu_custom_call.1} parent=55 // pred_region
          %p435 = scmp.lt.s32.totalorder %s25, 1
          %s436 = scalar_select %p435, %s25, 1
          %s437 = smul.addr %s436, 8
          %s438 = scalar_lea.vmem %s0, %s437
        $region60: #{tpu_custom_call.1} parent=55 // pred_fallthru
          _
        // Predicated region
        $region61: #{tpu_custom_call.1} parent=55 // pred_check
          %p439 = pneg %p71
        $region62: #{tpu_custom_call.1} parent=55 // pred_check_branch
          %441 = sbr.rel (%p439) target = $region64
        $region63: #{tpu_custom_call.1} parent=55 // pred_region
          %p442 = scmp.lt.s32.totalorder %s25, 1
          %s443 = scalar_select %p442, %s25, 1
          %s444 = scalar_lea.vmem %s1, %s443
        $region64: #{tpu_custom_call.1} parent=55 // pred_fallthru
          _
        // Predicated region
        $region65: #{tpu_custom_call.1} parent=55 // pred_check
          %p445 = pneg %p97
        $region66: #{tpu_custom_call.1} parent=55 // pred_check_branch
          %447 = sbr.rel (%p445) target = $region68
        $region67: #{tpu_custom_call.1} parent=55 // pred_region
          %p448 = scmp.lt.s32.totalorder %s25, 1
          %s449 = scalar_select %p448, %s25, 1
          %s450 = smul.addr %s449, 8
          %s451 = scalar_lea.vmem %s2, %s450
        $region68: #{tpu_custom_call.1} parent=55 // pred_fallthru
          _
      $region56: #{tpu_custom_call.1} parent=5 // pred_fallthru
        _
      %p452 = scmp.le.s32.totalorder 1, %s25
      %p453 = scmp.lt.s32.totalorder %s25, 3
      %p454 = pnand %p452, %p453
      %p455 = pneg %p454
      // Predicated region
      $region69: #{tpu_custom_call.1} parent=5 // pred_check
        _
      $region70: #{tpu_custom_call.1} parent=5 // pred_check_branch
        %457 = sbr.rel (%p454) target = $region72
      $region71: #{tpu_custom_call.1} parent=5 // pred_region
        %s458 = ssub.s32 %s25, 1
        // Predicated region
        $region73: #{tpu_custom_call.1} parent=71 // pred_check
          %p459 = pneg %p124
        $region74: #{tpu_custom_call.1} parent=71 // pred_check_branch
          %461 = sbr.rel (%p459) target = $region76
        $region75: #{tpu_custom_call.1} parent=71 // pred_region
          %463 = dma.done [#allocation3], 512
        $region76: #{tpu_custom_call.1} parent=71 // pred_fallthru
          _
        // Predicated region
        $region77: #{tpu_custom_call.1} parent=71 // pred_check
          %p464 = pneg %p166
        $region78: #{tpu_custom_call.1} parent=71 // pred_check_branch
          %466 = sbr.rel (%p464) target = $region80
        $region79: #{tpu_custom_call.1} parent=71 // pred_region
          %468 = dma.done [#allocation6], 512
        $region80: #{tpu_custom_call.1} parent=71 // pred_fallthru
          _
        // Predicated region
        $region81: #{tpu_custom_call.1} parent=71 // pred_check
          %p469 = pneg %p208
        $region82: #{tpu_custom_call.1} parent=71 // pred_check_branch
          %471 = sbr.rel (%p469) target = $region84
        $region83: #{tpu_custom_call.1} parent=71 // pred_region
          %473 = dma.done [#allocation6], 512
        $region84: #{tpu_custom_call.1} parent=71 // pred_fallthru
          _
        // Predicated region
        $region85: #{tpu_custom_call.1} parent=71 // pred_check
          %p474 = pneg %p250
        $region86: #{tpu_custom_call.1} parent=71 // pred_check_branch
          %476 = sbr.rel (%p474) target = $region88
        $region87: #{tpu_custom_call.1} parent=71 // pred_region
          %478 = dma.done [#allocation9], 512
        $region88: #{tpu_custom_call.1} parent=71 // pred_fallthru
          _
        %p479 = scmp.lt.s32.totalorder %s30, 1
        %s480 = scalar_select %p479, %s30, 1
        %s481 = smul.addr %s480, 8
        %s482 = scalar_lea.vmem %s0, %s481
        %p483 = pneg %p51
        %p484 = pneg %p48
        %p485 = scmp.lt.s32.totalorder %s30, 1
        %s486 = scalar_select %p485, %s30, 1
        %s487 = scalar_lea.vmem %s1, %s486
        %p488 = pneg %p77
        %p489 = pneg %p74
        %p490 = scmp.lt.s32.totalorder %s30, 1
        %s491 = scalar_select %p490, %s30, 1
        %s492 = smul.addr %s491, 8
        %s493 = scalar_lea.vmem %s2, %s492
        %p494 = pneg %p103
        %p495 = pneg %p100
        %p496 = pneg %p124
        %p497 = pneg %p121
        %p498 = pneg %p145
        %p499 = pneg %p142
        %p500 = pneg %p166
        %p501 = pneg %p163
        %p502 = pneg %p187
        %p503 = pneg %p184
        %p504 = pneg %p208
        %p505 = pneg %p205
        %p506 = pneg %p229
        %p507 = pneg %p226
        %p508 = pneg %p250
        %p509 = pneg %p247
        %p510 = pneg %p271
        %p511 = pneg %p268
        %p512 = pneg %p292
        %p513 = pneg %p289
        %p514 = pneg %p313
        %p515 = pneg %p310
        %p516 = pneg %p339
        %p517 = pneg %p336
        %s518 = sand.u32 %s326, 1
        %s519 = scalar_lea.sflag [#allocation4], %s518
        %s520 = sand.u32 %s326, 1
        %s521 = smul.addr %s520, 8
        %s522 = scalar_lea.vmem [#allocation10], %s521
        %p523 = scmp.lt.s32.totalorder %s30, 1
        %s524 = scalar_select %p523, %s30, 1
        %s525 = smul.addr %s524, 8
        %s526 = scalar_lea.vmem %s0, %s525
        %p527 = scmp.lt.s32.totalorder %s30, 1
        %s528 = scalar_select %p527, %s30, 1
        %s529 = scalar_lea.vmem %s1, %s528
        %p530 = scmp.lt.s32.totalorder %s30, 1
        %s531 = scalar_select %p530, %s30, 1
        %s532 = smul.addr %s531, 8
        %s533 = scalar_lea.vmem %s2, %s532
        %v534 = vld [vmem:[%s526] sm:$0xff]
        %v535 = vld [vmem:[%s529] sm:$0x1]
        %v536 = vld [vmem:[%s533] sm:$0xff]
        %v537 = vld [vmem:[#allocation2] sm:$0xff]
        %v538 = vld [vmem:[#allocation2 + $0x8] sm:$0xff]
        %v539 = vld [vmem:[#allocation2 + $0x10] sm:$0xff]
        %v540 = vld [vmem:[#allocation2 + $0x18] sm:$0xff]
        %v541 = vld [vmem:[%s4] sm:$0x1]
        %v543 = vperm.slane %v541, 0
        %vm545 = vcmask 261120
        %v547 = vsel %vm545, %v534, 0
        %v550 = vsel %vm545, %v537, 0
        %v553 = vsel %vm545, %v538, 0
        %v556 = vsel %vm545, %v539, 0
        %v559 = vsel %vm545, %v540, 0
        %561 = vmatpush.xpose.msra.mxu0 0.0
        %562 = vmatpush.xpose.msra.mxu0 0.0
        %563 = vmatpush.xpose.msra.mxu0 0.0
        %564 = vmatpush.xpose.msra.mxu0 0.0
        %565 = vmatpush.xpose.msra.mxu0 0.0
        %566 = vmatpush.xpose.msra.mxu0 0.0
        %567 = vmatpush.xpose.msra.mxu0 0.0
        %568 = vmatpush.xpose.msra.mxu0 0.0
        %569 = vmatpush.xpose.msra.mxu0 0.0
        %570 = vmatpush.xpose.msra.mxu0 0.0
        %571 = vmatpush.xpose.msra.mxu0 0.0
        %572 = vmatpush.xpose.msra.mxu0 0.0
        %v573 = vand.u32 %v559, 4294901760
        %574 = vmatpush.xpose.msra.mxu0 %v573
        %v575 = vand.u32 %v556, 4294901760
        %576 = vmatpush.xpose.msra.mxu0 %v575
        %v577 = vand.u32 %v553, 4294901760
        %578 = vmatpush.xpose.msra.mxu0 %v577
        %v579 = vand.u32 %v550, 4294901760
        %580 = vmatpush.xpose.msra.mxu0 %v579
        %v581 = vand.u32 %v547, 4294901760
        %v582 = vsub.f32 %v547, %v581
        %v583 = vand.u32 %v582, 4294901760
        %v584 = vsub.f32 %v582, %v583
        %v585 = vand.u32 %v584, 4294901760
        %586 = vmatmul.f32.gmra.mxu0 %v585
        %v587 = vpop.f32.mrf.mxu0
        %v588 = vadd.f32 %v543, %v587
        %589 = vdwg.mxu0
        %590 = vmatpush.xpose.msra.mxu0 0.0
        %591 = vmatpush.xpose.msra.mxu0 0.0
        %592 = vmatpush.xpose.msra.mxu0 0.0
        %593 = vmatpush.xpose.msra.mxu0 0.0
        %594 = vmatpush.xpose.msra.mxu0 0.0
        %595 = vmatpush.xpose.msra.mxu0 0.0
        %596 = vmatpush.xpose.msra.mxu0 0.0
        %597 = vmatpush.xpose.msra.mxu0 0.0
        %598 = vmatpush.xpose.msra.mxu0 0.0
        %599 = vmatpush.xpose.msra.mxu0 0.0
        %600 = vmatpush.xpose.msra.mxu0 0.0
        %601 = vmatpush.xpose.msra.mxu0 0.0
        %v602 = vand.u32 %v559, 4294901760
        %v603 = vsub.f32 %v559, %v602
        %v604 = vand.u32 %v603, 4294901760
        %v605 = vsub.f32 %v603, %v604
        %v606 = vand.u32 %v605, 4294901760
        %607 = vmatpush.xpose.msra.mxu0 %v606
        %v608 = vand.u32 %v556, 4294901760
        %v609 = vsub.f32 %v556, %v608
        %v610 = vand.u32 %v609, 4294901760
        %v611 = vsub.f32 %v609, %v610
        %v612 = vand.u32 %v611, 4294901760
        %613 = vmatpush.xpose.msra.mxu0 %v612
        %v614 = vand.u32 %v553, 4294901760
        %v615 = vsub.f32 %v553, %v614
        %v616 = vand.u32 %v615, 4294901760
        %v617 = vsub.f32 %v615, %v616
        %v618 = vand.u32 %v617, 4294901760
        %619 = vmatpush.xpose.msra.mxu0 %v618
        %v620 = vand.u32 %v550, 4294901760
        %v621 = vsub.f32 %v550, %v620
        %v622 = vand.u32 %v621, 4294901760
        %v623 = vsub.f32 %v621, %v622
        %v624 = vand.u32 %v623, 4294901760
        %625 = vmatpush.xpose.msra.mxu0 %v624
        %v626 = vand.u32 %v547, 4294901760
        %627 = vmatmul.f32.gmra.mxu0 %v626
        %v628 = vpop.f32.mrf.mxu0
        %v629 = vadd.f32 %v588, %v628
        %630 = vdwg.mxu0
        %631 = vmatpush.xpose.msra.mxu0 0.0
        %632 = vmatpush.xpose.msra.mxu0 0.0
        %633 = vmatpush.xpose.msra.mxu0 0.0
        %634 = vmatpush.xpose.msra.mxu0 0.0
        %635 = vmatpush.xpose.msra.mxu0 0.0
        %636 = vmatpush.xpose.msra.mxu0 0.0
        %637 = vmatpush.xpose.msra.mxu0 0.0
        %638 = vmatpush.xpose.msra.mxu0 0.0
        %639 = vmatpush.xpose.msra.mxu0 0.0
        %640 = vmatpush.xpose.msra.mxu0 0.0
        %641 = vmatpush.xpose.msra.mxu0 0.0
        %642 = vmatpush.xpose.msra.mxu0 0.0
        %v643 = vand.u32 %v559, 4294901760
        %v644 = vsub.f32 %v559, %v643
        %645 = vmatpush.xpose.msra.mxu0 %v644
        %v646 = vand.u32 %v556, 4294901760
        %v647 = vsub.f32 %v556, %v646
        %648 = vmatpush.xpose.msra.mxu0 %v647
        %v649 = vand.u32 %v553, 4294901760
        %v650 = vsub.f32 %v553, %v649
        %651 = vmatpush.xpose.msra.mxu0 %v650
        %v652 = vand.u32 %v550, 4294901760
        %v653 = vsub.f32 %v550, %v652
        %654 = vmatpush.xpose.msra.mxu0 %v653
        %v655 = vand.u32 %v547, 4294901760
        %v656 = vsub.f32 %v547, %v655
        %657 = vmatmul.f32.gmra.mxu0 %v656
        %v658 = vpop.f32.mrf.mxu0
        %v659 = vadd.f32 %v629, %v658
        %660 = vdwg.mxu0
        %661 = vmatpush.xpose.msra.mxu0 0.0
        %662 = vmatpush.xpose.msra.mxu0 0.0
        %663 = vmatpush.xpose.msra.mxu0 0.0
        %664 = vmatpush.xpose.msra.mxu0 0.0
        %665 = vmatpush.xpose.msra.mxu0 0.0
        %666 = vmatpush.xpose.msra.mxu0 0.0
        %667 = vmatpush.xpose.msra.mxu0 0.0
        %668 = vmatpush.xpose.msra.mxu0 0.0
        %669 = vmatpush.xpose.msra.mxu0 0.0
        %670 = vmatpush.xpose.msra.mxu0 0.0
        %671 = vmatpush.xpose.msra.mxu0 0.0
        %672 = vmatpush.xpose.msra.mxu0 0.0
        %v673 = vand.u32 %v559, 4294901760
        %674 = vmatpush.xpose.msra.mxu0 %v673
        %v675 = vand.u32 %v556, 4294901760
        %676 = vmatpush.xpose.msra.mxu0 %v675
        %v677 = vand.u32 %v553, 4294901760
        %678 = vmatpush.xpose.msra.mxu0 %v677
        %v679 = vand.u32 %v550, 4294901760
        %680 = vmatpush.xpose.msra.mxu0 %v679
        %v681 = vand.u32 %v547, 4294901760
        %v682 = vsub.f32 %v547, %v681
        %v683 = vand.u32 %v682, 4294901760
        %684 = vmatmul.f32.gmra.mxu0 %v683
        %v685 = vpop.f32.mrf.mxu0
        %v686 = vadd.f32 %v659, %v685
        %687 = vdwg.mxu0
        %688 = vmatpush.xpose.msra.mxu0 0.0
        %689 = vmatpush.xpose.msra.mxu0 0.0
        %690 = vmatpush.xpose.msra.mxu0 0.0
        %691 = vmatpush.xpose.msra.mxu0 0.0
        %692 = vmatpush.xpose.msra.mxu0 0.0
        %693 = vmatpush.xpose.msra.mxu0 0.0
        %694 = vmatpush.xpose.msra.mxu0 0.0
        %695 = vmatpush.xpose.msra.mxu0 0.0
        %696 = vmatpush.xpose.msra.mxu0 0.0
        %697 = vmatpush.xpose.msra.mxu0 0.0
        %698 = vmatpush.xpose.msra.mxu0 0.0
        %699 = vmatpush.xpose.msra.mxu0 0.0
        %v700 = vand.u32 %v559, 4294901760
        %v701 = vsub.f32 %v559, %v700
        %v702 = vand.u32 %v701, 4294901760
        %703 = vmatpush.xpose.msra.mxu0 %v702
        %v704 = vand.u32 %v556, 4294901760
        %v705 = vsub.f32 %v556, %v704
        %v706 = vand.u32 %v705, 4294901760
        %707 = vmatpush.xpose.msra.mxu0 %v706
        %v708 = vand.u32 %v553, 4294901760
        %v709 = vsub.f32 %v553, %v708
        %v710 = vand.u32 %v709, 4294901760
        %711 = vmatpush.xpose.msra.mxu0 %v710
        %v712 = vand.u32 %v550, 4294901760
        %v713 = vsub.f32 %v550, %v712
        %v714 = vand.u32 %v713, 4294901760
        %715 = vmatpush.xpose.msra.mxu0 %v714
        %v716 = vand.u32 %v547, 4294901760
        %717 = vmatmul.f32.gmra.mxu0 %v716
        %v718 = vpop.f32.mrf.mxu0
        %v719 = vadd.f32 %v686, %v718
        %720 = vdwg.mxu0
        %721 = vmatpush.xpose.msra.mxu0 0.0
        %722 = vmatpush.xpose.msra.mxu0 0.0
        %723 = vmatpush.xpose.msra.mxu0 0.0
        %724 = vmatpush.xpose.msra.mxu0 0.0
        %725 = vmatpush.xpose.msra.mxu0 0.0
        %726 = vmatpush.xpose.msra.mxu0 0.0
        %727 = vmatpush.xpose.msra.mxu0 0.0
        %728 = vmatpush.xpose.msra.mxu0 0.0
        %729 = vmatpush.xpose.msra.mxu0 0.0
        %730 = vmatpush.xpose.msra.mxu0 0.0
        %731 = vmatpush.xpose.msra.mxu0 0.0
        %732 = vmatpush.xpose.msra.mxu0 0.0
        %v733 = vand.u32 %v559, 4294901760
        %734 = vmatpush.xpose.msra.mxu0 %v733
        %v735 = vand.u32 %v556, 4294901760
        %736 = vmatpush.xpose.msra.mxu0 %v735
        %v737 = vand.u32 %v553, 4294901760
        %738 = vmatpush.xpose.msra.mxu0 %v737
        %v739 = vand.u32 %v550, 4294901760
        %740 = vmatpush.xpose.msra.mxu0 %v739
        %v741 = vand.u32 %v547, 4294901760
        %742 = vmatmul.f32.gmra.mxu0 %v741
        %v743 = vpop.f32.mrf.mxu0
        %v744 = vadd.f32 %v719, %v743
        %745 = vdwg.mxu0
        %v746 = vld [vmem:[#allocation5] sm:$0xff]
        %v747 = vld [vmem:[#allocation5 + $0x8] sm:$0xff]
        %v748 = vld [vmem:[#allocation5 + $0x10] sm:$0xff]
        %v749 = vld [vmem:[#allocation5 + $0x18] sm:$0xff]
        %v750 = vld [vmem:[%s6] sm:$0x1]
        %v752 = vperm.slane %v750, 0
        %v755 = vsel %vm545, %v746, 0
        %v758 = vsel %vm545, %v747, 0
        %v761 = vsel %vm545, %v748, 0
        %v764 = vsel %vm545, %v749, 0
        %766 = vmatpush.xpose.msra.mxu0 0.0
        %767 = vmatpush.xpose.msra.mxu0 0.0
        %768 = vmatpush.xpose.msra.mxu0 0.0
        %769 = vmatpush.xpose.msra.mxu0 0.0
        %770 = vmatpush.xpose.msra.mxu0 0.0
        %771 = vmatpush.xpose.msra.mxu0 0.0
        %772 = vmatpush.xpose.msra.mxu0 0.0
        %773 = vmatpush.xpose.msra.mxu0 0.0
        %774 = vmatpush.xpose.msra.mxu0 0.0
        %775 = vmatpush.xpose.msra.mxu0 0.0
        %776 = vmatpush.xpose.msra.mxu0 0.0
        %777 = vmatpush.xpose.msra.mxu0 0.0
        %v778 = vand.u32 %v764, 4294901760
        %779 = vmatpush.xpose.msra.mxu0 %v778
        %v780 = vand.u32 %v761, 4294901760
        %781 = vmatpush.xpose.msra.mxu0 %v780
        %v782 = vand.u32 %v758, 4294901760
        %783 = vmatpush.xpose.msra.mxu0 %v782
        %v784 = vand.u32 %v755, 4294901760
        %785 = vmatpush.xpose.msra.mxu0 %v784
        %v786 = vand.u32 %v547, 4294901760
        %v787 = vsub.f32 %v547, %v786
        %v788 = vand.u32 %v787, 4294901760
        %v789 = vsub.f32 %v787, %v788
        %v790 = vand.u32 %v789, 4294901760
        %791 = vmatmul.f32.gmra.mxu0 %v790
        %v792 = vpop.f32.mrf.mxu0
        %v793 = vadd.f32 %v752, %v792
        %794 = vdwg.mxu0
        %795 = vmatpush.xpose.msra.mxu0 0.0
        %796 = vmatpush.xpose.msra.mxu0 0.0
        %797 = vmatpush.xpose.msra.mxu0 0.0
        %798 = vmatpush.xpose.msra.mxu0 0.0
        %799 = vmatpush.xpose.msra.mxu0 0.0
        %800 = vmatpush.xpose.msra.mxu0 0.0
        %801 = vmatpush.xpose.msra.mxu0 0.0
        %802 = vmatpush.xpose.msra.mxu0 0.0
        %803 = vmatpush.xpose.msra.mxu0 0.0
        %804 = vmatpush.xpose.msra.mxu0 0.0
        %805 = vmatpush.xpose.msra.mxu0 0.0
        %806 = vmatpush.xpose.msra.mxu0 0.0
        %v807 = vand.u32 %v764, 4294901760
        %v808 = vsub.f32 %v764, %v807
        %v809 = vand.u32 %v808, 4294901760
        %v810 = vsub.f32 %v808, %v809
        %v811 = vand.u32 %v810, 4294901760
        %812 = vmatpush.xpose.msra.mxu0 %v811
        %v813 = vand.u32 %v761, 4294901760
        %v814 = vsub.f32 %v761, %v813
        %v815 = vand.u32 %v814, 4294901760
        %v816 = vsub.f32 %v814, %v815
        %v817 = vand.u32 %v816, 4294901760
        %818 = vmatpush.xpose.msra.mxu0 %v817
        %v819 = vand.u32 %v758, 4294901760
        %v820 = vsub.f32 %v758, %v819
        %v821 = vand.u32 %v820, 4294901760
        %v822 = vsub.f32 %v820, %v821
        %v823 = vand.u32 %v822, 4294901760
        %824 = vmatpush.xpose.msra.mxu0 %v823
        %v825 = vand.u32 %v755, 4294901760
        %v826 = vsub.f32 %v755, %v825
        %v827 = vand.u32 %v826, 4294901760
        %v828 = vsub.f32 %v826, %v827
        %v829 = vand.u32 %v828, 4294901760
        %830 = vmatpush.xpose.msra.mxu0 %v829
        %v831 = vand.u32 %v547, 4294901760
        %832 = vmatmul.f32.gmra.mxu0 %v831
        %v833 = vpop.f32.mrf.mxu0
        %v834 = vadd.f32 %v793, %v833
        %835 = vdwg.mxu0
        %836 = vmatpush.xpose.msra.mxu0 0.0
        %837 = vmatpush.xpose.msra.mxu0 0.0
        %838 = vmatpush.xpose.msra.mxu0 0.0
        %839 = vmatpush.xpose.msra.mxu0 0.0
        %840 = vmatpush.xpose.msra.mxu0 0.0
        %841 = vmatpush.xpose.msra.mxu0 0.0
        %842 = vmatpush.xpose.msra.mxu0 0.0
        %843 = vmatpush.xpose.msra.mxu0 0.0
        %844 = vmatpush.xpose.msra.mxu0 0.0
        %845 = vmatpush.xpose.msra.mxu0 0.0
        %846 = vmatpush.xpose.msra.mxu0 0.0
        %847 = vmatpush.xpose.msra.mxu0 0.0
        %v848 = vand.u32 %v764, 4294901760
        %v849 = vsub.f32 %v764, %v848
        %850 = vmatpush.xpose.msra.mxu0 %v849
        %v851 = vand.u32 %v761, 4294901760
        %v852 = vsub.f32 %v761, %v851
        %853 = vmatpush.xpose.msra.mxu0 %v852
        %v854 = vand.u32 %v758, 4294901760
        %v855 = vsub.f32 %v758, %v854
        %856 = vmatpush.xpose.msra.mxu0 %v855
        %v857 = vand.u32 %v755, 4294901760
        %v858 = vsub.f32 %v755, %v857
        %859 = vmatpush.xpose.msra.mxu0 %v858
        %v860 = vand.u32 %v547, 4294901760
        %v861 = vsub.f32 %v547, %v860
        %862 = vmatmul.f32.gmra.mxu0 %v861
        %v863 = vpop.f32.mrf.mxu0
        %v864 = vadd.f32 %v834, %v863
        %865 = vdwg.mxu0
        %866 = vmatpush.xpose.msra.mxu0 0.0
        %867 = vmatpush.xpose.msra.mxu0 0.0
        %868 = vmatpush.xpose.msra.mxu0 0.0
        %869 = vmatpush.xpose.msra.mxu0 0.0
        %870 = vmatpush.xpose.msra.mxu0 0.0
        %871 = vmatpush.xpose.msra.mxu0 0.0
        %872 = vmatpush.xpose.msra.mxu0 0.0
        %873 = vmatpush.xpose.msra.mxu0 0.0
        %874 = vmatpush.xpose.msra.mxu0 0.0
        %875 = vmatpush.xpose.msra.mxu0 0.0
        %876 = vmatpush.xpose.msra.mxu0 0.0
        %877 = vmatpush.xpose.msra.mxu0 0.0
        %v878 = vand.u32 %v764, 4294901760
        %879 = vmatpush.xpose.msra.mxu0 %v878
        %v880 = vand.u32 %v761, 4294901760
        %881 = vmatpush.xpose.msra.mxu0 %v880
        %v882 = vand.u32 %v758, 4294901760
        %883 = vmatpush.xpose.msra.mxu0 %v882
        %v884 = vand.u32 %v755, 4294901760
        %885 = vmatpush.xpose.msra.mxu0 %v884
        %v886 = vand.u32 %v547, 4294901760
        %v887 = vsub.f32 %v547, %v886
        %v888 = vand.u32 %v887, 4294901760
        %889 = vmatmul.f32.gmra.mxu0 %v888
        %v890 = vpop.f32.mrf.mxu0
        %v891 = vadd.f32 %v864, %v890
        %892 = vdwg.mxu0
        %893 = vmatpush.xpose.msra.mxu0 0.0
        %894 = vmatpush.xpose.msra.mxu0 0.0
        %895 = vmatpush.xpose.msra.mxu0 0.0
        %896 = vmatpush.xpose.msra.mxu0 0.0
        %897 = vmatpush.xpose.msra.mxu0 0.0
        %898 = vmatpush.xpose.msra.mxu0 0.0
        %899 = vmatpush.xpose.msra.mxu0 0.0
        %900 = vmatpush.xpose.msra.mxu0 0.0
        %901 = vmatpush.xpose.msra.mxu0 0.0
        %902 = vmatpush.xpose.msra.mxu0 0.0
        %903 = vmatpush.xpose.msra.mxu0 0.0
        %904 = vmatpush.xpose.msra.mxu0 0.0
        %v905 = vand.u32 %v764, 4294901760
        %v906 = vsub.f32 %v764, %v905
        %v907 = vand.u32 %v906, 4294901760
        %908 = vmatpush.xpose.msra.mxu0 %v907
        %v909 = vand.u32 %v761, 4294901760
        %v910 = vsub.f32 %v761, %v909
        %v911 = vand.u32 %v910, 4294901760
        %912 = vmatpush.xpose.msra.mxu0 %v911
        %v913 = vand.u32 %v758, 4294901760
        %v914 = vsub.f32 %v758, %v913
        %v915 = vand.u32 %v914, 4294901760
        %916 = vmatpush.xpose.msra.mxu0 %v915
        %v917 = vand.u32 %v755, 4294901760
        %v918 = vsub.f32 %v755, %v917
        %v919 = vand.u32 %v918, 4294901760
        %920 = vmatpush.xpose.msra.mxu0 %v919
        %v921 = vand.u32 %v547, 4294901760
        %922 = vmatmul.f32.gmra.mxu0 %v921
        %v923 = vpop.f32.mrf.mxu0
        %v924 = vadd.f32 %v891, %v923
        %925 = vdwg.mxu0
        %926 = vmatpush.xpose.msra.mxu0 0.0
        %927 = vmatpush.xpose.msra.mxu0 0.0
        %928 = vmatpush.xpose.msra.mxu0 0.0
        %929 = vmatpush.xpose.msra.mxu0 0.0
        %930 = vmatpush.xpose.msra.mxu0 0.0
        %931 = vmatpush.xpose.msra.mxu0 0.0
        %932 = vmatpush.xpose.msra.mxu0 0.0
        %933 = vmatpush.xpose.msra.mxu0 0.0
        %934 = vmatpush.xpose.msra.mxu0 0.0
        %935 = vmatpush.xpose.msra.mxu0 0.0
        %936 = vmatpush.xpose.msra.mxu0 0.0
        %937 = vmatpush.xpose.msra.mxu0 0.0
        %v938 = vand.u32 %v764, 4294901760
        %939 = vmatpush.xpose.msra.mxu0 %v938
        %v940 = vand.u32 %v761, 4294901760
        %941 = vmatpush.xpose.msra.mxu0 %v940
        %v942 = vand.u32 %v758, 4294901760
        %943 = vmatpush.xpose.msra.mxu0 %v942
        %v944 = vand.u32 %v755, 4294901760
        %945 = vmatpush.xpose.msra.mxu0 %v944
        %v946 = vand.u32 %v547, 4294901760
        %947 = vmatmul.f32.gmra.mxu0 %v946
        %v948 = vpop.f32.mrf.mxu0
        %v949 = vadd.f32 %v924, %v948
        %950 = vdwg.mxu0
        %v951 = vld [vmem:[#allocation7] sm:$0xff]
        %v952 = vld [vmem:[#allocation7 + $0x8] sm:$0xff]
        %v953 = vld [vmem:[#allocation7 + $0x10] sm:$0xff]
        %v954 = vld [vmem:[#allocation7 + $0x18] sm:$0xff]
        %v955 = vld [vmem:[%s8] sm:$0x1]
        %v957 = vperm.slane %v955, 0
        %v960 = vsel %vm545, %v951, 0
        %v963 = vsel %vm545, %v952, 0
        %v966 = vsel %vm545, %v953, 0
        %v969 = vsel %vm545, %v954, 0
        %971 = vmatpush.xpose.msra.mxu0 0.0
        %972 = vmatpush.xpose.msra.mxu0 0.0
        %973 = vmatpush.xpose.msra.mxu0 0.0
        %974 = vmatpush.xpose.msra.mxu0 0.0
        %975 = vmatpush.xpose.msra.mxu0 0.0
        %976 = vmatpush.xpose.msra.mxu0 0.0
        %977 = vmatpush.xpose.msra.mxu0 0.0
        %978 = vmatpush.xpose.msra.mxu0 0.0
        %979 = vmatpush.xpose.msra.mxu0 0.0
        %980 = vmatpush.xpose.msra.mxu0 0.0
        %981 = vmatpush.xpose.msra.mxu0 0.0
        %982 = vmatpush.xpose.msra.mxu0 0.0
        %v983 = vand.u32 %v969, 4294901760
        %984 = vmatpush.xpose.msra.mxu0 %v983
        %v985 = vand.u32 %v966, 4294901760
        %986 = vmatpush.xpose.msra.mxu0 %v985
        %v987 = vand.u32 %v963, 4294901760
        %988 = vmatpush.xpose.msra.mxu0 %v987
        %v989 = vand.u32 %v960, 4294901760
        %990 = vmatpush.xpose.msra.mxu0 %v989
        %v991 = vand.u32 %v547, 4294901760
        %v992 = vsub.f32 %v547, %v991
        %v993 = vand.u32 %v992, 4294901760
        %v994 = vsub.f32 %v992, %v993
        %v995 = vand.u32 %v994, 4294901760
        %996 = vmatmul.f32.gmra.mxu0 %v995
        %v997 = vpop.f32.mrf.mxu0
        %v998 = vadd.f32 %v957, %v997
        %999 = vdwg.mxu0
        %1000 = vmatpush.xpose.msra.mxu0 0.0
        %1001 = vmatpush.xpose.msra.mxu0 0.0
        %1002 = vmatpush.xpose.msra.mxu0 0.0
        %1003 = vmatpush.xpose.msra.mxu0 0.0
        %1004 = vmatpush.xpose.msra.mxu0 0.0
        %1005 = vmatpush.xpose.msra.mxu0 0.0
        %1006 = vmatpush.xpose.msra.mxu0 0.0
        %1007 = vmatpush.xpose.msra.mxu0 0.0
        %1008 = vmatpush.xpose.msra.mxu0 0.0
        %1009 = vmatpush.xpose.msra.mxu0 0.0
        %1010 = vmatpush.xpose.msra.mxu0 0.0
        %1011 = vmatpush.xpose.msra.mxu0 0.0
        %v1012 = vand.u32 %v969, 4294901760
        %v1013 = vsub.f32 %v969, %v1012
        %v1014 = vand.u32 %v1013, 4294901760
        %v1015 = vsub.f32 %v1013, %v1014
        %v1016 = vand.u32 %v1015, 4294901760
        %1017 = vmatpush.xpose.msra.mxu0 %v1016
        %v1018 = vand.u32 %v966, 4294901760
        %v1019 = vsub.f32 %v966, %v1018
        %v1020 = vand.u32 %v1019, 4294901760
        %v1021 = vsub.f32 %v1019, %v1020
        %v1022 = vand.u32 %v1021, 4294901760
        %1023 = vmatpush.xpose.msra.mxu0 %v1022
        %v1024 = vand.u32 %v963, 4294901760
        %v1025 = vsub.f32 %v963, %v1024
        %v1026 = vand.u32 %v1025, 4294901760
        %v1027 = vsub.f32 %v1025, %v1026
        %v1028 = vand.u32 %v1027, 4294901760
        %1029 = vmatpush.xpose.msra.mxu0 %v1028
        %v1030 = vand.u32 %v960, 4294901760
        %v1031 = vsub.f32 %v960, %v1030
        %v1032 = vand.u32 %v1031, 4294901760
        %v1033 = vsub.f32 %v1031, %v1032
        %v1034 = vand.u32 %v1033, 4294901760
        %1035 = vmatpush.xpose.msra.mxu0 %v1034
        %v1036 = vand.u32 %v547, 4294901760
        %1037 = vmatmul.f32.gmra.mxu0 %v1036
        %v1038 = vpop.f32.mrf.mxu0
        %v1039 = vadd.f32 %v998, %v1038
        %1040 = vdwg.mxu0
        %1041 = vmatpush.xpose.msra.mxu0 0.0
        %1042 = vmatpush.xpose.msra.mxu0 0.0
        %1043 = vmatpush.xpose.msra.mxu0 0.0
        %1044 = vmatpush.xpose.msra.mxu0 0.0
        %1045 = vmatpush.xpose.msra.mxu0 0.0
        %1046 = vmatpush.xpose.msra.mxu0 0.0
        %1047 = vmatpush.xpose.msra.mxu0 0.0
        %1048 = vmatpush.xpose.msra.mxu0 0.0
        %1049 = vmatpush.xpose.msra.mxu0 0.0
        %1050 = vmatpush.xpose.msra.mxu0 0.0
        %1051 = vmatpush.xpose.msra.mxu0 0.0
        %1052 = vmatpush.xpose.msra.mxu0 0.0
        %v1053 = vand.u32 %v969, 4294901760
        %v1054 = vsub.f32 %v969, %v1053
        %1055 = vmatpush.xpose.msra.mxu0 %v1054
        %v1056 = vand.u32 %v966, 4294901760
        %v1057 = vsub.f32 %v966, %v1056
        %1058 = vmatpush.xpose.msra.mxu0 %v1057
        %v1059 = vand.u32 %v963, 4294901760
        %v1060 = vsub.f32 %v963, %v1059
        %1061 = vmatpush.xpose.msra.mxu0 %v1060
        %v1062 = vand.u32 %v960, 4294901760
        %v1063 = vsub.f32 %v960, %v1062
        %1064 = vmatpush.xpose.msra.mxu0 %v1063
        %v1065 = vand.u32 %v547, 4294901760
        %v1066 = vsub.f32 %v547, %v1065
        %1067 = vmatmul.f32.gmra.mxu0 %v1066
        %v1068 = vpop.f32.mrf.mxu0
        %v1069 = vadd.f32 %v1039, %v1068
        %1070 = vdwg.mxu0
        %1071 = vmatpush.xpose.msra.mxu0 0.0
        %1072 = vmatpush.xpose.msra.mxu0 0.0
        %1073 = vmatpush.xpose.msra.mxu0 0.0
        %1074 = vmatpush.xpose.msra.mxu0 0.0
        %1075 = vmatpush.xpose.msra.mxu0 0.0
        %1076 = vmatpush.xpose.msra.mxu0 0.0
        %1077 = vmatpush.xpose.msra.mxu0 0.0
        %1078 = vmatpush.xpose.msra.mxu0 0.0
        %1079 = vmatpush.xpose.msra.mxu0 0.0
        %1080 = vmatpush.xpose.msra.mxu0 0.0
        %1081 = vmatpush.xpose.msra.mxu0 0.0
        %1082 = vmatpush.xpose.msra.mxu0 0.0
        %v1083 = vand.u32 %v969, 4294901760
        %1084 = vmatpush.xpose.msra.mxu0 %v1083
        %v1085 = vand.u32 %v966, 4294901760
        %1086 = vmatpush.xpose.msra.mxu0 %v1085
        %v1087 = vand.u32 %v963, 4294901760
        %1088 = vmatpush.xpose.msra.mxu0 %v1087
        %v1089 = vand.u32 %v960, 4294901760
        %1090 = vmatpush.xpose.msra.mxu0 %v1089
        %v1091 = vand.u32 %v547, 4294901760
        %v1092 = vsub.f32 %v547, %v1091
        %v1093 = vand.u32 %v1092, 4294901760
        %1094 = vmatmul.f32.gmra.mxu0 %v1093
        %v1095 = vpop.f32.mrf.mxu0
        %v1096 = vadd.f32 %v1069, %v1095
        %1097 = vdwg.mxu0
        %1098 = vmatpush.xpose.msra.mxu0 0.0
        %1099 = vmatpush.xpose.msra.mxu0 0.0
        %1100 = vmatpush.xpose.msra.mxu0 0.0
        %1101 = vmatpush.xpose.msra.mxu0 0.0
        %1102 = vmatpush.xpose.msra.mxu0 0.0
        %1103 = vmatpush.xpose.msra.mxu0 0.0
        %1104 = vmatpush.xpose.msra.mxu0 0.0
        %1105 = vmatpush.xpose.msra.mxu0 0.0
        %1106 = vmatpush.xpose.msra.mxu0 0.0
        %1107 = vmatpush.xpose.msra.mxu0 0.0
        %1108 = vmatpush.xpose.msra.mxu0 0.0
        %1109 = vmatpush.xpose.msra.mxu0 0.0
        %v1110 = vand.u32 %v969, 4294901760
        %v1111 = vsub.f32 %v969, %v1110
        %v1112 = vand.u32 %v1111, 4294901760
        %1113 = vmatpush.xpose.msra.mxu0 %v1112
        %v1114 = vand.u32 %v966, 4294901760
        %v1115 = vsub.f32 %v966, %v1114
        %v1116 = vand.u32 %v1115, 4294901760
        %1117 = vmatpush.xpose.msra.mxu0 %v1116
        %v1118 = vand.u32 %v963, 4294901760
        %v1119 = vsub.f32 %v963, %v1118
        %v1120 = vand.u32 %v1119, 4294901760
        %1121 = vmatpush.xpose.msra.mxu0 %v1120
        %v1122 = vand.u32 %v960, 4294901760
        %v1123 = vsub.f32 %v960, %v1122
        %v1124 = vand.u32 %v1123, 4294901760
        %1125 = vmatpush.xpose.msra.mxu0 %v1124
        %v1126 = vand.u32 %v547, 4294901760
        %1127 = vmatmul.f32.gmra.mxu0 %v1126
        %v1128 = vpop.f32.mrf.mxu0
        %v1129 = vadd.f32 %v1096, %v1128
        %1130 = vdwg.mxu0
        %1131 = vmatpush.xpose.msra.mxu0 0.0
        %1132 = vmatpush.xpose.msra.mxu0 0.0
        %1133 = vmatpush.xpose.msra.mxu0 0.0
        %1134 = vmatpush.xpose.msra.mxu0 0.0
        %1135 = vmatpush.xpose.msra.mxu0 0.0
        %1136 = vmatpush.xpose.msra.mxu0 0.0
        %1137 = vmatpush.xpose.msra.mxu0 0.0
        %1138 = vmatpush.xpose.msra.mxu0 0.0
        %1139 = vmatpush.xpose.msra.mxu0 0.0
        %1140 = vmatpush.xpose.msra.mxu0 0.0
        %1141 = vmatpush.xpose.msra.mxu0 0.0
        %1142 = vmatpush.xpose.msra.mxu0 0.0
        %v1143 = vand.u32 %v969, 4294901760
        %1144 = vmatpush.xpose.msra.mxu0 %v1143
        %v1145 = vand.u32 %v966, 4294901760
        %1146 = vmatpush.xpose.msra.mxu0 %v1145
        %v1147 = vand.u32 %v963, 4294901760
        %1148 = vmatpush.xpose.msra.mxu0 %v1147
        %v1149 = vand.u32 %v960, 4294901760
        %1150 = vmatpush.xpose.msra.mxu0 %v1149
        %v1151 = vand.u32 %v547, 4294901760
        %1152 = vmatmul.f32.gmra.mxu0 %v1151
        %v1153 = vpop.f32.mrf.mxu0
        %v1154 = vadd.f32 %v1129, %v1153
        %1155 = vdwg.mxu0
        %v1156 = vld [vmem:[#allocation8] sm:$0xff]
        %v1157 = vld [vmem:[#allocation8 + $0x8] sm:$0xff]
        %v1158 = vld [vmem:[#allocation8 + $0x10] sm:$0xff]
        %v1159 = vld [vmem:[#allocation8 + $0x18] sm:$0xff]
        %v1160 = vmul.f32 %v744, %v744
        %vm1161 = vcmask 130048
        %v1162 = vsel %vm1161, %v1160, 0.0
        %1163 = vadd.xlane.f32.xlu0 %v1162
        %v1164 = vpop.xlane.xlu0 %1163
        %v1165 = vrsqrt.pop %v1164
        %v1166 = vmul.f32 %v1165, %v1164
        %v1167 = vmul.f32 %v1166, %v1165
        %v1168 = vmul.f32 0.5, %v1167
        %v1169 = vsub.f32 1.5, %v1168
        %v1170 = vmul.f32 %v1165, %v1169
        %v1171 = vmul.f32 %v1164, %v1170
        %vm1172 = vcmp.eq.f32.partialorder %v1164, inf
        %v1173 = vsel %vm1172, %v1164, %v1171
        %vm1174 = vcmp.eq.f32.partialorder %v1164, 0.0
        %v1175 = vand.u32 %v1164, 2147483648
        %v1176 = vsel %vm1174, %v1175, %v1173
        %v1177 = vmax.f32 %v1176, 1e-12
        %v1178 = vrcp.pop %v1177
        %v1179 = vmul.f32 %v1177, %v1178
        %v1180 = vsub.f32 1.0, %v1179
        %v1181 = vmul.f32 %v1178, %v1180
        %v1182 = vadd.f32 %v1178, %v1181
        %vm1183 = vweird.f32 %v1177
        %vm1184 = vweird.f32 %v1178
        %vm1185 = vmor %vm1183, %vm1184
        %v1186 = vsel %vm1185, %v1178, %v1182
        %v1187 = vand.u32 2147483647, %v1177
        %vm1188 = vcmp.eq.f32.partialorder %v1187, 8.507059e+37
        %v1189 = vand.u32 %v1177, 2147483648
        %v1190 = vor.u32 1.1754944e-38, %v1189
        %v1191 = vsel %vm1188, %v1190, %v1186
        %v1192 = vmul.f32 %v744, %v1191
        %v1193 = vmul.f32 %v949, %v949
        %v1194 = vsel %vm1161, %v1193, 0.0
        %1195 = vadd.xlane.f32.xlu0 %v1194
        %v1196 = vpop.xlane.xlu0 %1195
        %v1197 = vrsqrt.pop %v1196
        %v1198 = vmul.f32 %v1197, %v1196
        %v1199 = vmul.f32 %v1198, %v1197
        %v1200 = vmul.f32 0.5, %v1199
        %v1201 = vsub.f32 1.5, %v1200
        %v1202 = vmul.f32 %v1197, %v1201
        %v1203 = vmul.f32 %v1196, %v1202
        %vm1204 = vcmp.eq.f32.partialorder %v1196, inf
        %v1205 = vsel %vm1204, %v1196, %v1203
        %vm1206 = vcmp.eq.f32.partialorder %v1196, 0.0
        %v1207 = vand.u32 %v1196, 2147483648
        %v1208 = vsel %vm1206, %v1207, %v1205
        %v1209 = vmax.f32 %v1208, 1e-12
        %v1210 = vrcp.pop %v1209
        %v1211 = vmul.f32 %v1209, %v1210
        %v1212 = vsub.f32 1.0, %v1211
        %v1213 = vmul.f32 %v1210, %v1212
        %v1214 = vadd.f32 %v1210, %v1213
        %vm1215 = vweird.f32 %v1209
        %vm1216 = vweird.f32 %v1210
        %vm1217 = vmor %vm1215, %vm1216
        %v1218 = vsel %vm1217, %v1210, %v1214
        %v1219 = vand.u32 2147483647, %v1209
        %vm1220 = vcmp.eq.f32.partialorder %v1219, 8.507059e+37
        %v1221 = vand.u32 %v1209, 2147483648
        %v1222 = vor.u32 1.1754944e-38, %v1221
        %v1223 = vsel %vm1220, %v1222, %v1218
        %v1224 = vmul.f32 %v949, %v1223
        %v1226 = vsel %vm1161, %v1192, 0
        %v1229 = vsel %vm1161, %v1224, 0
        %1231 = vmatpush.xpose.msra.mxu0 0.0
        %1232 = vmatpush.xpose.msra.mxu0 0.0
        %1233 = vmatpush.xpose.msra.mxu0 0.0
        %1234 = vmatpush.xpose.msra.mxu0 0.0
        %1235 = vmatpush.xpose.msra.mxu0 0.0
        %1236 = vmatpush.xpose.msra.mxu0 0.0
        %1237 = vmatpush.xpose.msra.mxu0 0.0
        %1238 = vmatpush.xpose.msra.mxu0 0.0
        %1239 = vmatpush.xpose.msra.mxu0 0.0
        %1240 = vmatpush.xpose.msra.mxu0 0.0
        %1241 = vmatpush.xpose.msra.mxu0 0.0
        %1242 = vmatpush.xpose.msra.mxu0 0.0
        %1243 = vmatpush.xpose.msra.mxu0 0.0
        %1244 = vmatpush.xpose.msra.mxu0 0.0
        %1245 = vmatpush.xpose.msra.mxu0 0.0
        %v1246 = vand.u32 %v1229, 4294901760
        %1247 = vmatpush.xpose.msra.mxu0 %v1246
        %v1248 = vand.u32 %v1226, 4294901760
        %v1249 = vsub.f32 %v1226, %v1248
        %v1250 = vand.u32 %v1249, 4294901760
        %v1251 = vsub.f32 %v1249, %v1250
        %v1252 = vand.u32 %v1251, 4294901760
        %1253 = vmatmul.f32.gmra.mxu0 %v1252
        %v1254 = vpop.f32.mrf.mxu0
        %v1255 = vadd.f32 0.0, %v1254
        %1256 = vdwg.mxu0
        %1257 = vmatpush.xpose.msra.mxu0 0.0
        %1258 = vmatpush.xpose.msra.mxu0 0.0
        %1259 = vmatpush.xpose.msra.mxu0 0.0
        %1260 = vmatpush.xpose.msra.mxu0 0.0
        %1261 = vmatpush.xpose.msra.mxu0 0.0
        %1262 = vmatpush.xpose.msra.mxu0 0.0
        %1263 = vmatpush.xpose.msra.mxu0 0.0
        %1264 = vmatpush.xpose.msra.mxu0 0.0
        %1265 = vmatpush.xpose.msra.mxu0 0.0
        %1266 = vmatpush.xpose.msra.mxu0 0.0
        %1267 = vmatpush.xpose.msra.mxu0 0.0
        %1268 = vmatpush.xpose.msra.mxu0 0.0
        %1269 = vmatpush.xpose.msra.mxu0 0.0
        %1270 = vmatpush.xpose.msra.mxu0 0.0
        %1271 = vmatpush.xpose.msra.mxu0 0.0
        %v1272 = vand.u32 %v1229, 4294901760
        %v1273 = vsub.f32 %v1229, %v1272
        %v1274 = vand.u32 %v1273, 4294901760
        %v1275 = vsub.f32 %v1273, %v1274
        %v1276 = vand.u32 %v1275, 4294901760
        %1277 = vmatpush.xpose.msra.mxu0 %v1276
        %v1278 = vand.u32 %v1226, 4294901760
        %1279 = vmatmul.f32.gmra.mxu0 %v1278
        %v1280 = vpop.f32.mrf.mxu0
        %v1281 = vadd.f32 %v1255, %v1280
        %1282 = vdwg.mxu0
        %1283 = vmatpush.xpose.msra.mxu0 0.0
        %1284 = vmatpush.xpose.msra.mxu0 0.0
        %1285 = vmatpush.xpose.msra.mxu0 0.0
        %1286 = vmatpush.xpose.msra.mxu0 0.0
        %1287 = vmatpush.xpose.msra.mxu0 0.0
        %1288 = vmatpush.xpose.msra.mxu0 0.0
        %1289 = vmatpush.xpose.msra.mxu0 0.0
        %1290 = vmatpush.xpose.msra.mxu0 0.0
        %1291 = vmatpush.xpose.msra.mxu0 0.0
        %1292 = vmatpush.xpose.msra.mxu0 0.0
        %1293 = vmatpush.xpose.msra.mxu0 0.0
        %1294 = vmatpush.xpose.msra.mxu0 0.0
        %1295 = vmatpush.xpose.msra.mxu0 0.0
        %1296 = vmatpush.xpose.msra.mxu0 0.0
        %1297 = vmatpush.xpose.msra.mxu0 0.0
        %v1298 = vand.u32 %v1229, 4294901760
        %v1299 = vsub.f32 %v1229, %v1298
        %1300 = vmatpush.xpose.msra.mxu0 %v1299
        %v1301 = vand.u32 %v1226, 4294901760
        %v1302 = vsub.f32 %v1226, %v1301
        %1303 = vmatmul.f32.gmra.mxu0 %v1302
        %v1304 = vpop.f32.mrf.mxu0
        %v1305 = vadd.f32 %v1281, %v1304
        %1306 = vdwg.mxu0
        %1307 = vmatpush.xpose.msra.mxu0 0.0
        %1308 = vmatpush.xpose.msra.mxu0 0.0
        %1309 = vmatpush.xpose.msra.mxu0 0.0
        %1310 = vmatpush.xpose.msra.mxu0 0.0
        %1311 = vmatpush.xpose.msra.mxu0 0.0
        %1312 = vmatpush.xpose.msra.mxu0 0.0
        %1313 = vmatpush.xpose.msra.mxu0 0.0
        %1314 = vmatpush.xpose.msra.mxu0 0.0
        %1315 = vmatpush.xpose.msra.mxu0 0.0
        %1316 = vmatpush.xpose.msra.mxu0 0.0
        %1317 = vmatpush.xpose.msra.mxu0 0.0
        %1318 = vmatpush.xpose.msra.mxu0 0.0
        %1319 = vmatpush.xpose.msra.mxu0 0.0
        %1320 = vmatpush.xpose.msra.mxu0 0.0
        %1321 = vmatpush.xpose.msra.mxu0 0.0
        %v1322 = vand.u32 %v1229, 4294901760
        %1323 = vmatpush.xpose.msra.mxu0 %v1322
        %v1324 = vand.u32 %v1226, 4294901760
        %v1325 = vsub.f32 %v1226, %v1324
        %v1326 = vand.u32 %v1325, 4294901760
        %1327 = vmatmul.f32.gmra.mxu0 %v1326
        %v1328 = vpop.f32.mrf.mxu0
        %v1329 = vadd.f32 %v1305, %v1328
        %1330 = vdwg.mxu0
        %1331 = vmatpush.xpose.msra.mxu0 0.0
        %1332 = vmatpush.xpose.msra.mxu0 0.0
        %1333 = vmatpush.xpose.msra.mxu0 0.0
        %1334 = vmatpush.xpose.msra.mxu0 0.0
        %1335 = vmatpush.xpose.msra.mxu0 0.0
        %1336 = vmatpush.xpose.msra.mxu0 0.0
        %1337 = vmatpush.xpose.msra.mxu0 0.0
        %1338 = vmatpush.xpose.msra.mxu0 0.0
        %1339 = vmatpush.xpose.msra.mxu0 0.0
        %1340 = vmatpush.xpose.msra.mxu0 0.0
        %1341 = vmatpush.xpose.msra.mxu0 0.0
        %1342 = vmatpush.xpose.msra.mxu0 0.0
        %1343 = vmatpush.xpose.msra.mxu0 0.0
        %1344 = vmatpush.xpose.msra.mxu0 0.0
        %1345 = vmatpush.xpose.msra.mxu0 0.0
        %v1346 = vand.u32 %v1229, 4294901760
        %v1347 = vsub.f32 %v1229, %v1346
        %v1348 = vand.u32 %v1347, 4294901760
        %1349 = vmatpush.xpose.msra.mxu0 %v1348
        %v1350 = vand.u32 %v1226, 4294901760
        %1351 = vmatmul.f32.gmra.mxu0 %v1350
        %v1352 = vpop.f32.mrf.mxu0
        %v1353 = vadd.f32 %v1329, %v1352
        %1354 = vdwg.mxu0
        %1355 = vmatpush.xpose.msra.mxu0 0.0
        %1356 = vmatpush.xpose.msra.mxu0 0.0
        %1357 = vmatpush.xpose.msra.mxu0 0.0
        %1358 = vmatpush.xpose.msra.mxu0 0.0
        %1359 = vmatpush.xpose.msra.mxu0 0.0
        %1360 = vmatpush.xpose.msra.mxu0 0.0
        %1361 = vmatpush.xpose.msra.mxu0 0.0
        %1362 = vmatpush.xpose.msra.mxu0 0.0
        %1363 = vmatpush.xpose.msra.mxu0 0.0
        %1364 = vmatpush.xpose.msra.mxu0 0.0
        %1365 = vmatpush.xpose.msra.mxu0 0.0
        %1366 = vmatpush.xpose.msra.mxu0 0.0
        %1367 = vmatpush.xpose.msra.mxu0 0.0
        %1368 = vmatpush.xpose.msra.mxu0 0.0
        %1369 = vmatpush.xpose.msra.mxu0 0.0
        %v1370 = vand.u32 %v1229, 4294901760
        %1371 = vmatpush.xpose.msra.mxu0 %v1370
        %v1372 = vand.u32 %v1226, 4294901760
        %1373 = vmatmul.f32.gmra.mxu0 %v1372
        %v1374 = vpop.f32.mrf.mxu0
        %v1375 = vadd.f32 %v1353, %v1374
        %1376 = vdwg.mxu0
        %v1377 = vmax.f32 %v1375, -1.0
        %v1378 = vmin.f32 %v1377, 1.0
        %v1379 = vand.u32 2147483647, %v1378
        %v1380 = vmul.f32 %v1378, %v1378
        %v1381 = vmul.f32 %v1380, -0.008656363
        %v1382 = vadd.f32 %v1381, -0.042743422
        %v1383 = vmul.f32 %v1380, %v1382
        %v1384 = vadd.f32 %v1383, 0.16666587
        %v1385 = vmul.f32 %v1380, %v1384
        %v1386 = vmul.f32 %v1380, -0.70662963
        %v1387 = vadd.f32 %v1386, 1.0
        %v1388 = vrcp.pop %v1387
        %v1389 = vmul.f32 %v1387, %v1388
        %v1390 = vsub.f32 1.0, %v1389
        %v1391 = vmul.f32 %v1388, %v1390
        %v1392 = vadd.f32 %v1388, %v1391
        %vm1393 = vweird.f32 %v1387
        %vm1394 = vweird.f32 %v1388
        %vm1395 = vmor %vm1393, %vm1394
        %v1396 = vsel %vm1395, %v1388, %v1392
        %v1397 = vand.u32 2147483647, %v1387
        %vm1398 = vcmp.eq.f32.partialorder %v1397, 8.507059e+37
        %v1399 = vand.u32 %v1387, 2147483648
        %v1400 = vor.u32 1.1754944e-38, %v1399
        %v1401 = vsel %vm1398, %v1400, %v1396
        %v1402 = vmul.f32 %v1385, %v1401
        %v1403 = vmul.f32 %v1378, %v1402
        %v1404 = vsub.f32 7.5497894e-08, %v1403
        %v1405 = vsub.f32 %v1378, %v1404
        %v1406 = vsub.f32 1.5707963, %v1405
        %v1407 = vsub.f32 1.0, %v1379
        %v1408 = vmul.f32 %v1407, 0.5
        %v1409 = vrsqrt.pop %v1408
        %v1410 = vmul.f32 %v1409, %v1408
        %v1411 = vmul.f32 %v1410, %v1409
        %v1412 = vmul.f32 0.5, %v1411
        %v1413 = vsub.f32 1.5, %v1412
        %v1414 = vmul.f32 %v1409, %v1413
        %v1415 = vmul.f32 %v1408, %v1414
        %vm1416 = vcmp.eq.f32.partialorder %v1408, inf
        %v1417 = vsel %vm1416, %v1408, %v1415
        %vm1418 = vcmp.eq.f32.partialorder %v1408, 0.0
        %v1419 = vand.u32 %v1408, 2147483648
        %v1420 = vsel %vm1418, %v1419, %v1417
        %v1421 = vmul.f32 %v1408, -0.008656363
        %v1422 = vadd.f32 %v1421, -0.042743422
        %v1423 = vmul.f32 %v1408, %v1422
        %v1424 = vadd.f32 %v1423, 0.16666587
        %v1425 = vmul.f32 %v1408, %v1424
        %v1426 = vmul.f32 %v1408, -0.70662963
        %v1427 = vadd.f32 %v1426, 1.0
        %v1428 = vrcp.pop %v1427
        %v1429 = vmul.f32 %v1427, %v1428
        %v1430 = vsub.f32 1.0, %v1429
        %v1431 = vmul.f32 %v1428, %v1430
        %v1432 = vadd.f32 %v1428, %v1431
        %vm1433 = vweird.f32 %v1427
        %vm1434 = vweird.f32 %v1428
        %vm1435 = vmor %vm1433, %vm1434
        %v1436 = vsel %vm1435, %v1428, %v1432
        %v1437 = vand.u32 2147483647, %v1427
        %vm1438 = vcmp.eq.f32.partialorder %v1437, 8.507059e+37
        %v1439 = vand.u32 %v1427, 2147483648
        %v1440 = vor.u32 1.1754944e-38, %v1439
        %v1441 = vsel %vm1438, %v1440, %v1436
        %v1442 = vmul.f32 %v1425, %v1441
        %v1443 = vmul.f32 %v1442, %v1420
        %v1444 = vadd.f32 %v1420, %v1443
        %v1445 = vmul.f32 %v1444, 2.0
        %v1446 = vsub.f32 %v1443, 7.5497894e-08
        %v1447 = vadd.f32 %v1420, %v1446
        %v1448 = vmul.f32 %v1447, 2.0
        %v1449 = vsub.f32 3.1415927, %v1448
        %vm1450 = vcmp.lt.f32.partialorder %v1378, 0.0
        %v1451 = vsel %vm1450, %v1449, %v1445
        %vm1452 = vcmp.lt.f32.partialorder %v1379, 0.5
        %v1453 = vsel %vm1452, %v1406, %v1451
        %v1454 = vmul.f32 %v1453, 0.31830987
        %v1455 = vsub.f32 1.0, %v1454
        %v1456 = vmul.f32 %v1455, %v1455
        %v1457 = vmul.f32 %v1456, %v1456
        %v1458 = vmul.f32 %v1457, %v1457
        %v1459 = vmul.f32 %v1455, %v1458
        %v1461 = vperm.slane %v535, 0
        %v1463 = vmul.f32 %v1459, %v1461
        %vm1464 = vcmask 64512
        %v1466 = vsel %vm1464, %v1463, 0
        %1468 = vmatpush.msra.mxu0 0.0
        %1469 = vmatpush.msra.mxu0 0.0
        %1470 = vmatpush.msra.mxu0 0.0
        %1471 = vmatpush.msra.mxu0 0.0
        %1472 = vmatpush.msra.mxu0 0.0
        %1473 = vmatpush.msra.mxu0 0.0
        %1474 = vmatpush.msra.mxu0 0.0
        %1475 = vmatpush.msra.mxu0 0.0
        %1476 = vmatpush.msra.mxu0 0.0
        %1477 = vmatpush.msra.mxu0 0.0
        %1478 = vmatpush.msra.mxu0 0.0
        %1479 = vmatpush.msra.mxu0 0.0
        %1480 = vmatpush.msra.mxu0 0.0
        %1481 = vmatpush.msra.mxu0 0.0
        %1482 = vmatpush.msra.mxu0 0.0
        %v1483 = vand.u32 %v1154, 4294901760
        %1484 = vmatpush.msra.mxu0 %v1483
        %v1485 = vand.u32 %v1466, 4294901760
        %v1486 = vsub.f32 %v1466, %v1485
        %v1487 = vand.u32 %v1486, 4294901760
        %v1488 = vsub.f32 %v1486, %v1487
        %v1489 = vand.u32 %v1488, 4294901760
        %1490 = vmatmul.f32.gmra.mxu0 %v1489
        %v1491 = vpop.f32.mrf.mxu0
        %v1492 = vadd.f32 0.0, %v1491
        %1493 = vdwg.mxu0
        %1494 = vmatpush.msra.mxu0 0.0
        %1495 = vmatpush.msra.mxu0 0.0
        %1496 = vmatpush.msra.mxu0 0.0
        %1497 = vmatpush.msra.mxu0 0.0
        %1498 = vmatpush.msra.mxu0 0.0
        %1499 = vmatpush.msra.mxu0 0.0
        %1500 = vmatpush.msra.mxu0 0.0
        %1501 = vmatpush.msra.mxu0 0.0
        %1502 = vmatpush.msra.mxu0 0.0
        %1503 = vmatpush.msra.mxu0 0.0
        %1504 = vmatpush.msra.mxu0 0.0
        %1505 = vmatpush.msra.mxu0 0.0
        %1506 = vmatpush.msra.mxu0 0.0
        %1507 = vmatpush.msra.mxu0 0.0
        %1508 = vmatpush.msra.mxu0 0.0
        %v1509 = vand.u32 %v1154, 4294901760
        %v1510 = vsub.f32 %v1154, %v1509
        %v1511 = vand.u32 %v1510, 4294901760
        %v1512 = vsub.f32 %v1510, %v1511
        %v1513 = vand.u32 %v1512, 4294901760
        %1514 = vmatpush.msra.mxu0 %v1513
        %v1515 = vand.u32 %v1466, 4294901760
        %1516 = vmatmul.f32.gmra.mxu0 %v1515
        %v1517 = vpop.f32.mrf.mxu0
        %v1518 = vadd.f32 %v1492, %v1517
        %1519 = vdwg.mxu0
        %1520 = vmatpush.msra.mxu0 0.0
        %1521 = vmatpush.msra.mxu0 0.0
        %1522 = vmatpush.msra.mxu0 0.0
        %1523 = vmatpush.msra.mxu0 0.0
        %1524 = vmatpush.msra.mxu0 0.0
        %1525 = vmatpush.msra.mxu0 0.0
        %1526 = vmatpush.msra.mxu0 0.0
        %1527 = vmatpush.msra.mxu0 0.0
        %1528 = vmatpush.msra.mxu0 0.0
        %1529 = vmatpush.msra.mxu0 0.0
        %1530 = vmatpush.msra.mxu0 0.0
        %1531 = vmatpush.msra.mxu0 0.0
        %1532 = vmatpush.msra.mxu0 0.0
        %1533 = vmatpush.msra.mxu0 0.0
        %1534 = vmatpush.msra.mxu0 0.0
        %v1535 = vand.u32 %v1154, 4294901760
        %v1536 = vsub.f32 %v1154, %v1535
        %1537 = vmatpush.msra.mxu0 %v1536
        %v1538 = vand.u32 %v1466, 4294901760
        %v1539 = vsub.f32 %v1466, %v1538
        %1540 = vmatmul.f32.gmra.mxu0 %v1539
        %v1541 = vpop.f32.mrf.mxu0
        %v1542 = vadd.f32 %v1518, %v1541
        %1543 = vdwg.mxu0
        %1544 = vmatpush.msra.mxu0 0.0
        %1545 = vmatpush.msra.mxu0 0.0
        %1546 = vmatpush.msra.mxu0 0.0
        %1547 = vmatpush.msra.mxu0 0.0
        %1548 = vmatpush.msra.mxu0 0.0
        %1549 = vmatpush.msra.mxu0 0.0
        %1550 = vmatpush.msra.mxu0 0.0
        %1551 = vmatpush.msra.mxu0 0.0
        %1552 = vmatpush.msra.mxu0 0.0
        %1553 = vmatpush.msra.mxu0 0.0
        %1554 = vmatpush.msra.mxu0 0.0
        %1555 = vmatpush.msra.mxu0 0.0
        %1556 = vmatpush.msra.mxu0 0.0
        %1557 = vmatpush.msra.mxu0 0.0
        %1558 = vmatpush.msra.mxu0 0.0
        %v1559 = vand.u32 %v1154, 4294901760
        %1560 = vmatpush.msra.mxu0 %v1559
        %v1561 = vand.u32 %v1466, 4294901760
        %v1562 = vsub.f32 %v1466, %v1561
        %v1563 = vand.u32 %v1562, 4294901760
        %1564 = vmatmul.f32.gmra.mxu0 %v1563
        %v1565 = vpop.f32.mrf.mxu0
        %v1566 = vadd.f32 %v1542, %v1565
        %1567 = vdwg.mxu0
        %1568 = vmatpush.msra.mxu0 0.0
        %1569 = vmatpush.msra.mxu0 0.0
        %1570 = vmatpush.msra.mxu0 0.0
        %1571 = vmatpush.msra.mxu0 0.0
        %1572 = vmatpush.msra.mxu0 0.0
        %1573 = vmatpush.msra.mxu0 0.0
        %1574 = vmatpush.msra.mxu0 0.0
        %1575 = vmatpush.msra.mxu0 0.0
        %1576 = vmatpush.msra.mxu0 0.0
        %1577 = vmatpush.msra.mxu0 0.0
        %1578 = vmatpush.msra.mxu0 0.0
        %1579 = vmatpush.msra.mxu0 0.0
        %1580 = vmatpush.msra.mxu0 0.0
        %1581 = vmatpush.msra.mxu0 0.0
        %1582 = vmatpush.msra.mxu0 0.0
        %v1583 = vand.u32 %v1154, 4294901760
        %v1584 = vsub.f32 %v1154, %v1583
        %v1585 = vand.u32 %v1584, 4294901760
        %1586 = vmatpush.msra.mxu0 %v1585
        %v1587 = vand.u32 %v1466, 4294901760
        %1588 = vmatmul.f32.gmra.mxu0 %v1587
        %v1589 = vpop.f32.mrf.mxu0
        %v1590 = vadd.f32 %v1566, %v1589
        %1591 = vdwg.mxu0
        %1592 = vmatpush.msra.mxu0 0.0
        %1593 = vmatpush.msra.mxu0 0.0
        %1594 = vmatpush.msra.mxu0 0.0
        %1595 = vmatpush.msra.mxu0 0.0
        %1596 = vmatpush.msra.mxu0 0.0
        %1597 = vmatpush.msra.mxu0 0.0
        %1598 = vmatpush.msra.mxu0 0.0
        %1599 = vmatpush.msra.mxu0 0.0
        %1600 = vmatpush.msra.mxu0 0.0
        %1601 = vmatpush.msra.mxu0 0.0
        %1602 = vmatpush.msra.mxu0 0.0
        %1603 = vmatpush.msra.mxu0 0.0
        %1604 = vmatpush.msra.mxu0 0.0
        %1605 = vmatpush.msra.mxu0 0.0
        %1606 = vmatpush.msra.mxu0 0.0
        %v1607 = vand.u32 %v1154, 4294901760
        %1608 = vmatpush.msra.mxu0 %v1607
        %v1609 = vand.u32 %v1466, 4294901760
        %1610 = vmatmul.f32.gmra.mxu0 %v1609
        %v1611 = vpop.f32.mrf.mxu0
        %v1612 = vadd.f32 %v1590, %v1611
        %1613 = vdwg.mxu0
        %1615 = vset.pattern.permute.xlu0 0
        %1616 = vperm.xlu0 %1615, %v536
        %v1617 = vpop.permute.xlu0 %1616
        %v1619 = vmul.f32 %v1612, %v1617
        %v1620 = vmul.f32 %v1619, %v1619
        %v1621 = vsel %vm1161, %v1620, 0.0
        %1622 = vadd.xlane.f32.xlu0 %v1621
        %v1623 = vpop.xlane.xlu0 %1622
        %v1624 = vrsqrt.pop %v1623
        %v1625 = vmul.f32 %v1624, %v1623
        %v1626 = vmul.f32 %v1625, %v1624
        %v1627 = vmul.f32 0.5, %v1626
        %v1628 = vsub.f32 1.5, %v1627
        %v1629 = vmul.f32 %v1624, %v1628
        %v1630 = vmul.f32 %v1623, %v1629
        %vm1631 = vcmp.eq.f32.partialorder %v1623, inf
        %v1632 = vsel %vm1631, %v1623, %v1630
        %vm1633 = vcmp.eq.f32.partialorder %v1623, 0.0
        %v1634 = vand.u32 %v1623, 2147483648
        %v1635 = vsel %vm1633, %v1634, %v1632
        %v1636 = vmax.f32 %v1635, 1e-12
        %v1637 = vrcp.pop %v1636
        %v1638 = vmul.f32 %v1636, %v1637
        %v1639 = vsub.f32 1.0, %v1638
        %v1640 = vmul.f32 %v1637, %v1639
        %v1641 = vadd.f32 %v1637, %v1640
        %vm1642 = vweird.f32 %v1636
        %vm1643 = vweird.f32 %v1637
        %vm1644 = vmor %vm1642, %vm1643
        %v1645 = vsel %vm1644, %v1637, %v1641
        %v1646 = vand.u32 2147483647, %v1636
        %vm1647 = vcmp.eq.f32.partialorder %v1646, 8.507059e+37
        %v1648 = vand.u32 %v1636, 2147483648
        %v1649 = vor.u32 1.1754944e-38, %v1648
        %v1650 = vsel %vm1647, %v1649, %v1645
        %v1651 = vmul.f32 %v1619, %v1650
        %1653 = vrot.lane.b32.xlu0 %v1160, 112
        %v1654 = vpop.permute.xlu0 %1653
        %v1656 = vsel %vm1161, %v1654, 0.0
        %1657 = vadd.xlane.f32.xlu0 %v1656
        %v1658 = vpop.xlane.xlu0 %1657
        %v1659 = vrsqrt.pop %v1658
        %v1660 = vmul.f32 %v1659, %v1658
        %v1661 = vmul.f32 %v1660, %v1659
        %v1662 = vmul.f32 0.5, %v1661
        %v1663 = vsub.f32 1.5, %v1662
        %v1664 = vmul.f32 %v1659, %v1663
        %v1665 = vmul.f32 %v1658, %v1664
        %vm1666 = vcmp.eq.f32.partialorder %v1658, inf
        %v1667 = vsel %vm1666, %v1658, %v1665
        %vm1668 = vcmp.eq.f32.partialorder %v1658, 0.0
        %v1669 = vand.u32 %v1658, 2147483648
        %v1670 = vsel %vm1668, %v1669, %v1667
        %v1671 = vmax.f32 %v1670, 1e-12
        %v1672 = vrcp.pop %v1671
        %v1673 = vmul.f32 %v1671, %v1672
        %v1674 = vsub.f32 1.0, %v1673
        %v1675 = vmul.f32 %v1672, %v1674
        %v1676 = vadd.f32 %v1672, %v1675
        %vm1677 = vweird.f32 %v1671
        %vm1678 = vweird.f32 %v1672
        %vm1679 = vmor %vm1677, %vm1678
        %v1680 = vsel %vm1679, %v1672, %v1676
        %v1681 = vand.u32 2147483647, %v1671
        %vm1682 = vcmp.eq.f32.partialorder %v1681, 8.507059e+37
        %v1683 = vand.u32 %v1671, 2147483648
        %v1684 = vor.u32 1.1754944e-38, %v1683
        %v1685 = vsel %vm1682, %v1684, %v1680
        %v1686 = vmul.f32 %v744, %v1685
        %1688 = vrot.lane.b32.xlu0 %v1193, 112
        %v1689 = vpop.permute.xlu0 %1688
        %v1691 = vsel %vm1161, %v1689, 0.0
        %1692 = vadd.xlane.f32.xlu0 %v1691
        %v1693 = vpop.xlane.xlu0 %1692
        %v1694 = vrsqrt.pop %v1693
        %v1695 = vmul.f32 %v1694, %v1693
        %v1696 = vmul.f32 %v1695, %v1694
        %v1697 = vmul.f32 0.5, %v1696
        %v1698 = vsub.f32 1.5, %v1697
        %v1699 = vmul.f32 %v1694, %v1698
        %v1700 = vmul.f32 %v1693, %v1699
        %vm1701 = vcmp.eq.f32.partialorder %v1693, inf
        %v1702 = vsel %vm1701, %v1693, %v1700
        %vm1703 = vcmp.eq.f32.partialorder %v1693, 0.0
        %v1704 = vand.u32 %v1693, 2147483648
        %v1705 = vsel %vm1703, %v1704, %v1702
        %v1706 = vmax.f32 %v1705, 1e-12
        %v1707 = vrcp.pop %v1706
        %v1708 = vmul.f32 %v1706, %v1707
        %v1709 = vsub.f32 1.0, %v1708
        %v1710 = vmul.f32 %v1707, %v1709
        %v1711 = vadd.f32 %v1707, %v1710
        %vm1712 = vweird.f32 %v1706
        %vm1713 = vweird.f32 %v1707
        %vm1714 = vmor %vm1712, %vm1713
        %v1715 = vsel %vm1714, %v1707, %v1711
        %v1716 = vand.u32 2147483647, %v1706
        %vm1717 = vcmp.eq.f32.partialorder %v1716, 8.507059e+37
        %v1718 = vand.u32 %v1706, 2147483648
        %v1719 = vor.u32 1.1754944e-38, %v1718
        %v1720 = vsel %vm1717, %v1719, %v1715
        %v1721 = vmul.f32 %v949, %v1720
        %1723 = vrot.lane.b32.xlu0 %v1686, 112
        %v1724 = vpop.permute.xlu0 %1723
        %1726 = vrot.lane.b32.xlu0 %v1721, 112
        %v1727 = vpop.permute.xlu0 %1726
        %v1728 = vsel %vm1161, %v1724, 0
        %v1730 = vsel %vm1161, %v1727, 0
        %1732 = vmatpush.xpose.msra.mxu0 0.0
        %1733 = vmatpush.xpose.msra.mxu0 0.0
        %1734 = vmatpush.xpose.msra.mxu0 0.0
        %1735 = vmatpush.xpose.msra.mxu0 0.0
        %1736 = vmatpush.xpose.msra.mxu0 0.0
        %1737 = vmatpush.xpose.msra.mxu0 0.0
        %1738 = vmatpush.xpose.msra.mxu0 0.0
        %1739 = vmatpush.xpose.msra.mxu0 0.0
        %1740 = vmatpush.xpose.msra.mxu0 0.0
        %1741 = vmatpush.xpose.msra.mxu0 0.0
        %1742 = vmatpush.xpose.msra.mxu0 0.0
        %1743 = vmatpush.xpose.msra.mxu0 0.0
        %1744 = vmatpush.xpose.msra.mxu0 0.0
        %1745 = vmatpush.xpose.msra.mxu0 0.0
        %1746 = vmatpush.xpose.msra.mxu0 0.0
        %v1747 = vand.u32 %v1730, 4294901760
        %1748 = vmatpush.xpose.msra.mxu0 %v1747
        %v1749 = vand.u32 %v1728, 4294901760
        %v1750 = vsub.f32 %v1728, %v1749
        %v1751 = vand.u32 %v1750, 4294901760
        %v1752 = vsub.f32 %v1750, %v1751
        %v1753 = vand.u32 %v1752, 4294901760
        %1754 = vmatmul.f32.gmra.mxu0 %v1753
        %v1755 = vpop.f32.mrf.mxu0
        %v1756 = vadd.f32 0.0, %v1755
        %1757 = vdwg.mxu0
        %1758 = vmatpush.xpose.msra.mxu0 0.0
        %1759 = vmatpush.xpose.msra.mxu0 0.0
        %1760 = vmatpush.xpose.msra.mxu0 0.0
        %1761 = vmatpush.xpose.msra.mxu0 0.0
        %1762 = vmatpush.xpose.msra.mxu0 0.0
        %1763 = vmatpush.xpose.msra.mxu0 0.0
        %1764 = vmatpush.xpose.msra.mxu0 0.0
        %1765 = vmatpush.xpose.msra.mxu0 0.0
        %1766 = vmatpush.xpose.msra.mxu0 0.0
        %1767 = vmatpush.xpose.msra.mxu0 0.0
        %1768 = vmatpush.xpose.msra.mxu0 0.0
        %1769 = vmatpush.xpose.msra.mxu0 0.0
        %1770 = vmatpush.xpose.msra.mxu0 0.0
        %1771 = vmatpush.xpose.msra.mxu0 0.0
        %1772 = vmatpush.xpose.msra.mxu0 0.0
        %v1773 = vand.u32 %v1730, 4294901760
        %v1774 = vsub.f32 %v1730, %v1773
        %v1775 = vand.u32 %v1774, 4294901760
        %v1776 = vsub.f32 %v1774, %v1775
        %v1777 = vand.u32 %v1776, 4294901760
        %1778 = vmatpush.xpose.msra.mxu0 %v1777
        %v1779 = vand.u32 %v1728, 4294901760
        %1780 = vmatmul.f32.gmra.mxu0 %v1779
        %v1781 = vpop.f32.mrf.mxu0
        %v1782 = vadd.f32 %v1756, %v1781
        %1783 = vdwg.mxu0
        %1784 = vmatpush.xpose.msra.mxu0 0.0
        %1785 = vmatpush.xpose.msra.mxu0 0.0
        %1786 = vmatpush.xpose.msra.mxu0 0.0
        %1787 = vmatpush.xpose.msra.mxu0 0.0
        %1788 = vmatpush.xpose.msra.mxu0 0.0
        %1789 = vmatpush.xpose.msra.mxu0 0.0
        %1790 = vmatpush.xpose.msra.mxu0 0.0
        %1791 = vmatpush.xpose.msra.mxu0 0.0
        %1792 = vmatpush.xpose.msra.mxu0 0.0
        %1793 = vmatpush.xpose.msra.mxu0 0.0
        %1794 = vmatpush.xpose.msra.mxu0 0.0
        %1795 = vmatpush.xpose.msra.mxu0 0.0
        %1796 = vmatpush.xpose.msra.mxu0 0.0
        %1797 = vmatpush.xpose.msra.mxu0 0.0
        %1798 = vmatpush.xpose.msra.mxu0 0.0
        %v1799 = vand.u32 %v1730, 4294901760
        %v1800 = vsub.f32 %v1730, %v1799
        %1801 = vmatpush.xpose.msra.mxu0 %v1800
        %v1802 = vand.u32 %v1728, 4294901760
        %v1803 = vsub.f32 %v1728, %v1802
        %1804 = vmatmul.f32.gmra.mxu0 %v1803
        %v1805 = vpop.f32.mrf.mxu0
        %v1806 = vadd.f32 %v1782, %v1805
        %1807 = vdwg.mxu0
        %1808 = vmatpush.xpose.msra.mxu0 0.0
        %1809 = vmatpush.xpose.msra.mxu0 0.0
        %1810 = vmatpush.xpose.msra.mxu0 0.0
        %1811 = vmatpush.xpose.msra.mxu0 0.0
        %1812 = vmatpush.xpose.msra.mxu0 0.0
        %1813 = vmatpush.xpose.msra.mxu0 0.0
        %1814 = vmatpush.xpose.msra.mxu0 0.0
        %1815 = vmatpush.xpose.msra.mxu0 0.0
        %1816 = vmatpush.xpose.msra.mxu0 0.0
        %1817 = vmatpush.xpose.msra.mxu0 0.0
        %1818 = vmatpush.xpose.msra.mxu0 0.0
        %1819 = vmatpush.xpose.msra.mxu0 0.0
        %1820 = vmatpush.xpose.msra.mxu0 0.0
        %1821 = vmatpush.xpose.msra.mxu0 0.0
        %1822 = vmatpush.xpose.msra.mxu0 0.0
        %v1823 = vand.u32 %v1730, 4294901760
        %1824 = vmatpush.xpose.msra.mxu0 %v1823
        %v1825 = vand.u32 %v1728, 4294901760
        %v1826 = vsub.f32 %v1728, %v1825
        %v1827 = vand.u32 %v1826, 4294901760
        %1828 = vmatmul.f32.gmra.mxu0 %v1827
        %v1829 = vpop.f32.mrf.mxu0
        %v1830 = vadd.f32 %v1806, %v1829
        %1831 = vdwg.mxu0
        %1832 = vmatpush.xpose.msra.mxu0 0.0
        %1833 = vmatpush.xpose.msra.mxu0 0.0
        %1834 = vmatpush.xpose.msra.mxu0 0.0
        %1835 = vmatpush.xpose.msra.mxu0 0.0
        %1836 = vmatpush.xpose.msra.mxu0 0.0
        %1837 = vmatpush.xpose.msra.mxu0 0.0
        %1838 = vmatpush.xpose.msra.mxu0 0.0
        %1839 = vmatpush.xpose.msra.mxu0 0.0
        %1840 = vmatpush.xpose.msra.mxu0 0.0
        %1841 = vmatpush.xpose.msra.mxu0 0.0
        %1842 = vmatpush.xpose.msra.mxu0 0.0
        %1843 = vmatpush.xpose.msra.mxu0 0.0
        %1844 = vmatpush.xpose.msra.mxu0 0.0
        %1845 = vmatpush.xpose.msra.mxu0 0.0
        %1846 = vmatpush.xpose.msra.mxu0 0.0
        %v1847 = vand.u32 %v1730, 4294901760
        %v1848 = vsub.f32 %v1730, %v1847
        %v1849 = vand.u32 %v1848, 4294901760
        %1850 = vmatpush.xpose.msra.mxu0 %v1849
        %v1851 = vand.u32 %v1728, 4294901760
        %1852 = vmatmul.f32.gmra.mxu0 %v1851
        %v1853 = vpop.f32.mrf.mxu0
        %v1854 = vadd.f32 %v1830, %v1853
        %1855 = vdwg.mxu0
        %1856 = vmatpush.xpose.msra.mxu0 0.0
        %1857 = vmatpush.xpose.msra.mxu0 0.0
        %1858 = vmatpush.xpose.msra.mxu0 0.0
        %1859 = vmatpush.xpose.msra.mxu0 0.0
        %1860 = vmatpush.xpose.msra.mxu0 0.0
        %1861 = vmatpush.xpose.msra.mxu0 0.0
        %1862 = vmatpush.xpose.msra.mxu0 0.0
        %1863 = vmatpush.xpose.msra.mxu0 0.0
        %1864 = vmatpush.xpose.msra.mxu0 0.0
        %1865 = vmatpush.xpose.msra.mxu0 0.0
        %1866 = vmatpush.xpose.msra.mxu0 0.0
        %1867 = vmatpush.xpose.msra.mxu0 0.0
        %1868 = vmatpush.xpose.msra.mxu0 0.0
        %1869 = vmatpush.xpose.msra.mxu0 0.0
        %1870 = vmatpush.xpose.msra.mxu0 0.0
        %v1871 = vand.u32 %v1730, 4294901760
        %1872 = vmatpush.xpose.msra.mxu0 %v1871
        %v1873 = vand.u32 %v1728, 4294901760
        %1874 = vmatmul.f32.gmra.mxu0 %v1873
        %v1875 = vpop.f32.mrf.mxu0
        %v1876 = vadd.f32 %v1854, %v1875
        %1877 = vdwg.mxu0
        %v1878 = vmax.f32 %v1876, -1.0
        %v1879 = vmin.f32 %v1878, 1.0
        %v1880 = vand.u32 2147483647, %v1879
        %v1881 = vmul.f32 %v1879, %v1879
        %v1882 = vmul.f32 %v1881, -0.008656363
        %v1883 = vadd.f32 %v1882, -0.042743422
        %v1884 = vmul.f32 %v1881, %v1883
        %v1885 = vadd.f32 %v1884, 0.16666587
        %v1886 = vmul.f32 %v1881, %v1885
        %v1887 = vmul.f32 %v1881, -0.70662963
        %v1888 = vadd.f32 %v1887, 1.0
        %v1889 = vrcp.pop %v1888
        %v1890 = vmul.f32 %v1888, %v1889
        %v1891 = vsub.f32 1.0, %v1890
        %v1892 = vmul.f32 %v1889, %v1891
        %v1893 = vadd.f32 %v1889, %v1892
        %vm1894 = vweird.f32 %v1888
        %vm1895 = vweird.f32 %v1889
        %vm1896 = vmor %vm1894, %vm1895
        %v1897 = vsel %vm1896, %v1889, %v1893
        %v1898 = vand.u32 2147483647, %v1888
        %vm1899 = vcmp.eq.f32.partialorder %v1898, 8.507059e+37
        %v1900 = vand.u32 %v1888, 2147483648
        %v1901 = vor.u32 1.1754944e-38, %v1900
        %v1902 = vsel %vm1899, %v1901, %v1897
        %v1903 = vmul.f32 %v1886, %v1902
        %v1904 = vmul.f32 %v1879, %v1903
        %v1905 = vsub.f32 7.5497894e-08, %v1904
        %v1906 = vsub.f32 %v1879, %v1905
        %v1907 = vsub.f32 1.5707963, %v1906
        %v1908 = vsub.f32 1.0, %v1880
        %v1909 = vmul.f32 %v1908, 0.5
        %v1910 = vrsqrt.pop %v1909
        %v1911 = vmul.f32 %v1910, %v1909
        %v1912 = vmul.f32 %v1911, %v1910
        %v1913 = vmul.f32 0.5, %v1912
        %v1914 = vsub.f32 1.5, %v1913
        %v1915 = vmul.f32 %v1910, %v1914
        %v1916 = vmul.f32 %v1909, %v1915
        %vm1917 = vcmp.eq.f32.partialorder %v1909, inf
        %v1918 = vsel %vm1917, %v1909, %v1916
        %vm1919 = vcmp.eq.f32.partialorder %v1909, 0.0
        %v1920 = vand.u32 %v1909, 2147483648
        %v1921 = vsel %vm1919, %v1920, %v1918
        %v1922 = vmul.f32 %v1909, -0.008656363
        %v1923 = vadd.f32 %v1922, -0.042743422
        %v1924 = vmul.f32 %v1909, %v1923
        %v1925 = vadd.f32 %v1924, 0.16666587
        %v1926 = vmul.f32 %v1909, %v1925
        %v1927 = vmul.f32 %v1909, -0.70662963
        %v1928 = vadd.f32 %v1927, 1.0
        %v1929 = vrcp.pop %v1928
        %v1930 = vmul.f32 %v1928, %v1929
        %v1931 = vsub.f32 1.0, %v1930
        %v1932 = vmul.f32 %v1929, %v1931
        %v1933 = vadd.f32 %v1929, %v1932
        %vm1934 = vweird.f32 %v1928
        %vm1935 = vweird.f32 %v1929
        %vm1936 = vmor %vm1934, %vm1935
        %v1937 = vsel %vm1936, %v1929, %v1933
        %v1938 = vand.u32 2147483647, %v1928
        %vm1939 = vcmp.eq.f32.partialorder %v1938, 8.507059e+37
        %v1940 = vand.u32 %v1928, 2147483648
        %v1941 = vor.u32 1.1754944e-38, %v1940
        %v1942 = vsel %vm1939, %v1941, %v1937
        %v1943 = vmul.f32 %v1926, %v1942
        %v1944 = vmul.f32 %v1943, %v1921
        %v1945 = vadd.f32 %v1921, %v1944
        %v1946 = vmul.f32 %v1945, 2.0
        %v1947 = vsub.f32 %v1944, 7.5497894e-08
        %v1948 = vadd.f32 %v1921, %v1947
        %v1949 = vmul.f32 %v1948, 2.0
        %v1950 = vsub.f32 3.1415927, %v1949
        %vm1951 = vcmp.lt.f32.partialorder %v1879, 0.0
        %v1952 = vsel %vm1951, %v1950, %v1946
        %vm1953 = vcmp.lt.f32.partialorder %v1880, 0.5
        %v1954 = vsel %vm1953, %v1907, %v1952
        %v1955 = vmul.f32 %v1954, 0.31830987
        %v1956 = vsub.f32 1.0, %v1955
        %v1957 = vmul.f32 %v1956, %v1956
        %v1958 = vmul.f32 %v1957, %v1957
        %v1959 = vmul.f32 %v1958, %v1958
        %v1960 = vmul.f32 %v1956, %v1959
        %v1961 = vmul.f32 %v1960, %v1461
        %1963 = vrot.lane.b32.xlu0 %v1154, 112
        %v1964 = vpop.permute.xlu0 %1963
        %v1967 = vsel %vm1464, %v1961, 0
        %1969 = vmatpush.msra.mxu0 0.0
        %1970 = vmatpush.msra.mxu0 0.0
        %1971 = vmatpush.msra.mxu0 0.0
        %1972 = vmatpush.msra.mxu0 0.0
        %1973 = vmatpush.msra.mxu0 0.0
        %1974 = vmatpush.msra.mxu0 0.0
        %1975 = vmatpush.msra.mxu0 0.0
        %1976 = vmatpush.msra.mxu0 0.0
        %1977 = vmatpush.msra.mxu0 0.0
        %1978 = vmatpush.msra.mxu0 0.0
        %1979 = vmatpush.msra.mxu0 0.0
        %1980 = vmatpush.msra.mxu0 0.0
        %1981 = vmatpush.msra.mxu0 0.0
        %1982 = vmatpush.msra.mxu0 0.0
        %1983 = vmatpush.msra.mxu0 0.0
        %v1984 = vand.u32 %v1964, 4294901760
        %1985 = vmatpush.msra.mxu0 %v1984
        %v1986 = vand.u32 %v1967, 4294901760
        %v1987 = vsub.f32 %v1967, %v1986
        %v1988 = vand.u32 %v1987, 4294901760
        %v1989 = vsub.f32 %v1987, %v1988
        %v1990 = vand.u32 %v1989, 4294901760
        %1991 = vmatmul.f32.gmra.mxu0 %v1990
        %v1992 = vpop.f32.mrf.mxu0
        %v1993 = vadd.f32 0.0, %v1992
        %1994 = vdwg.mxu0
        %1995 = vmatpush.msra.mxu0 0.0
        %1996 = vmatpush.msra.mxu0 0.0
        %1997 = vmatpush.msra.mxu0 0.0
        %1998 = vmatpush.msra.mxu0 0.0
        %1999 = vmatpush.msra.mxu0 0.0
        %2000 = vmatpush.msra.mxu0 0.0
        %2001 = vmatpush.msra.mxu0 0.0
        %2002 = vmatpush.msra.mxu0 0.0
        %2003 = vmatpush.msra.mxu0 0.0
        %2004 = vmatpush.msra.mxu0 0.0
        %2005 = vmatpush.msra.mxu0 0.0
        %2006 = vmatpush.msra.mxu0 0.0
        %2007 = vmatpush.msra.mxu0 0.0
        %2008 = vmatpush.msra.mxu0 0.0
        %2009 = vmatpush.msra.mxu0 0.0
        %v2010 = vand.u32 %v1964, 4294901760
        %v2011 = vsub.f32 %v1964, %v2010
        %v2012 = vand.u32 %v2011, 4294901760
        %v2013 = vsub.f32 %v2011, %v2012
        %v2014 = vand.u32 %v2013, 4294901760
        %2015 = vmatpush.msra.mxu0 %v2014
        %v2016 = vand.u32 %v1967, 4294901760
        %2017 = vmatmul.f32.gmra.mxu0 %v2016
        %v2018 = vpop.f32.mrf.mxu0
        %v2019 = vadd.f32 %v1993, %v2018
        %2020 = vdwg.mxu0
        %2021 = vmatpush.msra.mxu0 0.0
        %2022 = vmatpush.msra.mxu0 0.0
        %2023 = vmatpush.msra.mxu0 0.0
        %2024 = vmatpush.msra.mxu0 0.0
        %2025 = vmatpush.msra.mxu0 0.0
        %2026 = vmatpush.msra.mxu0 0.0
        %2027 = vmatpush.msra.mxu0 0.0
        %2028 = vmatpush.msra.mxu0 0.0
        %2029 = vmatpush.msra.mxu0 0.0
        %2030 = vmatpush.msra.mxu0 0.0
        %2031 = vmatpush.msra.mxu0 0.0
        %2032 = vmatpush.msra.mxu0 0.0
        %2033 = vmatpush.msra.mxu0 0.0
        %2034 = vmatpush.msra.mxu0 0.0
        %2035 = vmatpush.msra.mxu0 0.0
        %v2036 = vand.u32 %v1964, 4294901760
        %v2037 = vsub.f32 %v1964, %v2036
        %2038 = vmatpush.msra.mxu0 %v2037
        %v2039 = vand.u32 %v1967, 4294901760
        %v2040 = vsub.f32 %v1967, %v2039
        %2041 = vmatmul.f32.gmra.mxu0 %v2040
        %v2042 = vpop.f32.mrf.mxu0
        %v2043 = vadd.f32 %v2019, %v2042
        %2044 = vdwg.mxu0
        %2045 = vmatpush.msra.mxu0 0.0
        %2046 = vmatpush.msra.mxu0 0.0
        %2047 = vmatpush.msra.mxu0 0.0
        %2048 = vmatpush.msra.mxu0 0.0
        %2049 = vmatpush.msra.mxu0 0.0
        %2050 = vmatpush.msra.mxu0 0.0
        %2051 = vmatpush.msra.mxu0 0.0
        %2052 = vmatpush.msra.mxu0 0.0
        %2053 = vmatpush.msra.mxu0 0.0
        %2054 = vmatpush.msra.mxu0 0.0
        %2055 = vmatpush.msra.mxu0 0.0
        %2056 = vmatpush.msra.mxu0 0.0
        %2057 = vmatpush.msra.mxu0 0.0
        %2058 = vmatpush.msra.mxu0 0.0
        %2059 = vmatpush.msra.mxu0 0.0
        %v2060 = vand.u32 %v1964, 4294901760
        %2061 = vmatpush.msra.mxu0 %v2060
        %v2062 = vand.u32 %v1967, 4294901760
        %v2063 = vsub.f32 %v1967, %v2062
        %v2064 = vand.u32 %v2063, 4294901760
        %2065 = vmatmul.f32.gmra.mxu0 %v2064
        %v2066 = vpop.f32.mrf.mxu0
        %v2067 = vadd.f32 %v2043, %v2066
        %2068 = vdwg.mxu0
        %2069 = vmatpush.msra.mxu0 0.0
        %2070 = vmatpush.msra.mxu0 0.0
        %2071 = vmatpush.msra.mxu0 0.0
        %2072 = vmatpush.msra.mxu0 0.0
        %2073 = vmatpush.msra.mxu0 0.0
        %2074 = vmatpush.msra.mxu0 0.0
        %2075 = vmatpush.msra.mxu0 0.0
        %2076 = vmatpush.msra.mxu0 0.0
        %2077 = vmatpush.msra.mxu0 0.0
        %2078 = vmatpush.msra.mxu0 0.0
        %2079 = vmatpush.msra.mxu0 0.0
        %2080 = vmatpush.msra.mxu0 0.0
        %2081 = vmatpush.msra.mxu0 0.0
        %2082 = vmatpush.msra.mxu0 0.0
        %2083 = vmatpush.msra.mxu0 0.0
        %v2084 = vand.u32 %v1964, 4294901760
        %v2085 = vsub.f32 %v1964, %v2084
        %v2086 = vand.u32 %v2085, 4294901760
        %2087 = vmatpush.msra.mxu0 %v2086
        %v2088 = vand.u32 %v1967, 4294901760
        %2089 = vmatmul.f32.gmra.mxu0 %v2088
        %v2090 = vpop.f32.mrf.mxu0
        %v2091 = vadd.f32 %v2067, %v2090
        %2092 = vdwg.mxu0
        %2093 = vmatpush.msra.mxu0 0.0
        %2094 = vmatpush.msra.mxu0 0.0
        %2095 = vmatpush.msra.mxu0 0.0
        %2096 = vmatpush.msra.mxu0 0.0
        %2097 = vmatpush.msra.mxu0 0.0
        %2098 = vmatpush.msra.mxu0 0.0
        %2099 = vmatpush.msra.mxu0 0.0
        %2100 = vmatpush.msra.mxu0 0.0
        %2101 = vmatpush.msra.mxu0 0.0
        %2102 = vmatpush.msra.mxu0 0.0
        %2103 = vmatpush.msra.mxu0 0.0
        %2104 = vmatpush.msra.mxu0 0.0
        %2105 = vmatpush.msra.mxu0 0.0
        %2106 = vmatpush.msra.mxu0 0.0
        %2107 = vmatpush.msra.mxu0 0.0
        %v2108 = vand.u32 %v1964, 4294901760
        %2109 = vmatpush.msra.mxu0 %v2108
        %v2110 = vand.u32 %v1967, 4294901760
        %2111 = vmatmul.f32.gmra.mxu0 %v2110
        %v2112 = vpop.f32.mrf.mxu0
        %v2113 = vadd.f32 %v2091, %v2112
        %2114 = vdwg.mxu0
        %v2115 = vmul.f32 %v2113, %v1617
        %v2116 = vmul.f32 %v2115, %v2115
        %v2117 = vsel %vm1161, %v2116, 0.0
        %2118 = vadd.xlane.f32.xlu0 %v2117
        %v2119 = vpop.xlane.xlu0 %2118
        %v2120 = vrsqrt.pop %v2119
        %v2121 = vmul.f32 %v2120, %v2119
        %v2122 = vmul.f32 %v2121, %v2120
        %v2123 = vmul.f32 0.5, %v2122
        %v2124 = vsub.f32 1.5, %v2123
        %v2125 = vmul.f32 %v2120, %v2124
        %v2126 = vmul.f32 %v2119, %v2125
        %vm2127 = vcmp.eq.f32.partialorder %v2119, inf
        %v2128 = vsel %vm2127, %v2119, %v2126
        %vm2129 = vcmp.eq.f32.partialorder %v2119, 0.0
        %v2130 = vand.u32 %v2119, 2147483648
        %v2131 = vsel %vm2129, %v2130, %v2128
        %v2132 = vmax.f32 %v2131, 1e-12
        %v2133 = vrcp.pop %v2132
        %v2134 = vmul.f32 %v2132, %v2133
        %v2135 = vsub.f32 1.0, %v2134
        %v2136 = vmul.f32 %v2133, %v2135
        %v2137 = vadd.f32 %v2133, %v2136
        %vm2138 = vweird.f32 %v2132
        %vm2139 = vweird.f32 %v2133
        %vm2140 = vmor %vm2138, %vm2139
        %v2141 = vsel %vm2140, %v2133, %v2137
        %v2142 = vand.u32 2147483647, %v2132
        %vm2143 = vcmp.eq.f32.partialorder %v2142, 8.507059e+37
        %v2144 = vand.u32 %v2132, 2147483648
        %v2145 = vor.u32 1.1754944e-38, %v2144
        %v2146 = vsel %vm2143, %v2145, %v2141
        %v2147 = vmul.f32 %v2115, %v2146
        %2152 = vrot.lane.b32.xlu0 %v1156, 112
        %v2153 = vpop.permute.xlu0 %2152
        %2154 = vrot.lane.b32.xlu0 %v1157, 112
        %v2155 = vpop.permute.xlu0 %2154
        %2156 = vrot.lane.b32.xlu0 %v1158, 112
        %v2157 = vpop.permute.xlu0 %2156
        %2158 = vrot.lane.b32.xlu0 %v1159, 112
        %v2159 = vpop.permute.xlu0 %2158
        %v2161 = vsel %vm1161, %v2147, 0
        %v2163 = vsel %vm1161, %v2153, 0
        %v2165 = vsel %vm1161, %v2155, 0
        %v2167 = vsel %vm1161, %v2157, 0
        %v2169 = vsel %vm1161, %v2159, 0
        %2171 = vmatpush.xpose.msra.mxu0 0.0
        %2172 = vmatpush.xpose.msra.mxu0 0.0
        %2173 = vmatpush.xpose.msra.mxu0 0.0
        %2174 = vmatpush.xpose.msra.mxu0 0.0
        %2175 = vmatpush.xpose.msra.mxu0 0.0
        %2176 = vmatpush.xpose.msra.mxu0 0.0
        %2177 = vmatpush.xpose.msra.mxu0 0.0
        %2178 = vmatpush.xpose.msra.mxu0 0.0
        %2179 = vmatpush.xpose.msra.mxu0 0.0
        %2180 = vmatpush.xpose.msra.mxu0 0.0
        %2181 = vmatpush.xpose.msra.mxu0 0.0
        %2182 = vmatpush.xpose.msra.mxu0 0.0
        %v2183 = vand.u32 %v2169, 4294901760
        %2184 = vmatpush.xpose.msra.mxu0 %v2183
        %v2185 = vand.u32 %v2167, 4294901760
        %2186 = vmatpush.xpose.msra.mxu0 %v2185
        %v2187 = vand.u32 %v2165, 4294901760
        %2188 = vmatpush.xpose.msra.mxu0 %v2187
        %v2189 = vand.u32 %v2163, 4294901760
        %2190 = vmatpush.xpose.msra.mxu0 %v2189
        %v2191 = vand.u32 %v2161, 4294901760
        %v2192 = vsub.f32 %v2161, %v2191
        %v2193 = vand.u32 %v2192, 4294901760
        %v2194 = vsub.f32 %v2192, %v2193
        %v2195 = vand.u32 %v2194, 4294901760
        %2196 = vmatmul.f32.gmra.mxu0 %v2195
        %v2197 = vpop.f32.mrf.mxu0
        %v2198 = vadd.f32 0.0, %v2197
        %2199 = vdwg.mxu0
        %2200 = vmatpush.xpose.msra.mxu0 0.0
        %2201 = vmatpush.xpose.msra.mxu0 0.0
        %2202 = vmatpush.xpose.msra.mxu0 0.0
        %2203 = vmatpush.xpose.msra.mxu0 0.0
        %2204 = vmatpush.xpose.msra.mxu0 0.0
        %2205 = vmatpush.xpose.msra.mxu0 0.0
        %2206 = vmatpush.xpose.msra.mxu0 0.0
        %2207 = vmatpush.xpose.msra.mxu0 0.0
        %2208 = vmatpush.xpose.msra.mxu0 0.0
        %2209 = vmatpush.xpose.msra.mxu0 0.0
        %2210 = vmatpush.xpose.msra.mxu0 0.0
        %2211 = vmatpush.xpose.msra.mxu0 0.0
        %v2212 = vand.u32 %v2169, 4294901760
        %v2213 = vsub.f32 %v2169, %v2212
        %v2214 = vand.u32 %v2213, 4294901760
        %v2215 = vsub.f32 %v2213, %v2214
        %v2216 = vand.u32 %v2215, 4294901760
        %2217 = vmatpush.xpose.msra.mxu0 %v2216
        %v2218 = vand.u32 %v2167, 4294901760
        %v2219 = vsub.f32 %v2167, %v2218
        %v2220 = vand.u32 %v2219, 4294901760
        %v2221 = vsub.f32 %v2219, %v2220
        %v2222 = vand.u32 %v2221, 4294901760
        %2223 = vmatpush.xpose.msra.mxu0 %v2222
        %v2224 = vand.u32 %v2165, 4294901760
        %v2225 = vsub.f32 %v2165, %v2224
        %v2226 = vand.u32 %v2225, 4294901760
        %v2227 = vsub.f32 %v2225, %v2226
        %v2228 = vand.u32 %v2227, 4294901760
        %2229 = vmatpush.xpose.msra.mxu0 %v2228
        %v2230 = vand.u32 %v2163, 4294901760
        %v2231 = vsub.f32 %v2163, %v2230
        %v2232 = vand.u32 %v2231, 4294901760
        %v2233 = vsub.f32 %v2231, %v2232
        %v2234 = vand.u32 %v2233, 4294901760
        %2235 = vmatpush.xpose.msra.mxu0 %v2234
        %v2236 = vand.u32 %v2161, 4294901760
        %2237 = vmatmul.f32.gmra.mxu0 %v2236
        %v2238 = vpop.f32.mrf.mxu0
        %v2239 = vadd.f32 %v2198, %v2238
        %2240 = vdwg.mxu0
        %2241 = vmatpush.xpose.msra.mxu0 0.0
        %2242 = vmatpush.xpose.msra.mxu0 0.0
        %2243 = vmatpush.xpose.msra.mxu0 0.0
        %2244 = vmatpush.xpose.msra.mxu0 0.0
        %2245 = vmatpush.xpose.msra.mxu0 0.0
        %2246 = vmatpush.xpose.msra.mxu0 0.0
        %2247 = vmatpush.xpose.msra.mxu0 0.0
        %2248 = vmatpush.xpose.msra.mxu0 0.0
        %2249 = vmatpush.xpose.msra.mxu0 0.0
        %2250 = vmatpush.xpose.msra.mxu0 0.0
        %2251 = vmatpush.xpose.msra.mxu0 0.0
        %2252 = vmatpush.xpose.msra.mxu0 0.0
        %v2253 = vand.u32 %v2169, 4294901760
        %v2254 = vsub.f32 %v2169, %v2253
        %2255 = vmatpush.xpose.msra.mxu0 %v2254
        %v2256 = vand.u32 %v2167, 4294901760
        %v2257 = vsub.f32 %v2167, %v2256
        %2258 = vmatpush.xpose.msra.mxu0 %v2257
        %v2259 = vand.u32 %v2165, 4294901760
        %v2260 = vsub.f32 %v2165, %v2259
        %2261 = vmatpush.xpose.msra.mxu0 %v2260
        %v2262 = vand.u32 %v2163, 4294901760
        %v2263 = vsub.f32 %v2163, %v2262
        %2264 = vmatpush.xpose.msra.mxu0 %v2263
        %v2265 = vand.u32 %v2161, 4294901760
        %v2266 = vsub.f32 %v2161, %v2265
        %2267 = vmatmul.f32.gmra.mxu0 %v2266
        %v2268 = vpop.f32.mrf.mxu0
        %v2269 = vadd.f32 %v2239, %v2268
        %2270 = vdwg.mxu0
        %2271 = vmatpush.xpose.msra.mxu0 0.0
        %2272 = vmatpush.xpose.msra.mxu0 0.0
        %2273 = vmatpush.xpose.msra.mxu0 0.0
        %2274 = vmatpush.xpose.msra.mxu0 0.0
        %2275 = vmatpush.xpose.msra.mxu0 0.0
        %2276 = vmatpush.xpose.msra.mxu0 0.0
        %2277 = vmatpush.xpose.msra.mxu0 0.0
        %2278 = vmatpush.xpose.msra.mxu0 0.0
        %2279 = vmatpush.xpose.msra.mxu0 0.0
        %2280 = vmatpush.xpose.msra.mxu0 0.0
        %2281 = vmatpush.xpose.msra.mxu0 0.0
        %2282 = vmatpush.xpose.msra.mxu0 0.0
        %v2283 = vand.u32 %v2169, 4294901760
        %2284 = vmatpush.xpose.msra.mxu0 %v2283
        %v2285 = vand.u32 %v2167, 4294901760
        %2286 = vmatpush.xpose.msra.mxu0 %v2285
        %v2287 = vand.u32 %v2165, 4294901760
        %2288 = vmatpush.xpose.msra.mxu0 %v2287
        %v2289 = vand.u32 %v2163, 4294901760
        %2290 = vmatpush.xpose.msra.mxu0 %v2289
        %v2291 = vand.u32 %v2161, 4294901760
        %v2292 = vsub.f32 %v2161, %v2291
        %v2293 = vand.u32 %v2292, 4294901760
        %2294 = vmatmul.f32.gmra.mxu0 %v2293
        %v2295 = vpop.f32.mrf.mxu0
        %v2296 = vadd.f32 %v2269, %v2295
        %2297 = vdwg.mxu0
        %2298 = vmatpush.xpose.msra.mxu0 0.0
        %2299 = vmatpush.xpose.msra.mxu0 0.0
        %2300 = vmatpush.xpose.msra.mxu0 0.0
        %2301 = vmatpush.xpose.msra.mxu0 0.0
        %2302 = vmatpush.xpose.msra.mxu0 0.0
        %2303 = vmatpush.xpose.msra.mxu0 0.0
        %2304 = vmatpush.xpose.msra.mxu0 0.0
        %2305 = vmatpush.xpose.msra.mxu0 0.0
        %2306 = vmatpush.xpose.msra.mxu0 0.0
        %2307 = vmatpush.xpose.msra.mxu0 0.0
        %2308 = vmatpush.xpose.msra.mxu0 0.0
        %2309 = vmatpush.xpose.msra.mxu0 0.0
        %v2310 = vand.u32 %v2169, 4294901760
        %v2311 = vsub.f32 %v2169, %v2310
        %v2312 = vand.u32 %v2311, 4294901760
        %2313 = vmatpush.xpose.msra.mxu0 %v2312
        %v2314 = vand.u32 %v2167, 4294901760
        %v2315 = vsub.f32 %v2167, %v2314
        %v2316 = vand.u32 %v2315, 4294901760
        %2317 = vmatpush.xpose.msra.mxu0 %v2316
        %v2318 = vand.u32 %v2165, 4294901760
        %v2319 = vsub.f32 %v2165, %v2318
        %v2320 = vand.u32 %v2319, 4294901760
        %2321 = vmatpush.xpose.msra.mxu0 %v2320
        %v2322 = vand.u32 %v2163, 4294901760
        %v2323 = vsub.f32 %v2163, %v2322
        %v2324 = vand.u32 %v2323, 4294901760
        %2325 = vmatpush.xpose.msra.mxu0 %v2324
        %v2326 = vand.u32 %v2161, 4294901760
        %2327 = vmatmul.f32.gmra.mxu0 %v2326
        %v2328 = vpop.f32.mrf.mxu0
        %v2329 = vadd.f32 %v2296, %v2328
        %2330 = vdwg.mxu0
        %2331 = vmatpush.xpose.msra.mxu0 0.0
        %2332 = vmatpush.xpose.msra.mxu0 0.0
        %2333 = vmatpush.xpose.msra.mxu0 0.0
        %2334 = vmatpush.xpose.msra.mxu0 0.0
        %2335 = vmatpush.xpose.msra.mxu0 0.0
        %2336 = vmatpush.xpose.msra.mxu0 0.0
        %2337 = vmatpush.xpose.msra.mxu0 0.0
        %2338 = vmatpush.xpose.msra.mxu0 0.0
        %2339 = vmatpush.xpose.msra.mxu0 0.0
        %2340 = vmatpush.xpose.msra.mxu0 0.0
        %2341 = vmatpush.xpose.msra.mxu0 0.0
        %2342 = vmatpush.xpose.msra.mxu0 0.0
        %v2343 = vand.u32 %v2169, 4294901760
        %2344 = vmatpush.xpose.msra.mxu0 %v2343
        %v2345 = vand.u32 %v2167, 4294901760
        %2346 = vmatpush.xpose.msra.mxu0 %v2345
        %v2347 = vand.u32 %v2165, 4294901760
        %2348 = vmatpush.xpose.msra.mxu0 %v2347
        %v2349 = vand.u32 %v2163, 4294901760
        %2350 = vmatpush.xpose.msra.mxu0 %v2349
        %v2351 = vand.u32 %v2161, 4294901760
        %2352 = vmatmul.f32.gmra.mxu0 %v2351
        %v2353 = vpop.f32.mrf.mxu0
        %v2354 = vadd.f32 %v2329, %v2353
        %2355 = vdwg.mxu0
        %v2357 = vsel %vm1161, %v1651, 0
        %v2359 = vsel %vm1161, %v1156, 0
        %v2361 = vsel %vm1161, %v1157, 0
        %v2363 = vsel %vm1161, %v1158, 0
        %v2365 = vsel %vm1161, %v1159, 0
        %2367 = vmatpush.xpose.msra.mxu0 0.0
        %2368 = vmatpush.xpose.msra.mxu0 0.0
        %2369 = vmatpush.xpose.msra.mxu0 0.0
        %2370 = vmatpush.xpose.msra.mxu0 0.0
        %2371 = vmatpush.xpose.msra.mxu0 0.0
        %2372 = vmatpush.xpose.msra.mxu0 0.0
        %2373 = vmatpush.xpose.msra.mxu0 0.0
        %2374 = vmatpush.xpose.msra.mxu0 0.0
        %2375 = vmatpush.xpose.msra.mxu0 0.0
        %2376 = vmatpush.xpose.msra.mxu0 0.0
        %2377 = vmatpush.xpose.msra.mxu0 0.0
        %2378 = vmatpush.xpose.msra.mxu0 0.0
        %v2379 = vand.u32 %v2365, 4294901760
        %2380 = vmatpush.xpose.msra.mxu0 %v2379
        %v2381 = vand.u32 %v2363, 4294901760
        %2382 = vmatpush.xpose.msra.mxu0 %v2381
        %v2383 = vand.u32 %v2361, 4294901760
        %2384 = vmatpush.xpose.msra.mxu0 %v2383
        %v2385 = vand.u32 %v2359, 4294901760
        %2386 = vmatpush.xpose.msra.mxu0 %v2385
        %v2387 = vand.u32 %v2357, 4294901760
        %v2388 = vsub.f32 %v2357, %v2387
        %v2389 = vand.u32 %v2388, 4294901760
        %v2390 = vsub.f32 %v2388, %v2389
        %v2391 = vand.u32 %v2390, 4294901760
        %2392 = vmatmul.f32.gmra.mxu0 %v2391
        %v2393 = vpop.f32.mrf.mxu0
        %v2394 = vadd.f32 %v2354, %v2393
        %2395 = vdwg.mxu0
        %2396 = vmatpush.xpose.msra.mxu0 0.0
        %2397 = vmatpush.xpose.msra.mxu0 0.0
        %2398 = vmatpush.xpose.msra.mxu0 0.0
        %2399 = vmatpush.xpose.msra.mxu0 0.0
        %2400 = vmatpush.xpose.msra.mxu0 0.0
        %2401 = vmatpush.xpose.msra.mxu0 0.0
        %2402 = vmatpush.xpose.msra.mxu0 0.0
        %2403 = vmatpush.xpose.msra.mxu0 0.0
        %2404 = vmatpush.xpose.msra.mxu0 0.0
        %2405 = vmatpush.xpose.msra.mxu0 0.0
        %2406 = vmatpush.xpose.msra.mxu0 0.0
        %2407 = vmatpush.xpose.msra.mxu0 0.0
        %v2408 = vand.u32 %v2365, 4294901760
        %v2409 = vsub.f32 %v2365, %v2408
        %v2410 = vand.u32 %v2409, 4294901760
        %v2411 = vsub.f32 %v2409, %v2410
        %v2412 = vand.u32 %v2411, 4294901760
        %2413 = vmatpush.xpose.msra.mxu0 %v2412
        %v2414 = vand.u32 %v2363, 4294901760
        %v2415 = vsub.f32 %v2363, %v2414
        %v2416 = vand.u32 %v2415, 4294901760
        %v2417 = vsub.f32 %v2415, %v2416
        %v2418 = vand.u32 %v2417, 4294901760
        %2419 = vmatpush.xpose.msra.mxu0 %v2418
        %v2420 = vand.u32 %v2361, 4294901760
        %v2421 = vsub.f32 %v2361, %v2420
        %v2422 = vand.u32 %v2421, 4294901760
        %v2423 = vsub.f32 %v2421, %v2422
        %v2424 = vand.u32 %v2423, 4294901760
        %2425 = vmatpush.xpose.msra.mxu0 %v2424
        %v2426 = vand.u32 %v2359, 4294901760
        %v2427 = vsub.f32 %v2359, %v2426
        %v2428 = vand.u32 %v2427, 4294901760
        %v2429 = vsub.f32 %v2427, %v2428
        %v2430 = vand.u32 %v2429, 4294901760
        %2431 = vmatpush.xpose.msra.mxu0 %v2430
        %v2432 = vand.u32 %v2357, 4294901760
        %2433 = vmatmul.f32.gmra.mxu0 %v2432
        %v2434 = vpop.f32.mrf.mxu0
        %v2435 = vadd.f32 %v2394, %v2434
        %2436 = vdwg.mxu0
        %2437 = vmatpush.xpose.msra.mxu0 0.0
        %2438 = vmatpush.xpose.msra.mxu0 0.0
        %2439 = vmatpush.xpose.msra.mxu0 0.0
        %2440 = vmatpush.xpose.msra.mxu0 0.0
        %2441 = vmatpush.xpose.msra.mxu0 0.0
        %2442 = vmatpush.xpose.msra.mxu0 0.0
        %2443 = vmatpush.xpose.msra.mxu0 0.0
        %2444 = vmatpush.xpose.msra.mxu0 0.0
        %2445 = vmatpush.xpose.msra.mxu0 0.0
        %2446 = vmatpush.xpose.msra.mxu0 0.0
        %2447 = vmatpush.xpose.msra.mxu0 0.0
        %2448 = vmatpush.xpose.msra.mxu0 0.0
        %v2449 = vand.u32 %v2365, 4294901760
        %v2450 = vsub.f32 %v2365, %v2449
        %2451 = vmatpush.xpose.msra.mxu0 %v2450
        %v2452 = vand.u32 %v2363, 4294901760
        %v2453 = vsub.f32 %v2363, %v2452
        %2454 = vmatpush.xpose.msra.mxu0 %v2453
        %v2455 = vand.u32 %v2361, 4294901760
        %v2456 = vsub.f32 %v2361, %v2455
        %2457 = vmatpush.xpose.msra.mxu0 %v2456
        %v2458 = vand.u32 %v2359, 4294901760
        %v2459 = vsub.f32 %v2359, %v2458
        %2460 = vmatpush.xpose.msra.mxu0 %v2459
        %v2461 = vand.u32 %v2357, 4294901760
        %v2462 = vsub.f32 %v2357, %v2461
        %2463 = vmatmul.f32.gmra.mxu0 %v2462
        %v2464 = vpop.f32.mrf.mxu0
        %v2465 = vadd.f32 %v2435, %v2464
        %2466 = vdwg.mxu0
        %2467 = vmatpush.xpose.msra.mxu0 0.0
        %2468 = vmatpush.xpose.msra.mxu0 0.0
        %2469 = vmatpush.xpose.msra.mxu0 0.0
        %2470 = vmatpush.xpose.msra.mxu0 0.0
        %2471 = vmatpush.xpose.msra.mxu0 0.0
        %2472 = vmatpush.xpose.msra.mxu0 0.0
        %2473 = vmatpush.xpose.msra.mxu0 0.0
        %2474 = vmatpush.xpose.msra.mxu0 0.0
        %2475 = vmatpush.xpose.msra.mxu0 0.0
        %2476 = vmatpush.xpose.msra.mxu0 0.0
        %2477 = vmatpush.xpose.msra.mxu0 0.0
        %2478 = vmatpush.xpose.msra.mxu0 0.0
        %v2479 = vand.u32 %v2365, 4294901760
        %2480 = vmatpush.xpose.msra.mxu0 %v2479
        %v2481 = vand.u32 %v2363, 4294901760
        %2482 = vmatpush.xpose.msra.mxu0 %v2481
        %v2483 = vand.u32 %v2361, 4294901760
        %2484 = vmatpush.xpose.msra.mxu0 %v2483
        %v2485 = vand.u32 %v2359, 4294901760
        %2486 = vmatpush.xpose.msra.mxu0 %v2485
        %v2487 = vand.u32 %v2357, 4294901760
        %v2488 = vsub.f32 %v2357, %v2487
        %v2489 = vand.u32 %v2488, 4294901760
        %2490 = vmatmul.f32.gmra.mxu0 %v2489
        %v2491 = vpop.f32.mrf.mxu0
        %v2492 = vadd.f32 %v2465, %v2491
        %2493 = vdwg.mxu0
        %2494 = vmatpush.xpose.msra.mxu0 0.0
        %2495 = vmatpush.xpose.msra.mxu0 0.0
        %2496 = vmatpush.xpose.msra.mxu0 0.0
        %2497 = vmatpush.xpose.msra.mxu0 0.0
        %2498 = vmatpush.xpose.msra.mxu0 0.0
        %2499 = vmatpush.xpose.msra.mxu0 0.0
        %2500 = vmatpush.xpose.msra.mxu0 0.0
        %2501 = vmatpush.xpose.msra.mxu0 0.0
        %2502 = vmatpush.xpose.msra.mxu0 0.0
        %2503 = vmatpush.xpose.msra.mxu0 0.0
        %2504 = vmatpush.xpose.msra.mxu0 0.0
        %2505 = vmatpush.xpose.msra.mxu0 0.0
        %v2506 = vand.u32 %v2365, 4294901760
        %v2507 = vsub.f32 %v2365, %v2506
        %v2508 = vand.u32 %v2507, 4294901760
        %2509 = vmatpush.xpose.msra.mxu0 %v2508
        %v2510 = vand.u32 %v2363, 4294901760
        %v2511 = vsub.f32 %v2363, %v2510
        %v2512 = vand.u32 %v2511, 4294901760
        %2513 = vmatpush.xpose.msra.mxu0 %v2512
        %v2514 = vand.u32 %v2361, 4294901760
        %v2515 = vsub.f32 %v2361, %v2514
        %v2516 = vand.u32 %v2515, 4294901760
        %2517 = vmatpush.xpose.msra.mxu0 %v2516
        %v2518 = vand.u32 %v2359, 4294901760
        %v2519 = vsub.f32 %v2359, %v2518
        %v2520 = vand.u32 %v2519, 4294901760
        %2521 = vmatpush.xpose.msra.mxu0 %v2520
        %v2522 = vand.u32 %v2357, 4294901760
        %2523 = vmatmul.f32.gmra.mxu0 %v2522
        %v2524 = vpop.f32.mrf.mxu0
        %v2525 = vadd.f32 %v2492, %v2524
        %2526 = vdwg.mxu0
        %2527 = vmatpush.xpose.msra.mxu0 0.0
        %2528 = vmatpush.xpose.msra.mxu0 0.0
        %2529 = vmatpush.xpose.msra.mxu0 0.0
        %2530 = vmatpush.xpose.msra.mxu0 0.0
        %2531 = vmatpush.xpose.msra.mxu0 0.0
        %2532 = vmatpush.xpose.msra.mxu0 0.0
        %2533 = vmatpush.xpose.msra.mxu0 0.0
        %2534 = vmatpush.xpose.msra.mxu0 0.0
        %2535 = vmatpush.xpose.msra.mxu0 0.0
        %2536 = vmatpush.xpose.msra.mxu0 0.0
        %2537 = vmatpush.xpose.msra.mxu0 0.0
        %2538 = vmatpush.xpose.msra.mxu0 0.0
        %v2539 = vand.u32 %v2365, 4294901760
        %2540 = vmatpush.xpose.msra.mxu0 %v2539
        %v2541 = vand.u32 %v2363, 4294901760
        %2542 = vmatpush.xpose.msra.mxu0 %v2541
        %v2543 = vand.u32 %v2361, 4294901760
        %2544 = vmatpush.xpose.msra.mxu0 %v2543
        %v2545 = vand.u32 %v2359, 4294901760
        %2546 = vmatpush.xpose.msra.mxu0 %v2545
        %v2547 = vand.u32 %v2357, 4294901760
        %2548 = vmatmul.f32.gmra.mxu0 %v2547
        %v2549 = vpop.f32.mrf.mxu0
        %v2550 = vadd.f32 %v2525, %v2549
        %2551 = vdwg.mxu0
        %v2552 = vld [vmem:[%s10] sm:$0x1]
        %v2554 = vperm.slane %v2552, 0
        %v2556 = vadd.f32 %v2550, %v2554
        %v2557 = vadd.f32 %v2556, %v534
        %v2558 = vsel %vm545, %v2557, 0.0
        %2559 = vadd.xlane.f32.xlu0 %v2558
        %v2560 = vpop.xlane.xlu0 %2559
        %v2561 = vrcp.pop 32.0
        %v2562 = vmul.f32 32.0, %v2561
        %v2563 = vsub.f32 1.0, %v2562
        %v2564 = vmul.f32 %v2561, %v2563
        %v2565 = vadd.f32 %v2561, %v2564
        %vm2566 = vweird.f32 %v2561
        %v2567 = vsel %vm2566, %v2561, %v2565
        %v2568 = vmul.f32 %v2560, %v2567
        %v2569 = vsub.f32 %v2557, %v2568
        %v2570 = vmul.f32 %v2569, %v2569
        %v2571 = vsel %vm545, %v2570, 0.0
        %2572 = vadd.xlane.f32.xlu0 %v2571
        %v2573 = vpop.xlane.xlu0 %2572
        %v2574 = vmul.f32 %v2573, %v2567
        %v2575 = vadd.f32 %v2574, 1e-12
        %v2576 = vrsqrt.pop %v2575
        %v2577 = vmul.f32 %v2576, %v2575
        %v2578 = vmul.f32 %v2577, %v2576
        %v2579 = vmul.f32 0.5, %v2578
        %v2580 = vsub.f32 1.5, %v2579
        %v2581 = vmul.f32 %v2576, %v2580
        %v2582 = vmul.f32 %v2575, %v2581
        %vm2583 = vcmp.eq.f32.partialorder %v2575, inf
        %v2584 = vsel %vm2583, %v2575, %v2582
        %vm2585 = vcmp.eq.f32.partialorder %v2575, 0.0
        %v2586 = vand.u32 %v2575, 2147483648
        %v2587 = vsel %vm2585, %v2586, %v2584
        %v2588 = vrcp.pop %v2587
        %v2589 = vmul.f32 %v2587, %v2588
        %v2590 = vsub.f32 1.0, %v2589
        %v2591 = vmul.f32 %v2588, %v2590
        %v2592 = vadd.f32 %v2588, %v2591
        %vm2593 = vweird.f32 %v2587
        %vm2594 = vweird.f32 %v2588
        %vm2595 = vmor %vm2593, %vm2594
        %v2596 = vsel %vm2595, %v2588, %v2592
        %v2597 = vand.u32 2147483647, %v2587
        %vm2598 = vcmp.eq.f32.partialorder %v2597, 8.507059e+37
        %v2599 = vand.u32 %v2587, 2147483648
        %v2600 = vor.u32 1.1754944e-38, %v2599
        %v2601 = vsel %vm2598, %v2600, %v2596
        %v2602 = vmul.f32 %v2569, %v2601
        %v2603 = vld [vmem:[%s11] sm:$0x1]
        %v2605 = vperm.slane %v2603, 0
        %v2607 = vmul.f32 %v2602, %v2605
        %v2608 = vld [vmem:[%s12] sm:$0x1]
        %v2610 = vperm.slane %v2608, 0
        %v2612 = vadd.f32 %v2607, %v2610
        %2613 = vst.msk [vmem:[%s522] sm:$0xff] %vm545, %v2612
        %s2614 = sand.u32 %s326, 1
        %s2615 = scalar_lea.sflag [#allocation4], %s2614
        %s2616 = sand.u32 %s326, 1
        %s2617 = smul.addr %s2616, 8
        %s2618 = scalar_lea.vmem [#allocation10], %s2617
        // Predicated region
        $region89: #{tpu_custom_call.1} parent=71 // pred_check
          %p2619 = pneg %p336
        $region90: #{tpu_custom_call.1} parent=71 // pred_check_branch
          %2621 = sbr.rel (%p2619) target = $region92
        $region91: #{tpu_custom_call.1} parent=71 // pred_region
          %2623 = vsyncadd %s2615, 0
          %s2624 = smul.addr %s30, 8
          %s2625 = scalar_lea.hbm %s13, %s2624
          %s2627 = sshll.u32 %s2618, 4
          %s2628 = int_to_ptr.vmem [resolvable:$true] %s2627
          %s2629 = sshll.u32 %s2625, 4
          %s2630 = int_to_ptr.hbm [resolvable:$true] %s2629
          %2632 = dma.vmem_to_hbm [thread:$0]  %s2628, 128, %s2630, %s2615
        $region92: #{tpu_custom_call.1} parent=71 // pred_fallthru
          _
      $region72: #{tpu_custom_call.1} parent=5 // pred_fallthru
        _
      %p2633 = scmp.le.s32.totalorder 2, %s25
      // Predicated region
      $region93: #{tpu_custom_call.1} parent=5 // pred_check
        %p2634 = pneg %p2633
      $region94: #{tpu_custom_call.1} parent=5 // pred_check_branch
        %2636 = sbr.rel (%p2634) target = $region96
      $region95: #{tpu_custom_call.1} parent=5 // pred_region
        %s2637 = ssub.s32 %s25, 2
        // Predicated region
        $region97: #{tpu_custom_call.1} parent=95 // pred_check
          %p2638 = pneg %p342
        $region98: #{tpu_custom_call.1} parent=95 // pred_check_branch
          %2640 = sbr.rel (%p2638) target = $region100
        $region99: #{tpu_custom_call.1} parent=95 // pred_region
          %s2641 = sand.u32 %s327, 1
          %s2642 = scalar_lea.sflag [#allocation4], %s2641
          %s2643 = sand.u32 %s327, 1
          %s2644 = smul.addr %s2643, 8
          %s2645 = scalar_lea.vmem [#allocation10], %s2644
          %2647 = dma.done %s2642, 128
        $region100: #{tpu_custom_call.1} parent=95 // pred_fallthru
          _
      $region96: #{tpu_custom_call.1} parent=5 // pred_fallthru
        _
    $region6: #{tpu_custom_call.1} parent=1 // loop_footer
      %s29 = sadd.s32 1, %s25
    $region7: #{tpu_custom_call.1} parent=1 // loop_footer_branch
      %24 = sbr.rel target = $region3
    $region8: #{tpu_custom_call.1} parent=1 // loop_exit
      _
    %2648 = vsyncpa [#allocation3], 1
    %s2649 = scalar_lea.sflag [#allocation3], 1
    %2650 = vsyncpa %s2649, 1
    %2651 = vsyncpa [#allocation6], 1
    %2652 = vsyncpa [#allocation9], 1
    %2653 = vsyncpa [#allocation4], 1
    %s2654 = scalar_lea.sflag [#allocation4], 1
    %2655 = vsyncpa %s2654, 1

</llo_original>
